<compile_context>
chip_gen: v7x
topology: tpu7x:2x2x1
jax: 0.10.0
libtpu: 0.0.40
codegen_flags: <defaults>
</compile_context>

<pallas_src>
import jax
import jax.numpy as jnp
from jax.experimental import pallas as pl
from jax.experimental.pallas import tpu as pltpu  # noqa: F401  (kept for TPU-specific tuning hooks)


HIDDEN_SIZE = 128    # lane-aligned stand-in for the module's hidden_size=256
OUTPUT_SIZE = 256    # vocab / output_size (multiple of 128 -> lane-dense output)
SEQ_LEN = 8          # number of fused decode steps in the demo


# --------------------------------------------------------------------------- #
# Kernel: full T-step decode in a single invocation (no grid, no pipelining).
# --------------------------------------------------------------------------- #
def _decoder_seq_kernel(emb_ref,       # (T, H)  bf16   pre-gathered embedding rows
                        h0_ref,        # (1, H)  f32    initial hidden state
                        w_ih_ref,      # (H, 3H) bf16   GRU input weights  (gate order r, z, n)
                        w_hh_ref,      # (H, 3H) bf16   GRU hidden weights
                        b_ih_ref,      # (1, 3H) f32
                        b_hh_ref,      # (1, 3H) f32
                        w_out_ref,     # (H, V)  bf16   output projection
                        b_out_ref,     # (1, V)  f32
                        logp_ref,      # (T, V)  f32    per-step log-softmax (output)
                        h_final_ref):  # (1, H)  f32    final hidden state   (output)
    T, H = emb_ref.shape
    f32 = jnp.float32

    # Hoist resident weight/bias loads out of the unrolled time loop.
    w_ih = w_ih_ref[...]
    w_hh = w_hh_ref[...]
    b_ih = b_ih_ref[...]
    b_hh = b_hh_ref[...]
    w_out = w_out_ref[...]
    b_out = b_out_ref[...]

    h = h0_ref[...]                                   # (1, H) f32, carried as a value

    for t in range(T):                                # static trip count -> unrolled at trace time
        # relu(embedding(token_t)); relu commutes with the bf16 rounding of the row.
        x = jnp.maximum(emb_ref[pl.ds(t, 1), :], 0)   # (1, H) bf16

        # Two H-deep MXU dots (bf16 operands, f32 accumulation), PyTorch gate order r, z, n.
        gi = jnp.dot(x, w_ih, preferred_element_type=f32) + b_ih                       # (1, 3H)
        gh = jnp.dot(h.astype(jnp.bfloat16), w_hh, preferred_element_type=f32) + b_hh  # (1, 3H)

        r = jax.nn.sigmoid(gi[:, 0:H] + gh[:, 0:H])
        z = jax.nn.sigmoid(gi[:, H:2 * H] + gh[:, H:2 * H])
        n = jnp.tanh(gi[:, 2 * H:3 * H] + r * gh[:, 2 * H:3 * H])   # r scales hidden-side n term
        h = (1.0 - z) * n + z * h                                    # (1, H) f32

        # Output projection + LogSoftmax(dim=1); V is a multiple of 128 (lane-dense).
        logits = jnp.dot(h.astype(jnp.bfloat16), w_out,
                         preferred_element_type=f32) + b_out         # (1, V)
        m = jnp.max(logits, axis=-1, keepdims=True)
        lse = jnp.log(jnp.sum(jnp.exp(logits - m), axis=-1, keepdims=True)) + m
        logp_ref[pl.ds(t, 1), :] = logits - lse       # write into resident (T, V) output

    h_final_ref[...] = h


# --------------------------------------------------------------------------- #
# Parameters (PyTorch-equivalent layout, stored transposed for x @ W)
# --------------------------------------------------------------------------- #
def init_params(key, hidden_size=HIDDEN_SIZE, output_size=OUTPUT_SIZE):
    keys = jax.random.split(key, 7)
    scale = 0.1
    return {
        # nn.Embedding(output_size, hidden_size)
        "embedding": scale * jax.random.normal(keys[0], (output_size, hidden_size), jnp.float32),
        # nn.GRU(hidden_size, hidden_size) — transposed: (in, 3H), gate order r, z, n
        "w_ih": scale * jax.random.normal(keys[1], (hidden_size, 3 * hidden_size), jnp.float32),
        "w_hh": scale * jax.random.normal(keys[2], (hidden_size, 3 * hidden_size), jnp.float32),
        "b_ih": scale * jax.random.normal(keys[3], (1, 3 * hidden_size), jnp.float32),
        "b_hh": scale * jax.random.normal(keys[4], (1, 3 * hidden_size), jnp.float32),
        # nn.Linear(hidden_size, output_size) — transposed: (H, V)
        "w_out": scale * jax.random.normal(keys[5], (hidden_size, output_size), jnp.float32),
        "b_out": scale * jax.random.normal(keys[6], (1, output_size), jnp.float32),
    }


# --------------------------------------------------------------------------- #
# Wrappers
# --------------------------------------------------------------------------- #
def decode_sequence(params, token_ids, hidden0):
    """Run T decoder steps fused in a single (grid-less) pallas_call.

    token_ids: (T,) int32     hidden0: (1, 1, H)
    returns:   (log_probs (T, V) f32, final_hidden (1, 1, H) f32)
    """
    H, V = params["w_out"].shape
    token_ids = jnp.asarray(token_ids, jnp.int32).reshape(-1)
    T = int(token_ids.shape[0])

    # Tiny XLA gather outside the kernel; resident weights cast to bf16 (MXU native).
    emb_rows = jnp.take(params["embedding"], token_ids, axis=0).astype(jnp.bfloat16)  # (T, H)
    w_ih = params["w_ih"].astype(jnp.bfloat16)
    w_hh = params["w_hh"].astype(jnp.bfloat16)
    w_out = params["w_out"].astype(jnp.bfloat16)

    logp, h_final = pl.pallas_call(
        _decoder_seq_kernel,
        out_shape=(jax.ShapeDtypeStruct((T, V), jnp.float32),
                   jax.ShapeDtypeStruct((1, H), jnp.float32)),
    )(emb_rows,
      hidden0.reshape(1, H).astype(jnp.float32),
      w_ih, w_hh,
      params["b_ih"], params["b_hh"],
      w_out, params["b_out"])

    return logp, h_final.reshape(1, 1, H)


def decoder_forward(params, token_id, hidden):
    """Exact equivalent of DecoderRNN.forward(input, hidden) — single step (T=1)."""
    tok = jnp.reshape(jnp.asarray(token_id, jnp.int32), (1,))
    logp, h_new = decode_sequence(params, tok, hidden)
    return logp, h_new     # (1, V), (1, 1, H)


# --------------------------------------------------------------------------- #
# Pure-JAX f32 reference (mirrors PyTorch semantics)
# --------------------------------------------------------------------------- #
def _reference_decode(params, token_ids, hidden0):
    H = params["w_out"].shape[0]
    h = hidden0.reshape(1, H)
    logps = []
    for t in range(token_ids.shape[0]):
        x = jnp.maximum(params["embedding"][token_ids[t]].reshape(1, H), 0.0)
        gi = x @ params["w_ih"] + params["b_ih"]
        gh = h @ params["w_hh"] + params["b_hh"]
        i_r, i_z, i_n = gi[:, :H], gi[:, H:2 * H], gi[:, 2 * H:]
        h_r, h_z, h_n = gh[:, :H], gh[:, H:2 * H], gh[:, 2 * H:]
        r = jax.nn.sigmoid(i_r + h_r)
        z = jax.nn.sigmoid(i_z + h_z)
        n = jnp.tanh(i_n + r * h_n)
        h = (1.0 - z) * n + z * h
        logits = h @ params["w_out"] + params["b_out"]
        logps.append(jax.nn.log_softmax(logits, axis=1))
    return jnp.concatenate(logps, axis=0), h.reshape(1, 1, H)


# --------------------------------------------------------------------------- #
# Demo / correctness check
# --------------------------------------------------------------------------- #
if __name__ == "__main__":
    key = jax.random.PRNGKey(0)
    pkey, tkey, hkey = jax.random.split(key, 3)

    params = init_params(pkey)

    token_ids = jax.random.randint(tkey, (SEQ_LEN,), 0, OUTPUT_SIZE, dtype=jnp.int32)
    hidden0 = 0.1 * jax.random.normal(hkey, (1, 1, HIDDEN_SIZE), jnp.float32)

    # Fused multi-step decode: one pallas_call for all SEQ_LEN steps.
    log_probs, final_hidden = decode_sequence(params, token_ids, hidden0)
    jax.block_until_ready((log_probs, final_hidden))

    ref_logp, ref_h = _reference_decode(params, token_ids, hidden0)
    assert log_probs.shape == (SEQ_LEN, OUTPUT_SIZE)
    assert final_hidden.shape == (1, 1, HIDDEN_SIZE)
    # bf16 resident weights -> compare against the f32 reference with relaxed tolerance.
    assert jnp.allclose(log_probs, ref_logp, atol=2e-2, rtol=2e-2)
    assert jnp.allclose(final_hidden, ref_h, atol=1e-2, rtol=1e-2)

    # Single-step path (exactly DecoderRNN.forward) goes through the same kernel.
    step_logp, step_h = decoder_forward(params, token_ids[0:1], hidden0)
    jax.block_until_ready((step_logp, step_h))
    assert step_logp.shape == (1, OUTPUT_SIZE)
    assert jnp.allclose(step_logp, ref_logp[0:1], atol=2e-2, rtol=2e-2)

    print("KERNEL_OK")
</pallas_src>

<mosaic_0001>
module attributes {stable_mosaic.version = 11 : i64} {
  func.func @_decoder_seq_kernel(%arg0: memref<8x128xbf16, #tpu.memory_space<vmem>>, %arg1: memref<1x128xf32, #tpu.memory_space<vmem>>, %arg2: memref<128x384xbf16, #tpu.memory_space<vmem>>, %arg3: memref<128x384xbf16, #tpu.memory_space<vmem>>, %arg4: memref<1x384xf32, #tpu.memory_space<vmem>>, %arg5: memref<1x384xf32, #tpu.memory_space<vmem>>, %arg6: memref<128x256xbf16, #tpu.memory_space<vmem>>, %arg7: memref<1x256xf32, #tpu.memory_space<vmem>>, %arg8: memref<8x256xf32, #tpu.memory_space<vmem>>, %arg9: memref<1x128xf32, #tpu.memory_space<vmem>>) attributes {dimension_semantics = [], scalar_prefetch = 0 : i64, scratch_operands = 0 : i64, tpu.core_type = #tpu.core_type<tc>} {
    %c0 = arith.constant 0 : index
    %c0_0 = arith.constant 0 : index
    %0 = vector.load %arg2[%c0, %c0_0] : memref<128x384xbf16, #tpu.memory_space<vmem>>, vector<128x384xbf16>
    %c0_1 = arith.constant 0 : index
    %c0_2 = arith.constant 0 : index
    %1 = vector.load %arg3[%c0_1, %c0_2] : memref<128x384xbf16, #tpu.memory_space<vmem>>, vector<128x384xbf16>
    %c0_3 = arith.constant 0 : index
    %c0_4 = arith.constant 0 : index
    %2 = vector.load %arg4[%c0_3, %c0_4] : memref<1x384xf32, #tpu.memory_space<vmem>>, vector<1x384xf32>
    %c0_5 = arith.constant 0 : index
    %c0_6 = arith.constant 0 : index
    %3 = vector.load %arg5[%c0_5, %c0_6] : memref<1x384xf32, #tpu.memory_space<vmem>>, vector<1x384xf32>
    %c0_7 = arith.constant 0 : index
    %c0_8 = arith.constant 0 : index
    %4 = vector.load %arg6[%c0_7, %c0_8] : memref<128x256xbf16, #tpu.memory_space<vmem>>, vector<128x256xbf16>
    %c0_9 = arith.constant 0 : index
    %c0_10 = arith.constant 0 : index
    %5 = vector.load %arg7[%c0_9, %c0_10] : memref<1x256xf32, #tpu.memory_space<vmem>>, vector<1x256xf32>
    %c0_11 = arith.constant 0 : index
    %c0_12 = arith.constant 0 : index
    %6 = vector.load %arg1[%c0_11, %c0_12] : memref<1x128xf32, #tpu.memory_space<vmem>>, vector<1x128xf32>
    %c0_13 = arith.constant 0 : index
    %c0_14 = arith.constant 0 : index
    %7 = vector.load %arg0[%c0_13, %c0_14] : memref<8x128xbf16, #tpu.memory_space<vmem>>, vector<1x128xbf16>
    %cst = arith.constant 0.000000e+00 : bf16
    %8 = vector.broadcast %cst : bf16 to vector<1x128xbf16>
    %9 = arith.maximumf %7, %8 : vector<1x128xbf16>
    %cst_15 = arith.constant dense<0.000000e+00> : vector<1x384xf32>
    %10 = tpu.matmul %9, %0, %cst_15 {dimension_numbers = #tpu.dot_dimension_numbers<[1], [0], [0], [1], [0, 0, 1, 1], [], []>} : vector<1x128xbf16>, vector<128x384xbf16>, vector<1x384xf32> -> vector<1x384xf32>
    %11 = arith.addf %10, %2 : vector<1x384xf32>
    %12 = arith.truncf %6 : vector<1x128xf32> to vector<1x128xbf16>
    %cst_16 = arith.constant dense<0.000000e+00> : vector<1x384xf32>
    %13 = tpu.matmul %12, %1, %cst_16 {dimension_numbers = #tpu.dot_dimension_numbers<[1], [0], [0], [1], [0, 0, 1, 1], [], []>} : vector<1x128xbf16>, vector<128x384xbf16>, vector<1x384xf32> -> vector<1x384xf32>
    %14 = arith.addf %13, %3 : vector<1x384xf32>
    %15 = vector.extract_strided_slice %11 {offsets = [0, 0], sizes = [1, 128], strides = [1, 1]} : vector<1x384xf32> to vector<1x128xf32>
    %16 = vector.extract_strided_slice %14 {offsets = [0, 0], sizes = [1, 128], strides = [1, 1]} : vector<1x384xf32> to vector<1x128xf32>
    %17 = arith.addf %15, %16 : vector<1x128xf32>
    %18 = arith.negf %17 : vector<1x128xf32>
    %19 = math.exp %18 : vector<1x128xf32>
    %cst_17 = arith.constant 1.000000e+00 : f32
    %20 = vector.broadcast %cst_17 : f32 to vector<1x128xf32>
    %21 = arith.addf %20, %19 : vector<1x128xf32>
    %22 = arith.divf %20, %21 : vector<1x128xf32>
    %23 = vector.extract_strided_slice %11 {offsets = [0, 128], sizes = [1, 128], strides = [1, 1]} : vector<1x384xf32> to vector<1x128xf32>
    %24 = vector.extract_strided_slice %14 {offsets = [0, 128], sizes = [1, 128], strides = [1, 1]} : vector<1x384xf32> to vector<1x128xf32>
    %25 = arith.addf %23, %24 : vector<1x128xf32>
    %26 = arith.negf %25 : vector<1x128xf32>
    %27 = math.exp %26 : vector<1x128xf32>
    %cst_18 = arith.constant 1.000000e+00 : f32
    %28 = vector.broadcast %cst_18 : f32 to vector<1x128xf32>
    %29 = arith.addf %28, %27 : vector<1x128xf32>
    %30 = arith.divf %28, %29 : vector<1x128xf32>
    %31 = vector.extract_strided_slice %11 {offsets = [0, 256], sizes = [1, 128], strides = [1, 1]} : vector<1x384xf32> to vector<1x128xf32>
    %32 = vector.extract_strided_slice %14 {offsets = [0, 256], sizes = [1, 128], strides = [1, 1]} : vector<1x384xf32> to vector<1x128xf32>
    %33 = arith.mulf %22, %32 : vector<1x128xf32>
    %34 = arith.addf %31, %33 : vector<1x128xf32>
    %35 = math.tanh %34 : vector<1x128xf32>
    %cst_19 = arith.constant 1.000000e+00 : f32
    %36 = vector.broadcast %cst_19 : f32 to vector<1x128xf32>
    %37 = arith.subf %36, %30 : vector<1x128xf32>
    %38 = arith.mulf %37, %35 : vector<1x128xf32>
    %39 = arith.mulf %30, %6 : vector<1x128xf32>
    %40 = arith.addf %38, %39 : vector<1x128xf32>
    %41 = arith.truncf %40 : vector<1x128xf32> to vector<1x128xbf16>
    %cst_20 = arith.constant dense<0.000000e+00> : vector<1x256xf32>
    %42 = tpu.matmul %41, %4, %cst_20 {dimension_numbers = #tpu.dot_dimension_numbers<[1], [0], [0], [1], [0, 0, 1, 1], [], []>} : vector<1x128xbf16>, vector<128x256xbf16>, vector<1x256xf32> -> vector<1x256xf32>
    %43 = arith.addf %42, %5 : vector<1x256xf32>
    %cst_21 = arith.constant dense<0xFF800000> : vector<1xf32>
    %44 = vector.multi_reduction <maximumf>, %43, %cst_21 [1] : vector<1x256xf32> to vector<1xf32>
    %45 = vector.shape_cast %44 : vector<1xf32> to vector<1x1xf32>
    %46 = vector.broadcast %45 : vector<1x1xf32> to vector<1x256xf32>
    %47 = arith.subf %43, %46 : vector<1x256xf32>
    %48 = math.exp %47 : vector<1x256xf32>
    %cst_22 = arith.constant dense<0.000000e+00> : vector<1xf32>
    %49 = vector.multi_reduction <add>, %48, %cst_22 [1] : vector<1x256xf32> to vector<1xf32>
    %50 = vector.shape_cast %49 : vector<1xf32> to vector<1x1xf32>
    %51 = math.log %50 : vector<1x1xf32>
    %52 = arith.addf %51, %45 : vector<1x1xf32>
    %53 = vector.broadcast %52 : vector<1x1xf32> to vector<1x256xf32>
    %54 = arith.subf %43, %53 : vector<1x256xf32>
    %c0_23 = arith.constant 0 : index
    %c0_24 = arith.constant 0 : index
    %55 = vector.load %arg8[%c0_23, %c0_24] : memref<8x256xf32, #tpu.memory_space<vmem>>, vector<1x256xf32>
    tpu.vector_store %arg8[%c0_23, %c0_24], %54 {strides = array<i32>} : memref<8x256xf32, #tpu.memory_space<vmem>>, vector<1x256xf32>,
    %c1 = arith.constant 1 : index
    %c0_25 = arith.constant 0 : index
    %56 = vector.load %arg0[%c1, %c0_25] : memref<8x128xbf16, #tpu.memory_space<vmem>>, vector<1x128xbf16>
    %cst_26 = arith.constant 0.000000e+00 : bf16
    %57 = vector.broadcast %cst_26 : bf16 to vector<1x128xbf16>
    %58 = arith.maximumf %56, %57 : vector<1x128xbf16>
    %cst_27 = arith.constant dense<0.000000e+00> : vector<1x384xf32>
    %59 = tpu.matmul %58, %0, %cst_27 {dimension_numbers = #tpu.dot_dimension_numbers<[1], [0], [0], [1], [0, 0, 1, 1], [], []>} : vector<1x128xbf16>, vector<128x384xbf16>, vector<1x384xf32> -> vector<1x384xf32>
    %60 = arith.addf %59, %2 : vector<1x384xf32>
    %61 = arith.truncf %40 : vector<1x128xf32> to vector<1x128xbf16>
    %cst_28 = arith.constant dense<0.000000e+00> : vector<1x384xf32>
    %62 = tpu.matmul %61, %1, %cst_28 {dimension_numbers = #tpu.dot_dimension_numbers<[1], [0], [0], [1], [0, 0, 1, 1], [], []>} : vector<1x128xbf16>, vector<128x384xbf16>, vector<1x384xf32> -> vector<1x384xf32>
    %63 = arith.addf %62, %3 : vector<1x384xf32>
    %64 = vector.extract_strided_slice %60 {offsets = [0, 0], sizes = [1, 128], strides = [1, 1]} : vector<1x384xf32> to vector<1x128xf32>
    %65 = vector.extract_strided_slice %63 {offsets = [0, 0], sizes = [1, 128], strides = [1, 1]} : vector<1x384xf32> to vector<1x128xf32>
    %66 = arith.addf %64, %65 : vector<1x128xf32>
    %67 = arith.negf %66 : vector<1x128xf32>
    %68 = math.exp %67 : vector<1x128xf32>
    %cst_29 = arith.constant 1.000000e+00 : f32
    %69 = vector.broadcast %cst_29 : f32 to vector<1x128xf32>
    %70 = arith.addf %69, %68 : vector<1x128xf32>
    %71 = arith.divf %69, %70 : vector<1x128xf32>
    %72 = vector.extract_strided_slice %60 {offsets = [0, 128], sizes = [1, 128], strides = [1, 1]} : vector<1x384xf32> to vector<1x128xf32>
    %73 = vector.extract_strided_slice %63 {offsets = [0, 128], sizes = [1, 128], strides = [1, 1]} : vector<1x384xf32> to vector<1x128xf32>
    %74 = arith.addf %72, %73 : vector<1x128xf32>
    %75 = arith.negf %74 : vector<1x128xf32>
    %76 = math.exp %75 : vector<1x128xf32>
    %cst_30 = arith.constant 1.000000e+00 : f32
    %77 = vector.broadcast %cst_30 : f32 to vector<1x128xf32>
    %78 = arith.addf %77, %76 : vector<1x128xf32>
    %79 = arith.divf %77, %78 : vector<1x128xf32>
    %80 = vector.extract_strided_slice %60 {offsets = [0, 256], sizes = [1, 128], strides = [1, 1]} : vector<1x384xf32> to vector<1x128xf32>
    %81 = vector.extract_strided_slice %63 {offsets = [0, 256], sizes = [1, 128], strides = [1, 1]} : vector<1x384xf32> to vector<1x128xf32>
    %82 = arith.mulf %71, %81 : vector<1x128xf32>
    %83 = arith.addf %80, %82 : vector<1x128xf32>
    %84 = math.tanh %83 : vector<1x128xf32>
    %cst_31 = arith.constant 1.000000e+00 : f32
    %85 = vector.broadcast %cst_31 : f32 to vector<1x128xf32>
    %86 = arith.subf %85, %79 : vector<1x128xf32>
    %87 = arith.mulf %86, %84 : vector<1x128xf32>
    %88 = arith.mulf %79, %40 : vector<1x128xf32>
    %89 = arith.addf %87, %88 : vector<1x128xf32>
    %90 = arith.truncf %89 : vector<1x128xf32> to vector<1x128xbf16>
    %cst_32 = arith.constant dense<0.000000e+00> : vector<1x256xf32>
    %91 = tpu.matmul %90, %4, %cst_32 {dimension_numbers = #tpu.dot_dimension_numbers<[1], [0], [0], [1], [0, 0, 1, 1], [], []>} : vector<1x128xbf16>, vector<128x256xbf16>, vector<1x256xf32> -> vector<1x256xf32>
    %92 = arith.addf %91, %5 : vector<1x256xf32>
    %cst_33 = arith.constant dense<0xFF800000> : vector<1xf32>
    %93 = vector.multi_reduction <maximumf>, %92, %cst_33 [1] : vector<1x256xf32> to vector<1xf32>
    %94 = vector.shape_cast %93 : vector<1xf32> to vector<1x1xf32>
    %95 = vector.broadcast %94 : vector<1x1xf32> to vector<1x256xf32>
    %96 = arith.subf %92, %95 : vector<1x256xf32>
    %97 = math.exp %96 : vector<1x256xf32>
    %cst_34 = arith.constant dense<0.000000e+00> : vector<1xf32>
    %98 = vector.multi_reduction <add>, %97, %cst_34 [1] : vector<1x256xf32> to vector<1xf32>
    %99 = vector.shape_cast %98 : vector<1xf32> to vector<1x1xf32>
    %100 = math.log %99 : vector<1x1xf32>
    %101 = arith.addf %100, %94 : vector<1x1xf32>
    %102 = vector.broadcast %101 : vector<1x1xf32> to vector<1x256xf32>
    %103 = arith.subf %92, %102 : vector<1x256xf32>
    %c1_35 = arith.constant 1 : index
    %c0_36 = arith.constant 0 : index
    %104 = vector.load %arg8[%c1_35, %c0_36] : memref<8x256xf32, #tpu.memory_space<vmem>>, vector<1x256xf32>
    tpu.vector_store %arg8[%c1_35, %c0_36], %103 {strides = array<i32>} : memref<8x256xf32, #tpu.memory_space<vmem>>, vector<1x256xf32>,
    %c2 = arith.constant 2 : index
    %c0_37 = arith.constant 0 : index
    %105 = vector.load %arg0[%c2, %c0_37] : memref<8x128xbf16, #tpu.memory_space<vmem>>, vector<1x128xbf16>
    %cst_38 = arith.constant 0.000000e+00 : bf16
    %106 = vector.broadcast %cst_38 : bf16 to vector<1x128xbf16>
    %107 = arith.maximumf %105, %106 : vector<1x128xbf16>
    %cst_39 = arith.constant dense<0.000000e+00> : vector<1x384xf32>
    %108 = tpu.matmul %107, %0, %cst_39 {dimension_numbers = #tpu.dot_dimension_numbers<[1], [0], [0], [1], [0, 0, 1, 1], [], []>} : vector<1x128xbf16>, vector<128x384xbf16>, vector<1x384xf32> -> vector<1x384xf32>
    %109 = arith.addf %108, %2 : vector<1x384xf32>
    %110 = arith.truncf %89 : vector<1x128xf32> to vector<1x128xbf16>
    %cst_40 = arith.constant dense<0.000000e+00> : vector<1x384xf32>
    %111 = tpu.matmul %110, %1, %cst_40 {dimension_numbers = #tpu.dot_dimension_numbers<[1], [0], [0], [1], [0, 0, 1, 1], [], []>} : vector<1x128xbf16>, vector<128x384xbf16>, vector<1x384xf32> -> vector<1x384xf32>
    %112 = arith.addf %111, %3 : vector<1x384xf32>
    %113 = vector.extract_strided_slice %109 {offsets = [0, 0], sizes = [1, 128], strides = [1, 1]} : vector<1x384xf32> to vector<1x128xf32>
    %114 = vector.extract_strided_slice %112 {offsets = [0, 0], sizes = [1, 128], strides = [1, 1]} : vector<1x384xf32> to vector<1x128xf32>
    %115 = arith.addf %113, %114 : vector<1x128xf32>
    %116 = arith.negf %115 : vector<1x128xf32>
    %117 = math.exp %116 : vector<1x128xf32>
    %cst_41 = arith.constant 1.000000e+00 : f32
    %118 = vector.broadcast %cst_41 : f32 to vector<1x128xf32>
    %119 = arith.addf %118, %117 : vector<1x128xf32>
    %120 = arith.divf %118, %119 : vector<1x128xf32>
    %121 = vector.extract_strided_slice %109 {offsets = [0, 128], sizes = [1, 128], strides = [1, 1]} : vector<1x384xf32> to vector<1x128xf32>
    %122 = vector.extract_strided_slice %112 {offsets = [0, 128], sizes = [1, 128], strides = [1, 1]} : vector<1x384xf32> to vector<1x128xf32>
    %123 = arith.addf %121, %122 : vector<1x128xf32>
    %124 = arith.negf %123 : vector<1x128xf32>
    %125 = math.exp %124 : vector<1x128xf32>
    %cst_42 = arith.constant 1.000000e+00 : f32
    %126 = vector.broadcast %cst_42 : f32 to vector<1x128xf32>
    %127 = arith.addf %126, %125 : vector<1x128xf32>
    %128 = arith.divf %126, %127 : vector<1x128xf32>
    %129 = vector.extract_strided_slice %109 {offsets = [0, 256], sizes = [1, 128], strides = [1, 1]} : vector<1x384xf32> to vector<1x128xf32>
    %130 = vector.extract_strided_slice %112 {offsets = [0, 256], sizes = [1, 128], strides = [1, 1]} : vector<1x384xf32> to vector<1x128xf32>
    %131 = arith.mulf %120, %130 : vector<1x128xf32>
    %132 = arith.addf %129, %131 : vector<1x128xf32>
    %133 = math.tanh %132 : vector<1x128xf32>
    %cst_43 = arith.constant 1.000000e+00 : f32
    %134 = vector.broadcast %cst_43 : f32 to vector<1x128xf32>
    %135 = arith.subf %134, %128 : vector<1x128xf32>
    %136 = arith.mulf %135, %133 : vector<1x128xf32>
    %137 = arith.mulf %128, %89 : vector<1x128xf32>
    %138 = arith.addf %136, %137 : vector<1x128xf32>
    %139 = arith.truncf %138 : vector<1x128xf32> to vector<1x128xbf16>
    %cst_44 = arith.constant dense<0.000000e+00> : vector<1x256xf32>
    %140 = tpu.matmul %139, %4, %cst_44 {dimension_numbers = #tpu.dot_dimension_numbers<[1], [0], [0], [1], [0, 0, 1, 1], [], []>} : vector<1x128xbf16>, vector<128x256xbf16>, vector<1x256xf32> -> vector<1x256xf32>
    %141 = arith.addf %140, %5 : vector<1x256xf32>
    %cst_45 = arith.constant dense<0xFF800000> : vector<1xf32>
    %142 = vector.multi_reduction <maximumf>, %141, %cst_45 [1] : vector<1x256xf32> to vector<1xf32>
    %143 = vector.shape_cast %142 : vector<1xf32> to vector<1x1xf32>
    %144 = vector.broadcast %143 : vector<1x1xf32> to vector<1x256xf32>
    %145 = arith.subf %141, %144 : vector<1x256xf32>
    %146 = math.exp %145 : vector<1x256xf32>
    %cst_46 = arith.constant dense<0.000000e+00> : vector<1xf32>
    %147 = vector.multi_reduction <add>, %146, %cst_46 [1] : vector<1x256xf32> to vector<1xf32>
    %148 = vector.shape_cast %147 : vector<1xf32> to vector<1x1xf32>
    %149 = math.log %148 : vector<1x1xf32>
    %150 = arith.addf %149, %143 : vector<1x1xf32>
    %151 = vector.broadcast %150 : vector<1x1xf32> to vector<1x256xf32>
    %152 = arith.subf %141, %151 : vector<1x256xf32>
    %c2_47 = arith.constant 2 : index
    %c0_48 = arith.constant 0 : index
    %153 = vector.load %arg8[%c2_47, %c0_48] : memref<8x256xf32, #tpu.memory_space<vmem>>, vector<1x256xf32>
    tpu.vector_store %arg8[%c2_47, %c0_48], %152 {strides = array<i32>} : memref<8x256xf32, #tpu.memory_space<vmem>>, vector<1x256xf32>,
    %c3 = arith.constant 3 : index
    %c0_49 = arith.constant 0 : index
    %154 = vector.load %arg0[%c3, %c0_49] : memref<8x128xbf16, #tpu.memory_space<vmem>>, vector<1x128xbf16>
    %cst_50 = arith.constant 0.000000e+00 : bf16
    %155 = vector.broadcast %cst_50 : bf16 to vector<1x128xbf16>
    %156 = arith.maximumf %154, %155 : vector<1x128xbf16>
    %cst_51 = arith.constant dense<0.000000e+00> : vector<1x384xf32>
    %157 = tpu.matmul %156, %0, %cst_51 {dimension_numbers = #tpu.dot_dimension_numbers<[1], [0], [0], [1], [0, 0, 1, 1], [], []>} : vector<1x128xbf16>, vector<128x384xbf16>, vector<1x384xf32> -> vector<1x384xf32>
    %158 = arith.addf %157, %2 : vector<1x384xf32>
    %159 = arith.truncf %138 : vector<1x128xf32> to vector<1x128xbf16>
    %cst_52 = arith.constant dense<0.000000e+00> : vector<1x384xf32>
    %160 = tpu.matmul %159, %1, %cst_52 {dimension_numbers = #tpu.dot_dimension_numbers<[1], [0], [0], [1], [0, 0, 1, 1], [], []>} : vector<1x128xbf16>, vector<128x384xbf16>, vector<1x384xf32> -> vector<1x384xf32>
    %161 = arith.addf %160, %3 : vector<1x384xf32>
    %162 = vector.extract_strided_slice %158 {offsets = [0, 0], sizes = [1, 128], strides = [1, 1]} : vector<1x384xf32> to vector<1x128xf32>
    %163 = vector.extract_strided_slice %161 {offsets = [0, 0], sizes = [1, 128], strides = [1, 1]} : vector<1x384xf32> to vector<1x128xf32>
    %164 = arith.addf %162, %163 : vector<1x128xf32>
    %165 = arith.negf %164 : vector<1x128xf32>
    %166 = math.exp %165 : vector<1x128xf32>
    %cst_53 = arith.constant 1.000000e+00 : f32
    %167 = vector.broadcast %cst_53 : f32 to vector<1x128xf32>
    %168 = arith.addf %167, %166 : vector<1x128xf32>
    %169 = arith.divf %167, %168 : vector<1x128xf32>
    %170 = vector.extract_strided_slice %158 {offsets = [0, 128], sizes = [1, 128], strides = [1, 1]} : vector<1x384xf32> to vector<1x128xf32>
    %171 = vector.extract_strided_slice %161 {offsets = [0, 128], sizes = [1, 128], strides = [1, 1]} : vector<1x384xf32> to vector<1x128xf32>
    %172 = arith.addf %170, %171 : vector<1x128xf32>
    %173 = arith.negf %172 : vector<1x128xf32>
    %174 = math.exp %173 : vector<1x128xf32>
    %cst_54 = arith.constant 1.000000e+00 : f32
    %175 = vector.broadcast %cst_54 : f32 to vector<1x128xf32>
    %176 = arith.addf %175, %174 : vector<1x128xf32>
    %177 = arith.divf %175, %176 : vector<1x128xf32>
    %178 = vector.extract_strided_slice %158 {offsets = [0, 256], sizes = [1, 128], strides = [1, 1]} : vector<1x384xf32> to vector<1x128xf32>
    %179 = vector.extract_strided_slice %161 {offsets = [0, 256], sizes = [1, 128], strides = [1, 1]} : vector<1x384xf32> to vector<1x128xf32>
    %180 = arith.mulf %169, %179 : vector<1x128xf32>
    %181 = arith.addf %178, %180 : vector<1x128xf32>
    %182 = math.tanh %181 : vector<1x128xf32>
    %cst_55 = arith.constant 1.000000e+00 : f32
    %183 = vector.broadcast %cst_55 : f32 to vector<1x128xf32>
    %184 = arith.subf %183, %177 : vector<1x128xf32>
    %185 = arith.mulf %184, %182 : vector<1x128xf32>
    %186 = arith.mulf %177, %138 : vector<1x128xf32>
    %187 = arith.addf %185, %186 : vector<1x128xf32>
    %188 = arith.truncf %187 : vector<1x128xf32> to vector<1x128xbf16>
    %cst_56 = arith.constant dense<0.000000e+00> : vector<1x256xf32>
    %189 = tpu.matmul %188, %4, %cst_56 {dimension_numbers = #tpu.dot_dimension_numbers<[1], [0], [0], [1], [0, 0, 1, 1], [], []>} : vector<1x128xbf16>, vector<128x256xbf16>, vector<1x256xf32> -> vector<1x256xf32>
    %190 = arith.addf %189, %5 : vector<1x256xf32>
    %cst_57 = arith.constant dense<0xFF800000> : vector<1xf32>
    %191 = vector.multi_reduction <maximumf>, %190, %cst_57 [1] : vector<1x256xf32> to vector<1xf32>
    %192 = vector.shape_cast %191 : vector<1xf32> to vector<1x1xf32>
    %193 = vector.broadcast %192 : vector<1x1xf32> to vector<1x256xf32>
    %194 = arith.subf %190, %193 : vector<1x256xf32>
    %195 = math.exp %194 : vector<1x256xf32>
    %cst_58 = arith.constant dense<0.000000e+00> : vector<1xf32>
    %196 = vector.multi_reduction <add>, %195, %cst_58 [1] : vector<1x256xf32> to vector<1xf32>
    %197 = vector.shape_cast %196 : vector<1xf32> to vector<1x1xf32>
    %198 = math.log %197 : vector<1x1xf32>
    %199 = arith.addf %198, %192 : vector<1x1xf32>
    %200 = vector.broadcast %199 : vector<1x1xf32> to vector<1x256xf32>
    %201 = arith.subf %190, %200 : vector<1x256xf32>
    %c3_59 = arith.constant 3 : index
    %c0_60 = arith.constant 0 : index
    %202 = vector.load %arg8[%c3_59, %c0_60] : memref<8x256xf32, #tpu.memory_space<vmem>>, vector<1x256xf32>
    tpu.vector_store %arg8[%c3_59, %c0_60], %201 {strides = array<i32>} : memref<8x256xf32, #tpu.memory_space<vmem>>, vector<1x256xf32>,
    %c4 = arith.constant 4 : index
    %c0_61 = arith.constant 0 : index
    %203 = vector.load %arg0[%c4, %c0_61] : memref<8x128xbf16, #tpu.memory_space<vmem>>, vector<1x128xbf16>
    %cst_62 = arith.constant 0.000000e+00 : bf16
    %204 = vector.broadcast %cst_62 : bf16 to vector<1x128xbf16>
    %205 = arith.maximumf %203, %204 : vector<1x128xbf16>
    %cst_63 = arith.constant dense<0.000000e+00> : vector<1x384xf32>
    %206 = tpu.matmul %205, %0, %cst_63 {dimension_numbers = #tpu.dot_dimension_numbers<[1], [0], [0], [1], [0, 0, 1, 1], [], []>} : vector<1x128xbf16>, vector<128x384xbf16>, vector<1x384xf32> -> vector<1x384xf32>
    %207 = arith.addf %206, %2 : vector<1x384xf32>
    %208 = arith.truncf %187 : vector<1x128xf32> to vector<1x128xbf16>
    %cst_64 = arith.constant dense<0.000000e+00> : vector<1x384xf32>
    %209 = tpu.matmul %208, %1, %cst_64 {dimension_numbers = #tpu.dot_dimension_numbers<[1], [0], [0], [1], [0, 0, 1, 1], [], []>} : vector<1x128xbf16>, vector<128x384xbf16>, vector<1x384xf32> -> vector<1x384xf32>
    %210 = arith.addf %209, %3 : vector<1x384xf32>
    %211 = vector.extract_strided_slice %207 {offsets = [0, 0], sizes = [1, 128], strides = [1, 1]} : vector<1x384xf32> to vector<1x128xf32>
    %212 = vector.extract_strided_slice %210 {offsets = [0, 0], sizes = [1, 128], strides = [1, 1]} : vector<1x384xf32> to vector<1x128xf32>
    %213 = arith.addf %211, %212 : vector<1x128xf32>
    %214 = arith.negf %213 : vector<1x128xf32>
    %215 = math.exp %214 : vector<1x128xf32>
    %cst_65 = arith.constant 1.000000e+00 : f32
    %216 = vector.broadcast %cst_65 : f32 to vector<1x128xf32>
    %217 = arith.addf %216, %215 : vector<1x128xf32>
    %218 = arith.divf %216, %217 : vector<1x128xf32>
    %219 = vector.extract_strided_slice %207 {offsets = [0, 128], sizes = [1, 128], strides = [1, 1]} : vector<1x384xf32> to vector<1x128xf32>
    %220 = vector.extract_strided_slice %210 {offsets = [0, 128], sizes = [1, 128], strides = [1, 1]} : vector<1x384xf32> to vector<1x128xf32>
    %221 = arith.addf %219, %220 : vector<1x128xf32>
    %222 = arith.negf %221 : vector<1x128xf32>
    %223 = math.exp %222 : vector<1x128xf32>
    %cst_66 = arith.constant 1.000000e+00 : f32
    %224 = vector.broadcast %cst_66 : f32 to vector<1x128xf32>
    %225 = arith.addf %224, %223 : vector<1x128xf32>
    %226 = arith.divf %224, %225 : vector<1x128xf32>
    %227 = vector.extract_strided_slice %207 {offsets = [0, 256], sizes = [1, 128], strides = [1, 1]} : vector<1x384xf32> to vector<1x128xf32>
    %228 = vector.extract_strided_slice %210 {offsets = [0, 256], sizes = [1, 128], strides = [1, 1]} : vector<1x384xf32> to vector<1x128xf32>
    %229 = arith.mulf %218, %228 : vector<1x128xf32>
    %230 = arith.addf %227, %229 : vector<1x128xf32>
    %231 = math.tanh %230 : vector<1x128xf32>
    %cst_67 = arith.constant 1.000000e+00 : f32
    %232 = vector.broadcast %cst_67 : f32 to vector<1x128xf32>
    %233 = arith.subf %232, %226 : vector<1x128xf32>
    %234 = arith.mulf %233, %231 : vector<1x128xf32>
    %235 = arith.mulf %226, %187 : vector<1x128xf32>
    %236 = arith.addf %234, %235 : vector<1x128xf32>
    %237 = arith.truncf %236 : vector<1x128xf32> to vector<1x128xbf16>
    %cst_68 = arith.constant dense<0.000000e+00> : vector<1x256xf32>
    %238 = tpu.matmul %237, %4, %cst_68 {dimension_numbers = #tpu.dot_dimension_numbers<[1], [0], [0], [1], [0, 0, 1, 1], [], []>} : vector<1x128xbf16>, vector<128x256xbf16>, vector<1x256xf32> -> vector<1x256xf32>
    %239 = arith.addf %238, %5 : vector<1x256xf32>
    %cst_69 = arith.constant dense<0xFF800000> : vector<1xf32>
    %240 = vector.multi_reduction <maximumf>, %239, %cst_69 [1] : vector<1x256xf32> to vector<1xf32>
    %241 = vector.shape_cast %240 : vector<1xf32> to vector<1x1xf32>
    %242 = vector.broadcast %241 : vector<1x1xf32> to vector<1x256xf32>
    %243 = arith.subf %239, %242 : vector<1x256xf32>
    %244 = math.exp %243 : vector<1x256xf32>
    %cst_70 = arith.constant dense<0.000000e+00> : vector<1xf32>
    %245 = vector.multi_reduction <add>, %244, %cst_70 [1] : vector<1x256xf32> to vector<1xf32>
    %246 = vector.shape_cast %245 : vector<1xf32> to vector<1x1xf32>
    %247 = math.log %246 : vector<1x1xf32>
    %248 = arith.addf %247, %241 : vector<1x1xf32>
    %249 = vector.broadcast %248 : vector<1x1xf32> to vector<1x256xf32>
    %250 = arith.subf %239, %249 : vector<1x256xf32>
    %c4_71 = arith.constant 4 : index
    %c0_72 = arith.constant 0 : index
    %251 = vector.load %arg8[%c4_71, %c0_72] : memref<8x256xf32, #tpu.memory_space<vmem>>, vector<1x256xf32>
    tpu.vector_store %arg8[%c4_71, %c0_72], %250 {strides = array<i32>} : memref<8x256xf32, #tpu.memory_space<vmem>>, vector<1x256xf32>,
    %c5 = arith.constant 5 : index
    %c0_73 = arith.constant 0 : index
    %252 = vector.load %arg0[%c5, %c0_73] : memref<8x128xbf16, #tpu.memory_space<vmem>>, vector<1x128xbf16>
    %cst_74 = arith.constant 0.000000e+00 : bf16
    %253 = vector.broadcast %cst_74 : bf16 to vector<1x128xbf16>
    %254 = arith.maximumf %252, %253 : vector<1x128xbf16>
    %cst_75 = arith.constant dense<0.000000e+00> : vector<1x384xf32>
    %255 = tpu.matmul %254, %0, %cst_75 {dimension_numbers = #tpu.dot_dimension_numbers<[1], [0], [0], [1], [0, 0, 1, 1], [], []>} : vector<1x128xbf16>, vector<128x384xbf16>, vector<1x384xf32> -> vector<1x384xf32>
    %256 = arith.addf %255, %2 : vector<1x384xf32>
    %257 = arith.truncf %236 : vector<1x128xf32> to vector<1x128xbf16>
    %cst_76 = arith.constant dense<0.000000e+00> : vector<1x384xf32>
    %258 = tpu.matmul %257, %1, %cst_76 {dimension_numbers = #tpu.dot_dimension_numbers<[1], [0], [0], [1], [0, 0, 1, 1], [], []>} : vector<1x128xbf16>, vector<128x384xbf16>, vector<1x384xf32> -> vector<1x384xf32>
    %259 = arith.addf %258, %3 : vector<1x384xf32>
    %260 = vector.extract_strided_slice %256 {offsets = [0, 0], sizes = [1, 128], strides = [1, 1]} : vector<1x384xf32> to vector<1x128xf32>
    %261 = vector.extract_strided_slice %259 {offsets = [0, 0], sizes = [1, 128], strides = [1, 1]} : vector<1x384xf32> to vector<1x128xf32>
    %262 = arith.addf %260, %261 : vector<1x128xf32>
    %263 = arith.negf %262 : vector<1x128xf32>
    %264 = math.exp %263 : vector<1x128xf32>
    %cst_77 = arith.constant 1.000000e+00 : f32
    %265 = vector.broadcast %cst_77 : f32 to vector<1x128xf32>
    %266 = arith.addf %265, %264 : vector<1x128xf32>
    %267 = arith.divf %265, %266 : vector<1x128xf32>
    %268 = vector.extract_strided_slice %256 {offsets = [0, 128], sizes = [1, 128], strides = [1, 1]} : vector<1x384xf32> to vector<1x128xf32>
    %269 = vector.extract_strided_slice %259 {offsets = [0, 128], sizes = [1, 128], strides = [1, 1]} : vector<1x384xf32> to vector<1x128xf32>
    %270 = arith.addf %268, %269 : vector<1x128xf32>
    %271 = arith.negf %270 : vector<1x128xf32>
    %272 = math.exp %271 : vector<1x128xf32>
    %cst_78 = arith.constant 1.000000e+00 : f32
    %273 = vector.broadcast %cst_78 : f32 to vector<1x128xf32>
    %274 = arith.addf %273, %272 : vector<1x128xf32>
    %275 = arith.divf %273, %274 : vector<1x128xf32>
    %276 = vector.extract_strided_slice %256 {offsets = [0, 256], sizes = [1, 128], strides = [1, 1]} : vector<1x384xf32> to vector<1x128xf32>
    %277 = vector.extract_strided_slice %259 {offsets = [0, 256], sizes = [1, 128], strides = [1, 1]} : vector<1x384xf32> to vector<1x128xf32>
    %278 = arith.mulf %267, %277 : vector<1x128xf32>
    %279 = arith.addf %276, %278 : vector<1x128xf32>
    %280 = math.tanh %279 : vector<1x128xf32>
    %cst_79 = arith.constant 1.000000e+00 : f32
    %281 = vector.broadcast %cst_79 : f32 to vector<1x128xf32>
    %282 = arith.subf %281, %275 : vector<1x128xf32>
    %283 = arith.mulf %282, %280 : vector<1x128xf32>
    %284 = arith.mulf %275, %236 : vector<1x128xf32>
    %285 = arith.addf %283, %284 : vector<1x128xf32>
    %286 = arith.truncf %285 : vector<1x128xf32> to vector<1x128xbf16>
    %cst_80 = arith.constant dense<0.000000e+00> : vector<1x256xf32>
    %287 = tpu.matmul %286, %4, %cst_80 {dimension_numbers = #tpu.dot_dimension_numbers<[1], [0], [0], [1], [0, 0, 1, 1], [], []>} : vector<1x128xbf16>, vector<128x256xbf16>, vector<1x256xf32> -> vector<1x256xf32>
    %288 = arith.addf %287, %5 : vector<1x256xf32>
    %cst_81 = arith.constant dense<0xFF800000> : vector<1xf32>
    %289 = vector.multi_reduction <maximumf>, %288, %cst_81 [1] : vector<1x256xf32> to vector<1xf32>
    %290 = vector.shape_cast %289 : vector<1xf32> to vector<1x1xf32>
    %291 = vector.broadcast %290 : vector<1x1xf32> to vector<1x256xf32>
    %292 = arith.subf %288, %291 : vector<1x256xf32>
    %293 = math.exp %292 : vector<1x256xf32>
    %cst_82 = arith.constant dense<0.000000e+00> : vector<1xf32>
    %294 = vector.multi_reduction <add>, %293, %cst_82 [1] : vector<1x256xf32> to vector<1xf32>
    %295 = vector.shape_cast %294 : vector<1xf32> to vector<1x1xf32>
    %296 = math.log %295 : vector<1x1xf32>
    %297 = arith.addf %296, %290 : vector<1x1xf32>
    %298 = vector.broadcast %297 : vector<1x1xf32> to vector<1x256xf32>
    %299 = arith.subf %288, %298 : vector<1x256xf32>
    %c5_83 = arith.constant 5 : index
    %c0_84 = arith.constant 0 : index
    %300 = vector.load %arg8[%c5_83, %c0_84] : memref<8x256xf32, #tpu.memory_space<vmem>>, vector<1x256xf32>
    tpu.vector_store %arg8[%c5_83, %c0_84], %299 {strides = array<i32>} : memref<8x256xf32, #tpu.memory_space<vmem>>, vector<1x256xf32>,
    %c6 = arith.constant 6 : index
    %c0_85 = arith.constant 0 : index
    %301 = vector.load %arg0[%c6, %c0_85] : memref<8x128xbf16, #tpu.memory_space<vmem>>, vector<1x128xbf16>
    %cst_86 = arith.constant 0.000000e+00 : bf16
    %302 = vector.broadcast %cst_86 : bf16 to vector<1x128xbf16>
    %303 = arith.maximumf %301, %302 : vector<1x128xbf16>
    %cst_87 = arith.constant dense<0.000000e+00> : vector<1x384xf32>
    %304 = tpu.matmul %303, %0, %cst_87 {dimension_numbers = #tpu.dot_dimension_numbers<[1], [0], [0], [1], [0, 0, 1, 1], [], []>} : vector<1x128xbf16>, vector<128x384xbf16>, vector<1x384xf32> -> vector<1x384xf32>
    %305 = arith.addf %304, %2 : vector<1x384xf32>
    %306 = arith.truncf %285 : vector<1x128xf32> to vector<1x128xbf16>
    %cst_88 = arith.constant dense<0.000000e+00> : vector<1x384xf32>
    %307 = tpu.matmul %306, %1, %cst_88 {dimension_numbers = #tpu.dot_dimension_numbers<[1], [0], [0], [1], [0, 0, 1, 1], [], []>} : vector<1x128xbf16>, vector<128x384xbf16>, vector<1x384xf32> -> vector<1x384xf32>
    %308 = arith.addf %307, %3 : vector<1x384xf32>
    %309 = vector.extract_strided_slice %305 {offsets = [0, 0], sizes = [1, 128], strides = [1, 1]} : vector<1x384xf32> to vector<1x128xf32>
    %310 = vector.extract_strided_slice %308 {offsets = [0, 0], sizes = [1, 128], strides = [1, 1]} : vector<1x384xf32> to vector<1x128xf32>
    %311 = arith.addf %309, %310 : vector<1x128xf32>
    %312 = arith.negf %311 : vector<1x128xf32>
    %313 = math.exp %312 : vector<1x128xf32>
    %cst_89 = arith.constant 1.000000e+00 : f32
    %314 = vector.broadcast %cst_89 : f32 to vector<1x128xf32>
    %315 = arith.addf %314, %313 : vector<1x128xf32>
    %316 = arith.divf %314, %315 : vector<1x128xf32>
    %317 = vector.extract_strided_slice %305 {offsets = [0, 128], sizes = [1, 128], strides = [1, 1]} : vector<1x384xf32> to vector<1x128xf32>
    %318 = vector.extract_strided_slice %308 {offsets = [0, 128], sizes = [1, 128], strides = [1, 1]} : vector<1x384xf32> to vector<1x128xf32>
    %319 = arith.addf %317, %318 : vector<1x128xf32>
    %320 = arith.negf %319 : vector<1x128xf32>
    %321 = math.exp %320 : vector<1x128xf32>
    %cst_90 = arith.constant 1.000000e+00 : f32
    %322 = vector.broadcast %cst_90 : f32 to vector<1x128xf32>
    %323 = arith.addf %322, %321 : vector<1x128xf32>
    %324 = arith.divf %322, %323 : vector<1x128xf32>
    %325 = vector.extract_strided_slice %305 {offsets = [0, 256], sizes = [1, 128], strides = [1, 1]} : vector<1x384xf32> to vector<1x128xf32>
    %326 = vector.extract_strided_slice %308 {offsets = [0, 256], sizes = [1, 128], strides = [1, 1]} : vector<1x384xf32> to vector<1x128xf32>
    %327 = arith.mulf %316, %326 : vector<1x128xf32>
    %328 = arith.addf %325, %327 : vector<1x128xf32>
    %329 = math.tanh %328 : vector<1x128xf32>
    %cst_91 = arith.constant 1.000000e+00 : f32
    %330 = vector.broadcast %cst_91 : f32 to vector<1x128xf32>
    %331 = arith.subf %330, %324 : vector<1x128xf32>
    %332 = arith.mulf %331, %329 : vector<1x128xf32>
    %333 = arith.mulf %324, %285 : vector<1x128xf32>
    %334 = arith.addf %332, %333 : vector<1x128xf32>
    %335 = arith.truncf %334 : vector<1x128xf32> to vector<1x128xbf16>
    %cst_92 = arith.constant dense<0.000000e+00> : vector<1x256xf32>
    %336 = tpu.matmul %335, %4, %cst_92 {dimension_numbers = #tpu.dot_dimension_numbers<[1], [0], [0], [1], [0, 0, 1, 1], [], []>} : vector<1x128xbf16>, vector<128x256xbf16>, vector<1x256xf32> -> vector<1x256xf32>
    %337 = arith.addf %336, %5 : vector<1x256xf32>
    %cst_93 = arith.constant dense<0xFF800000> : vector<1xf32>
    %338 = vector.multi_reduction <maximumf>, %337, %cst_93 [1] : vector<1x256xf32> to vector<1xf32>
    %339 = vector.shape_cast %338 : vector<1xf32> to vector<1x1xf32>
    %340 = vector.broadcast %339 : vector<1x1xf32> to vector<1x256xf32>
    %341 = arith.subf %337, %340 : vector<1x256xf32>
    %342 = math.exp %341 : vector<1x256xf32>
    %cst_94 = arith.constant dense<0.000000e+00> : vector<1xf32>
    %343 = vector.multi_reduction <add>, %342, %cst_94 [1] : vector<1x256xf32> to vector<1xf32>
    %344 = vector.shape_cast %343 : vector<1xf32> to vector<1x1xf32>
    %345 = math.log %344 : vector<1x1xf32>
    %346 = arith.addf %345, %339 : vector<1x1xf32>
    %347 = vector.broadcast %346 : vector<1x1xf32> to vector<1x256xf32>
    %348 = arith.subf %337, %347 : vector<1x256xf32>
    %c6_95 = arith.constant 6 : index
    %c0_96 = arith.constant 0 : index
    %349 = vector.load %arg8[%c6_95, %c0_96] : memref<8x256xf32, #tpu.memory_space<vmem>>, vector<1x256xf32>
    tpu.vector_store %arg8[%c6_95, %c0_96], %348 {strides = array<i32>} : memref<8x256xf32, #tpu.memory_space<vmem>>, vector<1x256xf32>,
    %c7 = arith.constant 7 : index
    %c0_97 = arith.constant 0 : index
    %350 = vector.load %arg0[%c7, %c0_97] : memref<8x128xbf16, #tpu.memory_space<vmem>>, vector<1x128xbf16>
    %cst_98 = arith.constant 0.000000e+00 : bf16
    %351 = vector.broadcast %cst_98 : bf16 to vector<1x128xbf16>
    %352 = arith.maximumf %350, %351 : vector<1x128xbf16>
    %cst_99 = arith.constant dense<0.000000e+00> : vector<1x384xf32>
    %353 = tpu.matmul %352, %0, %cst_99 {dimension_numbers = #tpu.dot_dimension_numbers<[1], [0], [0], [1], [0, 0, 1, 1], [], []>} : vector<1x128xbf16>, vector<128x384xbf16>, vector<1x384xf32> -> vector<1x384xf32>
    %354 = arith.addf %353, %2 : vector<1x384xf32>
    %355 = arith.truncf %334 : vector<1x128xf32> to vector<1x128xbf16>
    %cst_100 = arith.constant dense<0.000000e+00> : vector<1x384xf32>
    %356 = tpu.matmul %355, %1, %cst_100 {dimension_numbers = #tpu.dot_dimension_numbers<[1], [0], [0], [1], [0, 0, 1, 1], [], []>} : vector<1x128xbf16>, vector<128x384xbf16>, vector<1x384xf32> -> vector<1x384xf32>
    %357 = arith.addf %356, %3 : vector<1x384xf32>
    %358 = vector.extract_strided_slice %354 {offsets = [0, 0], sizes = [1, 128], strides = [1, 1]} : vector<1x384xf32> to vector<1x128xf32>
    %359 = vector.extract_strided_slice %357 {offsets = [0, 0], sizes = [1, 128], strides = [1, 1]} : vector<1x384xf32> to vector<1x128xf32>
    %360 = arith.addf %358, %359 : vector<1x128xf32>
    %361 = arith.negf %360 : vector<1x128xf32>
    %362 = math.exp %361 : vector<1x128xf32>
    %cst_101 = arith.constant 1.000000e+00 : f32
    %363 = vector.broadcast %cst_101 : f32 to vector<1x128xf32>
    %364 = arith.addf %363, %362 : vector<1x128xf32>
    %365 = arith.divf %363, %364 : vector<1x128xf32>
    %366 = vector.extract_strided_slice %354 {offsets = [0, 128], sizes = [1, 128], strides = [1, 1]} : vector<1x384xf32> to vector<1x128xf32>
    %367 = vector.extract_strided_slice %357 {offsets = [0, 128], sizes = [1, 128], strides = [1, 1]} : vector<1x384xf32> to vector<1x128xf32>
    %368 = arith.addf %366, %367 : vector<1x128xf32>
    %369 = arith.negf %368 : vector<1x128xf32>
    %370 = math.exp %369 : vector<1x128xf32>
    %cst_102 = arith.constant 1.000000e+00 : f32
    %371 = vector.broadcast %cst_102 : f32 to vector<1x128xf32>
    %372 = arith.addf %371, %370 : vector<1x128xf32>
    %373 = arith.divf %371, %372 : vector<1x128xf32>
    %374 = vector.extract_strided_slice %354 {offsets = [0, 256], sizes = [1, 128], strides = [1, 1]} : vector<1x384xf32> to vector<1x128xf32>
    %375 = vector.extract_strided_slice %357 {offsets = [0, 256], sizes = [1, 128], strides = [1, 1]} : vector<1x384xf32> to vector<1x128xf32>
    %376 = arith.mulf %365, %375 : vector<1x128xf32>
    %377 = arith.addf %374, %376 : vector<1x128xf32>
    %378 = math.tanh %377 : vector<1x128xf32>
    %cst_103 = arith.constant 1.000000e+00 : f32
    %379 = vector.broadcast %cst_103 : f32 to vector<1x128xf32>
    %380 = arith.subf %379, %373 : vector<1x128xf32>
    %381 = arith.mulf %380, %378 : vector<1x128xf32>
    %382 = arith.mulf %373, %334 : vector<1x128xf32>
    %383 = arith.addf %381, %382 : vector<1x128xf32>
    %384 = arith.truncf %383 : vector<1x128xf32> to vector<1x128xbf16>
    %cst_104 = arith.constant dense<0.000000e+00> : vector<1x256xf32>
    %385 = tpu.matmul %384, %4, %cst_104 {dimension_numbers = #tpu.dot_dimension_numbers<[1], [0], [0], [1], [0, 0, 1, 1], [], []>} : vector<1x128xbf16>, vector<128x256xbf16>, vector<1x256xf32> -> vector<1x256xf32>
    %386 = arith.addf %385, %5 : vector<1x256xf32>
    %cst_105 = arith.constant dense<0xFF800000> : vector<1xf32>
    %387 = vector.multi_reduction <maximumf>, %386, %cst_105 [1] : vector<1x256xf32> to vector<1xf32>
    %388 = vector.shape_cast %387 : vector<1xf32> to vector<1x1xf32>
    %389 = vector.broadcast %388 : vector<1x1xf32> to vector<1x256xf32>
    %390 = arith.subf %386, %389 : vector<1x256xf32>
    %391 = math.exp %390 : vector<1x256xf32>
    %cst_106 = arith.constant dense<0.000000e+00> : vector<1xf32>
    %392 = vector.multi_reduction <add>, %391, %cst_106 [1] : vector<1x256xf32> to vector<1xf32>
    %393 = vector.shape_cast %392 : vector<1xf32> to vector<1x1xf32>
    %394 = math.log %393 : vector<1x1xf32>
    %395 = arith.addf %394, %388 : vector<1x1xf32>
    %396 = vector.broadcast %395 : vector<1x1xf32> to vector<1x256xf32>
    %397 = arith.subf %386, %396 : vector<1x256xf32>
    %c7_107 = arith.constant 7 : index
    %c0_108 = arith.constant 0 : index
    %398 = vector.load %arg8[%c7_107, %c0_108] : memref<8x256xf32, #tpu.memory_space<vmem>>, vector<1x256xf32>
    tpu.vector_store %arg8[%c7_107, %c0_108], %397 {strides = array<i32>} : memref<8x256xf32, #tpu.memory_space<vmem>>, vector<1x256xf32>,
    %c0_109 = arith.constant 0 : index
    %c0_110 = arith.constant 0 : index
    %399 = vector.load %arg9[%c0_109, %c0_110] : memref<1x128xf32, #tpu.memory_space<vmem>>, vector<1x128xf32>
    tpu.vector_store %arg9[%c0_109, %c0_110], %383 {strides = array<i32>} : memref<1x128xf32, #tpu.memory_space<vmem>>, vector<1x128xf32>,
    return
  }
}

</mosaic_0001>

<llo_original>
// kernel: tpu_custom_call.1
$region0: #{tpu_custom_call.1}
  #allocation0 [shape = 'u32[]', space=smem, size = 0x4, offset = 0x4, fixed_abs, tag = 'smem constant byte address 0x4 - core index']
  #allocation1 [shape = 'u32[144,128]{1,0:T(1,128)}', space=vmem, size = 0x12000, scoped, tag = 'internal scratch']
  %s0 = inlined_call_operand.hbm [shape: bf16[8,128], index: 0, kind: input, shape index: {}]
  %s1 = inlined_call_operand.vmem [shape: f32[1,128], index: 1, kind: input, shape index: {}]
  %s2 = inlined_call_operand.hbm [shape: bf16[128,384], index: 2, kind: input, shape index: {}]
  %s3 = inlined_call_operand.hbm [shape: bf16[128,384], index: 3, kind: input, shape index: {}]
  %s4 = inlined_call_operand.vmem [shape: f32[1,384], index: 4, kind: input, shape index: {}]
  %s5 = inlined_call_operand.vmem [shape: f32[1,384], index: 5, kind: input, shape index: {}]
  %s6 = inlined_call_operand.hbm [shape: bf16[128,256], index: 6, kind: input, shape index: {}]
  %s7 = inlined_call_operand.vmem [shape: f32[1,256], index: 7, kind: input, shape index: {}]
  %s8 = inlined_call_operand.hbm [shape: f32[8,256], index: 8, kind: output, shape index: {0}]
  %s9 = inlined_call_operand.hbm [shape: f32[1,128], index: 9, kind: output, shape index: {1}]
  %10 = xla_tuple %s8, %s9
  %s11 = sld [smem:[#allocation0]]
  $region66: #{tpu_custom_call.1} parent=0
    _
  %s13 = ssub.s32 1, %s11
  %s14 = scalar_select 0, %s13, %s11
  $region1: #{tpu_custom_call.1} parent=0
    #allocation2 [shape = 'u8[2048]{0}', space=vmem, size = 0x800, scoped, tag = 'input window, operand 0, single buffered']
    #allocation3 [shape = 's32[1]{0}', space=sflag, size = 0x4, scoped, tag = 'scoped memory for tpu_custom_call.1']
    #allocation4 [shape = 's32[1]{0}', space=sflag, size = 0x4, scoped, tag = 'scoped memory for tpu_custom_call.1']
    #allocation5 [shape = 'u8[98304]{0}', space=vmem, size = 0x18000, scoped, tag = 'input window, operand 2, single buffered']
    #allocation6 [shape = 's32[1]{0}', space=sflag, size = 0x4, scoped, tag = 'scoped memory for tpu_custom_call.1']
    #allocation7 [shape = 'u8[98304]{0}', space=vmem, size = 0x18000, scoped, tag = 'input window, operand 3, single buffered']
    #allocation8 [shape = 'u8[65536]{0}', space=vmem, size = 0x10000, scoped, tag = 'input window, operand 6, single buffered']
    #allocation9 [shape = 's32[1]{0}', space=sflag, size = 0x4, scoped, tag = 'scoped memory for tpu_custom_call.1']
    #allocation10 [shape = 'u8[8192]{0}', space=vmem, size = 0x2000, scoped, tag = 'output window, operand 0, single buffered']
    #allocation11 [shape = 'u8[512]{0}', space=vmem, size = 0x400, scoped, tag = 'output window, operand 1, single buffered']
    #allocation12 [shape = 's32[1]{0}', space=sflag, size = 0x4, scoped, tag = 'scoped memory for tpu_custom_call.1']
    %15 = vsyncpa [#allocation3], 0
    %16 = vsyncpa [#allocation6], 0
    %17 = vsyncpa [#allocation9], 0
    %18 = vsyncpa [#allocation4], 0
    %19 = vsyncpa [#allocation12], 0
    // Predicated region
    $region2: #{tpu_custom_call.1} parent=1 // pred_check
      _
    $region3: #{tpu_custom_call.1} parent=1 // pred_check_branch
      %21 = sbr.rel (0) target = $region5
    $region4: #{tpu_custom_call.1} parent=1 // pred_region
      %s23 = ssub.s32 64, 64
      %24 = vsyncadd [#allocation3], %s23
      %s26 = sshll.u32 [#allocation2], 4
      %s27 = int_to_ptr.vmem [resolvable:$true] %s26
      %29 = dma.hbm_to_vmem [thread:$0]  %s0, 64, %s27, [#allocation3]
    $region5: #{tpu_custom_call.1} parent=1 // pred_fallthru
      _
    // Predicated region
    $region6: #{tpu_custom_call.1} parent=1 // pred_check
      _
    $region7: #{tpu_custom_call.1} parent=1 // pred_check_branch
      %31 = sbr.rel (0) target = $region9
    $region8: #{tpu_custom_call.1} parent=1 // pred_region
      _
    $region9: #{tpu_custom_call.1} parent=1 // pred_fallthru
      _
    // Predicated region
    $region10: #{tpu_custom_call.1} parent=1 // pred_check
      _
    $region11: #{tpu_custom_call.1} parent=1 // pred_check_branch
      %33 = sbr.rel (0) target = $region13
    $region12: #{tpu_custom_call.1} parent=1 // pred_region
      %s35 = ssub.s32 3072, 3072
      %36 = vsyncadd [#allocation6], %s35
      %s37 = sshll.u32 [#allocation5], 4
      %s38 = int_to_ptr.vmem [resolvable:$true] %s37
      %43 = dma.hbm_to_vmem [thread:$0]  %s2, 3072, %s38, [#allocation6], 192, 192, 12
    $region13: #{tpu_custom_call.1} parent=1 // pred_fallthru
      _
    // Predicated region
    $region14: #{tpu_custom_call.1} parent=1 // pred_check
      _
    $region15: #{tpu_custom_call.1} parent=1 // pred_check_branch
      %45 = sbr.rel (0) target = $region17
    $region16: #{tpu_custom_call.1} parent=1 // pred_region
      %s47 = ssub.s32 3072, 3072
      %48 = vsyncadd [#allocation6], %s47
      %s49 = sshll.u32 [#allocation7], 4
      %s50 = int_to_ptr.vmem [resolvable:$true] %s49
      %55 = dma.hbm_to_vmem [thread:$0]  %s3, 3072, %s50, [#allocation6], 192, 192, 12
    $region17: #{tpu_custom_call.1} parent=1 // pred_fallthru
      _
    // Predicated region
    $region18: #{tpu_custom_call.1} parent=1 // pred_check
      _
    $region19: #{tpu_custom_call.1} parent=1 // pred_check_branch
      %57 = sbr.rel (0) target = $region21
    $region20: #{tpu_custom_call.1} parent=1 // pred_region
      _
    $region21: #{tpu_custom_call.1} parent=1 // pred_fallthru
      _
    // Predicated region
    $region22: #{tpu_custom_call.1} parent=1 // pred_check
      _
    $region23: #{tpu_custom_call.1} parent=1 // pred_check_branch
      %59 = sbr.rel (0) target = $region25
    $region24: #{tpu_custom_call.1} parent=1 // pred_region
      _
    $region25: #{tpu_custom_call.1} parent=1 // pred_fallthru
      _
    // Predicated region
    $region26: #{tpu_custom_call.1} parent=1 // pred_check
      _
    $region27: #{tpu_custom_call.1} parent=1 // pred_check_branch
      %61 = sbr.rel (0) target = $region29
    $region28: #{tpu_custom_call.1} parent=1 // pred_region
      %s63 = ssub.s32 2048, 2048
      %64 = vsyncadd [#allocation9], %s63
      %s65 = sshll.u32 [#allocation8], 4
      %s66 = int_to_ptr.vmem [resolvable:$true] %s65
      %71 = dma.hbm_to_vmem [thread:$0]  %s6, 2048, %s66, [#allocation9], 128, 128, 8
    $region29: #{tpu_custom_call.1} parent=1 // pred_fallthru
      _
    // Predicated region
    $region30: #{tpu_custom_call.1} parent=1 // pred_check
      _
    $region31: #{tpu_custom_call.1} parent=1 // pred_check_branch
      %73 = sbr.rel (0) target = $region33
    $region32: #{tpu_custom_call.1} parent=1 // pred_region
      _
    $region33: #{tpu_custom_call.1} parent=1 // pred_fallthru
      _
    // Predicated region
    $region34: #{tpu_custom_call.1} parent=1 // pred_check
      _
    $region35: #{tpu_custom_call.1} parent=1 // pred_check_branch
      %75 = sbr.rel (0) target = $region37
    $region36: #{tpu_custom_call.1} parent=1 // pred_region
      %76 = dma.done [#allocation3], 64
    $region37: #{tpu_custom_call.1} parent=1 // pred_fallthru
      _
    // Predicated region
    $region38: #{tpu_custom_call.1} parent=1 // pred_check
      _
    $region39: #{tpu_custom_call.1} parent=1 // pred_check_branch
      %78 = sbr.rel (0) target = $region41
    $region40: #{tpu_custom_call.1} parent=1 // pred_region
      %79 = dma.done [#allocation6], 3072
    $region41: #{tpu_custom_call.1} parent=1 // pred_fallthru
      _
    // Predicated region
    $region42: #{tpu_custom_call.1} parent=1 // pred_check
      _
    $region43: #{tpu_custom_call.1} parent=1 // pred_check_branch
      %81 = sbr.rel (0) target = $region45
    $region44: #{tpu_custom_call.1} parent=1 // pred_region
      %82 = dma.done [#allocation6], 3072
    $region45: #{tpu_custom_call.1} parent=1 // pred_fallthru
      _
    // Predicated region
    $region46: #{tpu_custom_call.1} parent=1 // pred_check
      _
    $region47: #{tpu_custom_call.1} parent=1 // pred_check_branch
      %84 = sbr.rel (0) target = $region49
    $region48: #{tpu_custom_call.1} parent=1 // pred_region
      %85 = dma.done [#allocation9], 2048
    $region49: #{tpu_custom_call.1} parent=1 // pred_fallthru
      _
    %v87 = vld [vmem:[#allocation5] sm:$0xff]
    %v88 = vld [vmem:[#allocation5 + $0x8] sm:$0xf]
    %v89 = vld [vmem:[#allocation5 + $0xc] sm:$0xff]
    %v90 = vld [vmem:[#allocation5 + $0x14] sm:$0xf]
    %v91 = vld [vmem:[#allocation5 + $0x18] sm:$0xff]
    %v92 = vld [vmem:[#allocation5 + $0x20] sm:$0xf]
    %v93 = vld [vmem:[#allocation5 + $0x24] sm:$0xff]
    %v94 = vld [vmem:[#allocation5 + $0x2c] sm:$0xf]
    %v95 = vld [vmem:[#allocation5 + $0x30] sm:$0xff]
    %v96 = vld [vmem:[#allocation5 + $0x38] sm:$0xf]
    %v97 = vld [vmem:[#allocation5 + $0x3c] sm:$0xff]
    %v98 = vld [vmem:[#allocation5 + $0x44] sm:$0xf]
    %v99 = vld [vmem:[#allocation5 + $0x48] sm:$0xff]
    %v100 = vld [vmem:[#allocation5 + $0x50] sm:$0xf]
    %v101 = vld [vmem:[#allocation5 + $0x54] sm:$0xff]
    %v102 = vld [vmem:[#allocation5 + $0x5c] sm:$0xf]
    %v103 = vld [vmem:[#allocation5 + $0x60] sm:$0xff]
    %v104 = vld [vmem:[#allocation5 + $0x68] sm:$0xf]
    %v105 = vld [vmem:[#allocation5 + $0x6c] sm:$0xff]
    %v106 = vld [vmem:[#allocation5 + $0x74] sm:$0xf]
    %v107 = vld [vmem:[#allocation5 + $0x78] sm:$0xff]
    %v108 = vld [vmem:[#allocation5 + $0x80] sm:$0xf]
    %v109 = vld [vmem:[#allocation5 + $0x84] sm:$0xff]
    %v110 = vld [vmem:[#allocation5 + $0x8c] sm:$0xf]
    %v111 = vld [vmem:[#allocation5 + $0x90] sm:$0xff]
    %v112 = vld [vmem:[#allocation5 + $0x98] sm:$0xf]
    %v113 = vld [vmem:[#allocation5 + $0x9c] sm:$0xff]
    %v114 = vld [vmem:[#allocation5 + $0xa4] sm:$0xf]
    %v115 = vld [vmem:[#allocation5 + $0xa8] sm:$0xff]
    %v116 = vld [vmem:[#allocation5 + $0xb0] sm:$0xf]
    %v117 = vld [vmem:[#allocation5 + $0xb4] sm:$0xff]
    %v118 = vld [vmem:[#allocation5 + $0xbc] sm:$0xf]
    %v119 = vld [vmem:[#allocation7] sm:$0xff]
    %v120 = vld [vmem:[#allocation7 + $0x8] sm:$0xf]
    %v121 = vld [vmem:[#allocation7 + $0xc] sm:$0xff]
    %v122 = vld [vmem:[#allocation7 + $0x14] sm:$0xf]
    %v123 = vld [vmem:[#allocation7 + $0x18] sm:$0xff]
    %v124 = vld [vmem:[#allocation7 + $0x20] sm:$0xf]
    %v125 = vld [vmem:[#allocation7 + $0x24] sm:$0xff]
    %v126 = vld [vmem:[#allocation7 + $0x2c] sm:$0xf]
    %v127 = vld [vmem:[#allocation7 + $0x30] sm:$0xff]
    %v128 = vld [vmem:[#allocation7 + $0x38] sm:$0xf]
    %v129 = vld [vmem:[#allocation7 + $0x3c] sm:$0xff]
    %v130 = vld [vmem:[#allocation7 + $0x44] sm:$0xf]
    %v131 = vld [vmem:[#allocation7 + $0x48] sm:$0xff]
    %v132 = vld [vmem:[#allocation7 + $0x50] sm:$0xf]
    %v133 = vld [vmem:[#allocation7 + $0x54] sm:$0xff]
    %v134 = vld [vmem:[#allocation7 + $0x5c] sm:$0xf]
    %v135 = vld [vmem:[#allocation7 + $0x60] sm:$0xff]
    %v136 = vld [vmem:[#allocation7 + $0x68] sm:$0xf]
    %v137 = vld [vmem:[#allocation7 + $0x6c] sm:$0xff]
    %v138 = vld [vmem:[#allocation7 + $0x74] sm:$0xf]
    %v139 = vld [vmem:[#allocation7 + $0x78] sm:$0xff]
    %v140 = vld [vmem:[#allocation7 + $0x80] sm:$0xf]
    %v141 = vld [vmem:[#allocation7 + $0x84] sm:$0xff]
    %v142 = vld [vmem:[#allocation7 + $0x8c] sm:$0xf]
    %v143 = vld [vmem:[#allocation7 + $0x90] sm:$0xff]
    %v144 = vld [vmem:[#allocation7 + $0x98] sm:$0xf]
    %v145 = vld [vmem:[#allocation7 + $0x9c] sm:$0xff]
    %v146 = vld [vmem:[#allocation7 + $0xa4] sm:$0xf]
    %v147 = vld [vmem:[#allocation7 + $0xa8] sm:$0xff]
    %v148 = vld [vmem:[#allocation7 + $0xb0] sm:$0xf]
    %v149 = vld [vmem:[#allocation7 + $0xb4] sm:$0xff]
    %v150 = vld [vmem:[#allocation7 + $0xbc] sm:$0xf]
    %v151 = vld [vmem:[%s4] sm:$0x7]
    %v152 = vld [vmem:[%s5] sm:$0x7]
    %v153 = vld [vmem:[#allocation8] sm:$0xff]
    %v154 = vld [vmem:[#allocation8 + $0x8] sm:$0xff]
    %v155 = vld [vmem:[#allocation8 + $0x10] sm:$0xff]
    %v156 = vld [vmem:[#allocation8 + $0x18] sm:$0xff]
    %v157 = vld [vmem:[#allocation8 + $0x20] sm:$0xff]
    %v158 = vld [vmem:[#allocation8 + $0x28] sm:$0xff]
    %v159 = vld [vmem:[#allocation8 + $0x30] sm:$0xff]
    %v160 = vld [vmem:[#allocation8 + $0x38] sm:$0xff]
    %v161 = vld [vmem:[#allocation8 + $0x40] sm:$0xff]
    %v162 = vld [vmem:[#allocation8 + $0x48] sm:$0xff]
    %v163 = vld [vmem:[#allocation8 + $0x50] sm:$0xff]
    %v164 = vld [vmem:[#allocation8 + $0x58] sm:$0xff]
    %v165 = vld [vmem:[#allocation8 + $0x60] sm:$0xff]
    %v166 = vld [vmem:[#allocation8 + $0x68] sm:$0xff]
    %v167 = vld [vmem:[#allocation8 + $0x70] sm:$0xff]
    %v168 = vld [vmem:[#allocation8 + $0x78] sm:$0xff]
    %v169 = vld [vmem:[%s7] sm:$0x3]
    %v170 = vld [vmem:[%s1] sm:$0x1]
    %v171 = vld [vmem:[#allocation2] sm:$0x1]
    %v172 = vmax.bf16 %v171, 0
    %v205 = vunpack.c.l.b16 %v87
    %v206 = vunpack.c.h.b16 %v87
    %v207 = vunpack.c.l.b16 %v88
    %v208 = vunpack.c.l.b16 %v89
    %v209 = vunpack.c.h.b16 %v89
    %v210 = vunpack.c.l.b16 %v90
    %v211 = vunpack.c.l.b16 %v91
    %v212 = vunpack.c.h.b16 %v91
    %v213 = vunpack.c.l.b16 %v92
    %v214 = vunpack.c.l.b16 %v93
    %v215 = vunpack.c.h.b16 %v93
    %v216 = vunpack.c.l.b16 %v94
    %v217 = vunpack.c.l.b16 %v95
    %v218 = vunpack.c.h.b16 %v95
    %v219 = vunpack.c.l.b16 %v96
    %v220 = vunpack.c.l.b16 %v97
    %v221 = vunpack.c.h.b16 %v97
    %v222 = vunpack.c.l.b16 %v98
    %v223 = vunpack.c.l.b16 %v99
    %v224 = vunpack.c.h.b16 %v99
    %v225 = vunpack.c.l.b16 %v100
    %v226 = vunpack.c.l.b16 %v101
    %v227 = vunpack.c.h.b16 %v101
    %v228 = vunpack.c.l.b16 %v102
    %v229 = vunpack.c.l.b16 %v103
    %v230 = vunpack.c.h.b16 %v103
    %v231 = vunpack.c.l.b16 %v104
    %v232 = vunpack.c.l.b16 %v105
    %v233 = vunpack.c.h.b16 %v105
    %v234 = vunpack.c.l.b16 %v106
    %v235 = vunpack.c.l.b16 %v107
    %v236 = vunpack.c.h.b16 %v107
    %v237 = vunpack.c.l.b16 %v108
    %v238 = vunpack.c.l.b16 %v109
    %v239 = vunpack.c.h.b16 %v109
    %v240 = vunpack.c.l.b16 %v110
    %v241 = vunpack.c.l.b16 %v111
    %v242 = vunpack.c.h.b16 %v111
    %v243 = vunpack.c.l.b16 %v112
    %v244 = vunpack.c.l.b16 %v113
    %v245 = vunpack.c.h.b16 %v113
    %v246 = vunpack.c.l.b16 %v114
    %v247 = vunpack.c.l.b16 %v115
    %v248 = vunpack.c.h.b16 %v115
    %v249 = vunpack.c.l.b16 %v116
    %v250 = vunpack.c.l.b16 %v117
    %v251 = vunpack.c.h.b16 %v117
    %v252 = vunpack.c.l.b16 %v118
    %v253 = vpack.c.b16 %v208, %v205
    %v254 = vpack.c.b16 %v209, %v206
    %v255 = vpack.c.b16 %v210, %v207
    %v256 = vpack.c.b16 %v214, %v211
    %v257 = vpack.c.b16 %v215, %v212
    %v258 = vpack.c.b16 %v216, %v213
    %v259 = vpack.c.b16 %v220, %v217
    %v260 = vpack.c.b16 %v221, %v218
    %v261 = vpack.c.b16 %v222, %v219
    %v262 = vpack.c.b16 %v226, %v223
    %v263 = vpack.c.b16 %v227, %v224
    %v264 = vpack.c.b16 %v228, %v225
    %v265 = vpack.c.b16 %v232, %v229
    %v266 = vpack.c.b16 %v233, %v230
    %v267 = vpack.c.b16 %v234, %v231
    %v268 = vpack.c.b16 %v238, %v235
    %v269 = vpack.c.b16 %v239, %v236
    %v270 = vpack.c.b16 %v240, %v237
    %v271 = vpack.c.b16 %v244, %v241
    %v272 = vpack.c.b16 %v245, %v242
    %v273 = vpack.c.b16 %v246, %v243
    %v274 = vpack.c.b16 %v250, %v247
    %v275 = vpack.c.b16 %v251, %v248
    %v276 = vpack.c.b16 %v252, %v249
    %v302 = vlaneseq
    %v303 = vshrl.u32 %v302, 7
    %v304 = vsub.s32 0, %v303
    %v305 = vrot.slane %v151, %v304
    %v306 = vlaneseq
    %v307 = vshrl.u32 %v306, 7
    %v308 = vsub.s32 1, %v307
    %v309 = vrot.slane %v151, %v308
    %v310 = vlaneseq
    %v311 = vshrl.u32 %v310, 7
    %v312 = vsub.s32 2, %v311
    %v313 = vrot.slane %v151, %v312
    %317 = vmatprep.subr.bf16.mxu0 %v254
    %318 = vmatpush1.bf16.msra.mxu0 %v253
    %319 = vmatprep.subr.bf16.mxu0 %v257
    %320 = vmatpush1.bf16.msra.mxu0 %v256
    %321 = vmatprep.subr.bf16.mxu0 %v260
    %322 = vmatpush1.bf16.msra.mxu0 %v259
    %323 = vmatprep.subr.bf16.mxu0 %v263
    %324 = vmatpush1.bf16.msra.mxu0 %v262
    %325 = vmatprep.subr.bf16.mxu0 %v266
    %326 = vmatpush1.bf16.msra.mxu0 %v265
    %327 = vmatprep.subr.bf16.mxu0 %v269
    %328 = vmatpush1.bf16.msra.mxu0 %v268
    %329 = vmatprep.subr.bf16.mxu0 %v272
    %330 = vmatpush1.bf16.msra.mxu0 %v271
    %331 = vmatprep.subr.bf16.mxu0 %v275
    %332 = vmatpush1.bf16.msra.mxu0 %v274
    %333 = vmatprep.subr.bf16.mxu0 0
    %334 = vmatpush1.bf16.msra.mxu0 0
    %335 = vmatprep.subr.bf16.mxu0 0
    %336 = vmatpush1.bf16.msra.mxu0 0
    %337 = vmatprep.subr.bf16.mxu0 0
    %338 = vmatpush1.bf16.msra.mxu0 0
    %339 = vmatprep.subr.bf16.mxu0 0
    %340 = vmatpush1.bf16.msra.mxu0 0
    %341 = vmatprep.subr.bf16.mxu0 0
    %342 = vmatpush1.bf16.msra.mxu0 0
    %343 = vmatprep.subr.bf16.mxu0 0
    %344 = vmatpush1.bf16.msra.mxu0 0
    %345 = vmatprep.subr.bf16.mxu0 0
    %346 = vmatpush1.bf16.msra.mxu0 0
    %347 = vmatprep.subr.bf16.mxu0 0
    %348 = vmatpush1.bf16.msra.mxu0 0
    %349 = vmatprep.mubr.bf16.mxu0 0
    %350 = vmatmul.mubr.bf16.gmra.mrb[0].mxu0 %v172
    %v351 = vpop.f32.mrb[0].mxu0
    %v352 = vadd.f32 %v305, %v351
    %v353 = vpop.f32.mrb[0].mxu0
    %v354 = vadd.f32 %v309, %v353
    %v355 = vpop.f32.mrb[0].mxu0
    %v356 = vpop.f32.mrb[0].mxu0
    %357 = vdwg.mxu0
    %358 = vmatprep.subr.bf16.mxu0 0
    %359 = vmatpush1.bf16.msra.mxu0 %v255
    %360 = vmatprep.subr.bf16.mxu0 0
    %361 = vmatpush1.bf16.msra.mxu0 %v258
    %362 = vmatprep.subr.bf16.mxu0 0
    %363 = vmatpush1.bf16.msra.mxu0 %v261
    %364 = vmatprep.subr.bf16.mxu0 0
    %365 = vmatpush1.bf16.msra.mxu0 %v264
    %366 = vmatprep.subr.bf16.mxu0 0
    %367 = vmatpush1.bf16.msra.mxu0 %v267
    %368 = vmatprep.subr.bf16.mxu0 0
    %369 = vmatpush1.bf16.msra.mxu0 %v270
    %370 = vmatprep.subr.bf16.mxu0 0
    %371 = vmatpush1.bf16.msra.mxu0 %v273
    %372 = vmatprep.subr.bf16.mxu0 0
    %373 = vmatpush1.bf16.msra.mxu0 %v276
    %374 = vmatprep.subr.bf16.mxu0 0
    %375 = vmatpush1.bf16.msra.mxu0 0
    %376 = vmatprep.subr.bf16.mxu0 0
    %377 = vmatpush1.bf16.msra.mxu0 0
    %378 = vmatprep.subr.bf16.mxu0 0
    %379 = vmatpush1.bf16.msra.mxu0 0
    %380 = vmatprep.subr.bf16.mxu0 0
    %381 = vmatpush1.bf16.msra.mxu0 0
    %382 = vmatprep.subr.bf16.mxu0 0
    %383 = vmatpush1.bf16.msra.mxu0 0
    %384 = vmatprep.subr.bf16.mxu0 0
    %385 = vmatpush1.bf16.msra.mxu0 0
    %386 = vmatprep.subr.bf16.mxu0 0
    %387 = vmatpush1.bf16.msra.mxu0 0
    %388 = vmatprep.subr.bf16.mxu0 0
    %389 = vmatpush1.bf16.msra.mxu0 0
    %390 = vmatprep.mubr.bf16.mxu0 0
    %391 = vmatmul.mubr.bf16.gmra.mrb[0].mxu0 %v172
    %v392 = vpop.f32.mrb[0].mxu0
    %v393 = vadd.f32 %v313, %v392
    %v394 = vpop.f32.mrb[0].mxu0
    %v395 = vpop.f32.mrb[0].mxu0
    %v396 = vpop.f32.mrb[0].mxu0
    %397 = vdwg.mxu0
    %v398 = vpack.c.bf16 %v170, %v170
    %v431 = vunpack.c.l.b16 %v119
    %v432 = vunpack.c.h.b16 %v119
    %v433 = vunpack.c.l.b16 %v120
    %v434 = vunpack.c.l.b16 %v121
    %v435 = vunpack.c.h.b16 %v121
    %v436 = vunpack.c.l.b16 %v122
    %v437 = vunpack.c.l.b16 %v123
    %v438 = vunpack.c.h.b16 %v123
    %v439 = vunpack.c.l.b16 %v124
    %v440 = vunpack.c.l.b16 %v125
    %v441 = vunpack.c.h.b16 %v125
    %v442 = vunpack.c.l.b16 %v126
    %v443 = vunpack.c.l.b16 %v127
    %v444 = vunpack.c.h.b16 %v127
    %v445 = vunpack.c.l.b16 %v128
    %v446 = vunpack.c.l.b16 %v129
    %v447 = vunpack.c.h.b16 %v129
    %v448 = vunpack.c.l.b16 %v130
    %v449 = vunpack.c.l.b16 %v131
    %v450 = vunpack.c.h.b16 %v131
    %v451 = vunpack.c.l.b16 %v132
    %v452 = vunpack.c.l.b16 %v133
    %v453 = vunpack.c.h.b16 %v133
    %v454 = vunpack.c.l.b16 %v134
    %v455 = vunpack.c.l.b16 %v135
    %v456 = vunpack.c.h.b16 %v135
    %v457 = vunpack.c.l.b16 %v136
    %v458 = vunpack.c.l.b16 %v137
    %v459 = vunpack.c.h.b16 %v137
    %v460 = vunpack.c.l.b16 %v138
    %v461 = vunpack.c.l.b16 %v139
    %v462 = vunpack.c.h.b16 %v139
    %v463 = vunpack.c.l.b16 %v140
    %v464 = vunpack.c.l.b16 %v141
    %v465 = vunpack.c.h.b16 %v141
    %v466 = vunpack.c.l.b16 %v142
    %v467 = vunpack.c.l.b16 %v143
    %v468 = vunpack.c.h.b16 %v143
    %v469 = vunpack.c.l.b16 %v144
    %v470 = vunpack.c.l.b16 %v145
    %v471 = vunpack.c.h.b16 %v145
    %v472 = vunpack.c.l.b16 %v146
    %v473 = vunpack.c.l.b16 %v147
    %v474 = vunpack.c.h.b16 %v147
    %v475 = vunpack.c.l.b16 %v148
    %v476 = vunpack.c.l.b16 %v149
    %v477 = vunpack.c.h.b16 %v149
    %v478 = vunpack.c.l.b16 %v150
    %v479 = vpack.c.b16 %v434, %v431
    %v480 = vpack.c.b16 %v435, %v432
    %v481 = vpack.c.b16 %v436, %v433
    %v482 = vpack.c.b16 %v440, %v437
    %v483 = vpack.c.b16 %v441, %v438
    %v484 = vpack.c.b16 %v442, %v439
    %v485 = vpack.c.b16 %v446, %v443
    %v486 = vpack.c.b16 %v447, %v444
    %v487 = vpack.c.b16 %v448, %v445
    %v488 = vpack.c.b16 %v452, %v449
    %v489 = vpack.c.b16 %v453, %v450
    %v490 = vpack.c.b16 %v454, %v451
    %v491 = vpack.c.b16 %v458, %v455
    %v492 = vpack.c.b16 %v459, %v456
    %v493 = vpack.c.b16 %v460, %v457
    %v494 = vpack.c.b16 %v464, %v461
    %v495 = vpack.c.b16 %v465, %v462
    %v496 = vpack.c.b16 %v466, %v463
    %v497 = vpack.c.b16 %v470, %v467
    %v498 = vpack.c.b16 %v471, %v468
    %v499 = vpack.c.b16 %v472, %v469
    %v500 = vpack.c.b16 %v476, %v473
    %v501 = vpack.c.b16 %v477, %v474
    %v502 = vpack.c.b16 %v478, %v475
    %v528 = vlaneseq
    %v529 = vshrl.u32 %v528, 7
    %v530 = vsub.s32 0, %v529
    %v531 = vrot.slane %v152, %v530
    %v532 = vlaneseq
    %v533 = vshrl.u32 %v532, 7
    %v534 = vsub.s32 1, %v533
    %v535 = vrot.slane %v152, %v534
    %v536 = vlaneseq
    %v537 = vshrl.u32 %v536, 7
    %v538 = vsub.s32 2, %v537
    %v539 = vrot.slane %v152, %v538
    %543 = vmatprep.subr.bf16.mxu0 %v480
    %544 = vmatpush1.bf16.msra.mxu0 %v479
    %545 = vmatprep.subr.bf16.mxu0 %v483
    %546 = vmatpush1.bf16.msra.mxu0 %v482
    %547 = vmatprep.subr.bf16.mxu0 %v486
    %548 = vmatpush1.bf16.msra.mxu0 %v485
    %549 = vmatprep.subr.bf16.mxu0 %v489
    %550 = vmatpush1.bf16.msra.mxu0 %v488
    %551 = vmatprep.subr.bf16.mxu0 %v492
    %552 = vmatpush1.bf16.msra.mxu0 %v491
    %553 = vmatprep.subr.bf16.mxu0 %v495
    %554 = vmatpush1.bf16.msra.mxu0 %v494
    %555 = vmatprep.subr.bf16.mxu0 %v498
    %556 = vmatpush1.bf16.msra.mxu0 %v497
    %557 = vmatprep.subr.bf16.mxu0 %v501
    %558 = vmatpush1.bf16.msra.mxu0 %v500
    %559 = vmatprep.subr.bf16.mxu0 0
    %560 = vmatpush1.bf16.msra.mxu0 0
    %561 = vmatprep.subr.bf16.mxu0 0
    %562 = vmatpush1.bf16.msra.mxu0 0
    %563 = vmatprep.subr.bf16.mxu0 0
    %564 = vmatpush1.bf16.msra.mxu0 0
    %565 = vmatprep.subr.bf16.mxu0 0
    %566 = vmatpush1.bf16.msra.mxu0 0
    %567 = vmatprep.subr.bf16.mxu0 0
    %568 = vmatpush1.bf16.msra.mxu0 0
    %569 = vmatprep.subr.bf16.mxu0 0
    %570 = vmatpush1.bf16.msra.mxu0 0
    %571 = vmatprep.subr.bf16.mxu0 0
    %572 = vmatpush1.bf16.msra.mxu0 0
    %573 = vmatprep.subr.bf16.mxu0 0
    %574 = vmatpush1.bf16.msra.mxu0 0
    %575 = vmatprep.mubr.bf16.mxu0 0
    %576 = vmatmul.mubr.bf16.gmra.mrb[0].mxu0 %v398
    %v577 = vpop.f32.mrb[0].mxu0
    %v578 = vadd.f32 %v531, %v577
    %v579 = vpop.f32.mrb[0].mxu0
    %v580 = vadd.f32 %v535, %v579
    %v581 = vpop.f32.mrb[0].mxu0
    %v582 = vpop.f32.mrb[0].mxu0
    %583 = vdwg.mxu0
    %584 = vmatprep.subr.bf16.mxu0 0
    %585 = vmatpush1.bf16.msra.mxu0 %v481
    %586 = vmatprep.subr.bf16.mxu0 0
    %587 = vmatpush1.bf16.msra.mxu0 %v484
    %588 = vmatprep.subr.bf16.mxu0 0
    %589 = vmatpush1.bf16.msra.mxu0 %v487
    %590 = vmatprep.subr.bf16.mxu0 0
    %591 = vmatpush1.bf16.msra.mxu0 %v490
    %592 = vmatprep.subr.bf16.mxu0 0
    %593 = vmatpush1.bf16.msra.mxu0 %v493
    %594 = vmatprep.subr.bf16.mxu0 0
    %595 = vmatpush1.bf16.msra.mxu0 %v496
    %596 = vmatprep.subr.bf16.mxu0 0
    %597 = vmatpush1.bf16.msra.mxu0 %v499
    %598 = vmatprep.subr.bf16.mxu0 0
    %599 = vmatpush1.bf16.msra.mxu0 %v502
    %600 = vmatprep.subr.bf16.mxu0 0
    %601 = vmatpush1.bf16.msra.mxu0 0
    %602 = vmatprep.subr.bf16.mxu0 0
    %603 = vmatpush1.bf16.msra.mxu0 0
    %604 = vmatprep.subr.bf16.mxu0 0
    %605 = vmatpush1.bf16.msra.mxu0 0
    %606 = vmatprep.subr.bf16.mxu0 0
    %607 = vmatpush1.bf16.msra.mxu0 0
    %608 = vmatprep.subr.bf16.mxu0 0
    %609 = vmatpush1.bf16.msra.mxu0 0
    %610 = vmatprep.subr.bf16.mxu0 0
    %611 = vmatpush1.bf16.msra.mxu0 0
    %612 = vmatprep.subr.bf16.mxu0 0
    %613 = vmatpush1.bf16.msra.mxu0 0
    %614 = vmatprep.subr.bf16.mxu0 0
    %615 = vmatpush1.bf16.msra.mxu0 0
    %616 = vmatprep.mubr.bf16.mxu0 0
    %617 = vmatmul.mubr.bf16.gmra.mrb[0].mxu0 %v398
    %v618 = vpop.f32.mrb[0].mxu0
    %v619 = vadd.f32 %v539, %v618
    %v620 = vpop.f32.mrb[0].mxu0
    %v621 = vpop.f32.mrb[0].mxu0
    %v622 = vpop.f32.mrb[0].mxu0
    %623 = vdwg.mxu0
    %v624 = vadd.f32 %v352, %v578
    %v625 = vxor.u32 %v624, 2147483648
    %v626 = vmul.f32 %v625, 1.442695
    %v627 = vpow.pop %v626
    %v628 = vadd.f32 %v627, 1.0
    %v629 = vrcp.pop %v628
    %v630 = vmul.f32 1.0, %v629
    %v631 = vadd.f32 %v354, %v580
    %v632 = vxor.u32 %v631, 2147483648
    %v633 = vmul.f32 %v632, 1.442695
    %v634 = vpow.pop %v633
    %v635 = vadd.f32 %v634, 1.0
    %v636 = vrcp.pop %v635
    %v637 = vmul.f32 1.0, %v636
    %v638 = vmul.f32 %v630, %v619
    %v639 = vadd.f32 %v393, %v638
    %v640 = vtanh.pop %v639
    %v641 = vsub.f32 1.0, %v637
    %v642 = vmul.f32 %v641, %v640
    %v643 = vmul.f32 %v637, %v170
    %v644 = vadd.f32 %v642, %v643
    %v645 = vpack.c.bf16 %v644, %v644
    %v662 = vunpack.c.l.b16 %v153
    %v663 = vunpack.c.h.b16 %v153
    %v664 = vunpack.c.l.b16 %v154
    %v665 = vunpack.c.h.b16 %v154
    %v666 = vunpack.c.l.b16 %v155
    %v667 = vunpack.c.h.b16 %v155
    %v668 = vunpack.c.l.b16 %v156
    %v669 = vunpack.c.h.b16 %v156
    %v670 = vunpack.c.l.b16 %v157
    %v671 = vunpack.c.h.b16 %v157
    %v672 = vunpack.c.l.b16 %v158
    %v673 = vunpack.c.h.b16 %v158
    %v674 = vunpack.c.l.b16 %v159
    %v675 = vunpack.c.h.b16 %v159
    %v676 = vunpack.c.l.b16 %v160
    %v677 = vunpack.c.h.b16 %v160
    %v678 = vunpack.c.l.b16 %v161
    %v679 = vunpack.c.h.b16 %v161
    %v680 = vunpack.c.l.b16 %v162
    %v681 = vunpack.c.h.b16 %v162
    %v682 = vunpack.c.l.b16 %v163
    %v683 = vunpack.c.h.b16 %v163
    %v684 = vunpack.c.l.b16 %v164
    %v685 = vunpack.c.h.b16 %v164
    %v686 = vunpack.c.l.b16 %v165
    %v687 = vunpack.c.h.b16 %v165
    %v688 = vunpack.c.l.b16 %v166
    %v689 = vunpack.c.h.b16 %v166
    %v690 = vunpack.c.l.b16 %v167
    %v691 = vunpack.c.h.b16 %v167
    %v692 = vunpack.c.l.b16 %v168
    %v693 = vunpack.c.h.b16 %v168
    %v694 = vpack.c.b16 %v664, %v662
    %v695 = vpack.c.b16 %v665, %v663
    %v696 = vpack.c.b16 %v668, %v666
    %v697 = vpack.c.b16 %v669, %v667
    %v698 = vpack.c.b16 %v672, %v670
    %v699 = vpack.c.b16 %v673, %v671
    %v700 = vpack.c.b16 %v676, %v674
    %v701 = vpack.c.b16 %v677, %v675
    %v702 = vpack.c.b16 %v680, %v678
    %v703 = vpack.c.b16 %v681, %v679
    %v704 = vpack.c.b16 %v684, %v682
    %v705 = vpack.c.b16 %v685, %v683
    %v706 = vpack.c.b16 %v688, %v686
    %v707 = vpack.c.b16 %v689, %v687
    %v708 = vpack.c.b16 %v692, %v690
    %v709 = vpack.c.b16 %v693, %v691
    %v727 = vlaneseq
    %v728 = vshrl.u32 %v727, 7
    %v729 = vsub.s32 0, %v728
    %v730 = vrot.slane %v169, %v729
    %v731 = vlaneseq
    %v732 = vshrl.u32 %v731, 7
    %v733 = vsub.s32 1, %v732
    %v734 = vrot.slane %v169, %v733
    %737 = vmatprep.subr.bf16.mxu0 %v695
    %738 = vmatpush1.bf16.msra.mxu0 %v694
    %739 = vmatprep.subr.bf16.mxu0 %v697
    %740 = vmatpush1.bf16.msra.mxu0 %v696
    %741 = vmatprep.subr.bf16.mxu0 %v699
    %742 = vmatpush1.bf16.msra.mxu0 %v698
    %743 = vmatprep.subr.bf16.mxu0 %v701
    %744 = vmatpush1.bf16.msra.mxu0 %v700
    %745 = vmatprep.subr.bf16.mxu0 %v703
    %746 = vmatpush1.bf16.msra.mxu0 %v702
    %747 = vmatprep.subr.bf16.mxu0 %v705
    %748 = vmatpush1.bf16.msra.mxu0 %v704
    %749 = vmatprep.subr.bf16.mxu0 %v707
    %750 = vmatpush1.bf16.msra.mxu0 %v706
    %751 = vmatprep.subr.bf16.mxu0 %v709
    %752 = vmatpush1.bf16.msra.mxu0 %v708
    %753 = vmatprep.subr.bf16.mxu0 0
    %754 = vmatpush1.bf16.msra.mxu0 0
    %755 = vmatprep.subr.bf16.mxu0 0
    %756 = vmatpush1.bf16.msra.mxu0 0
    %757 = vmatprep.subr.bf16.mxu0 0
    %758 = vmatpush1.bf16.msra.mxu0 0
    %759 = vmatprep.subr.bf16.mxu0 0
    %760 = vmatpush1.bf16.msra.mxu0 0
    %761 = vmatprep.subr.bf16.mxu0 0
    %762 = vmatpush1.bf16.msra.mxu0 0
    %763 = vmatprep.subr.bf16.mxu0 0
    %764 = vmatpush1.bf16.msra.mxu0 0
    %765 = vmatprep.subr.bf16.mxu0 0
    %766 = vmatpush1.bf16.msra.mxu0 0
    %767 = vmatprep.subr.bf16.mxu0 0
    %768 = vmatpush1.bf16.msra.mxu0 0
    %769 = vmatprep.mubr.bf16.mxu0 0
    %770 = vmatmul.mubr.bf16.gmra.mrb[0].mxu0 %v645
    %v771 = vpop.f32.mrb[0].mxu0
    %v772 = vadd.f32 %v730, %v771
    %v773 = vpop.f32.mrb[0].mxu0
    %v774 = vadd.f32 %v734, %v773
    %v775 = vpop.f32.mrb[0].mxu0
    %v776 = vpop.f32.mrb[0].mxu0
    %777 = vdwg.mxu0
    %vm778 = vcmask 1040384
    %v779 = vsel %vm778, %v772, -inf
    %v780 = vsel %vm778, %v774, -inf
    %v781 = vmax.f32 %v779, %v780
    %782 = vmax.xlane.f32.xlu0 %v781
    %v783 = vpop.xlane.xlu0 %782
    %v784 = vsub.f32 %v772, %v783
    %v785 = vsub.f32 %v774, %v783
    %v786 = vmul.f32 %v784, 1.442695
    %v787 = vpow.pop %v786
    %v788 = vmul.f32 %v785, 1.442695
    %v789 = vpow.pop %v788
    %v790 = vsel %vm778, %v787, 0.0
    %v791 = vsel %vm778, %v789, 0.0
    %v792 = vadd.f32 %v790, %v791
    %793 = vadd.xlane.f32.xlu0 %v792
    %v794 = vpop.xlane.xlu0 %793
    %v795 = vlog2.pop %v794
    %v796 = vmul.f32 %v795, 0.6931472
    %v797 = vadd.f32 %v796, %v783
    %v798 = vsub.f32 %v772, %v797
    %v799 = vsub.f32 %v774, %v797
    %v802 = vcombine.low %v798, %v799
    %v804 = vunpack.c.l.s4 1966171168
    %v805 = vunpack.c.0.s8 %v804
    %v806 = vlaneseq
    %v807 = vshrl.u32 %v806, 7
    %v808 = vsub.s32 %v805, %v807
    %v809 = vrot.slane %v802, %v808
    %v811 = vunpack.c.l.s4 1966171168
    %v812 = vunpack.c.0.s8 %v811
    %v813 = vlaneseq
    %v814 = vshrl.u32 %v813, 7
    %v815 = vsub.s32 %v812, %v814
    %v816 = vrot.slane %v809, %v815
    %v818 = vlaneseq
    %vm819 = vcmp.ge.s32.totalorder %v818, 0
    %vm820 = vcmp.lt.s32.totalorder %v818, 256
    %vm821 = vmand %vm819, %vm820
    %822 = vst.msk [vmem:[#allocation10] ss:$8 sm:$0x3] %vm821, %v816
    %823 = vst.msk [vmem:[#allocation10] ss:$8 sm:$0x0] %vm821, %v816
    %v824 = vld [vmem:[#allocation2] sm:$0x1]
    %v825 = vmax.bf16 %v824, 0
    %v827 = vunpack.c.l.b16 %v825
    %v828 = vpack.c.b16 %v827, %v827
    %v830 = vshrl.u32 %v828, 16
    %833 = vmatprep.subr.bf16.mxu0 %v254
    %834 = vmatpush1.bf16.msra.mxu0 %v253
    %835 = vmatprep.subr.bf16.mxu0 %v257
    %836 = vmatpush1.bf16.msra.mxu0 %v256
    %837 = vmatprep.subr.bf16.mxu0 %v260
    %838 = vmatpush1.bf16.msra.mxu0 %v259
    %839 = vmatprep.subr.bf16.mxu0 %v263
    %840 = vmatpush1.bf16.msra.mxu0 %v262
    %841 = vmatprep.subr.bf16.mxu0 %v266
    %842 = vmatpush1.bf16.msra.mxu0 %v265
    %843 = vmatprep.subr.bf16.mxu0 %v269
    %844 = vmatpush1.bf16.msra.mxu0 %v268
    %845 = vmatprep.subr.bf16.mxu0 %v272
    %846 = vmatpush1.bf16.msra.mxu0 %v271
    %847 = vmatprep.subr.bf16.mxu0 %v275
    %848 = vmatpush1.bf16.msra.mxu0 %v274
    %849 = vmatprep.subr.bf16.mxu0 0
    %850 = vmatpush1.bf16.msra.mxu0 0
    %851 = vmatprep.subr.bf16.mxu0 0
    %852 = vmatpush1.bf16.msra.mxu0 0
    %853 = vmatprep.subr.bf16.mxu0 0
    %854 = vmatpush1.bf16.msra.mxu0 0
    %855 = vmatprep.subr.bf16.mxu0 0
    %856 = vmatpush1.bf16.msra.mxu0 0
    %857 = vmatprep.subr.bf16.mxu0 0
    %858 = vmatpush1.bf16.msra.mxu0 0
    %859 = vmatprep.subr.bf16.mxu0 0
    %860 = vmatpush1.bf16.msra.mxu0 0
    %861 = vmatprep.subr.bf16.mxu0 0
    %862 = vmatpush1.bf16.msra.mxu0 0
    %863 = vmatprep.subr.bf16.mxu0 0
    %864 = vmatpush1.bf16.msra.mxu0 0
    %865 = vmatprep.mubr.bf16.mxu0 0
    %866 = vmatmul.mubr.bf16.gmra.mrb[0].mxu0 %v830
    %v867 = vpop.f32.mrb[0].mxu0
    %v868 = vadd.f32 %v305, %v867
    %v869 = vpop.f32.mrb[0].mxu0
    %v870 = vadd.f32 %v309, %v869
    %v871 = vpop.f32.mrb[0].mxu0
    %v872 = vpop.f32.mrb[0].mxu0
    %873 = vdwg.mxu0
    %874 = vmatprep.subr.bf16.mxu0 0
    %875 = vmatpush1.bf16.msra.mxu0 %v255
    %876 = vmatprep.subr.bf16.mxu0 0
    %877 = vmatpush1.bf16.msra.mxu0 %v258
    %878 = vmatprep.subr.bf16.mxu0 0
    %879 = vmatpush1.bf16.msra.mxu0 %v261
    %880 = vmatprep.subr.bf16.mxu0 0
    %881 = vmatpush1.bf16.msra.mxu0 %v264
    %882 = vmatprep.subr.bf16.mxu0 0
    %883 = vmatpush1.bf16.msra.mxu0 %v267
    %884 = vmatprep.subr.bf16.mxu0 0
    %885 = vmatpush1.bf16.msra.mxu0 %v270
    %886 = vmatprep.subr.bf16.mxu0 0
    %887 = vmatpush1.bf16.msra.mxu0 %v273
    %888 = vmatprep.subr.bf16.mxu0 0
    %889 = vmatpush1.bf16.msra.mxu0 %v276
    %890 = vmatprep.subr.bf16.mxu0 0
    %891 = vmatpush1.bf16.msra.mxu0 0
    %892 = vmatprep.subr.bf16.mxu0 0
    %893 = vmatpush1.bf16.msra.mxu0 0
    %894 = vmatprep.subr.bf16.mxu0 0
    %895 = vmatpush1.bf16.msra.mxu0 0
    %896 = vmatprep.subr.bf16.mxu0 0
    %897 = vmatpush1.bf16.msra.mxu0 0
    %898 = vmatprep.subr.bf16.mxu0 0
    %899 = vmatpush1.bf16.msra.mxu0 0
    %900 = vmatprep.subr.bf16.mxu0 0
    %901 = vmatpush1.bf16.msra.mxu0 0
    %902 = vmatprep.subr.bf16.mxu0 0
    %903 = vmatpush1.bf16.msra.mxu0 0
    %904 = vmatprep.subr.bf16.mxu0 0
    %905 = vmatpush1.bf16.msra.mxu0 0
    %906 = vmatprep.mubr.bf16.mxu0 0
    %907 = vmatmul.mubr.bf16.gmra.mrb[0].mxu0 %v830
    %v908 = vpop.f32.mrb[0].mxu0
    %v909 = vadd.f32 %v313, %v908
    %v910 = vpop.f32.mrb[0].mxu0
    %v911 = vpop.f32.mrb[0].mxu0
    %v912 = vpop.f32.mrb[0].mxu0
    %913 = vdwg.mxu0
    %914 = vmatprep.subr.bf16.mxu0 %v480
    %915 = vmatpush1.bf16.msra.mxu0 %v479
    %916 = vmatprep.subr.bf16.mxu0 %v483
    %917 = vmatpush1.bf16.msra.mxu0 %v482
    %918 = vmatprep.subr.bf16.mxu0 %v486
    %919 = vmatpush1.bf16.msra.mxu0 %v485
    %920 = vmatprep.subr.bf16.mxu0 %v489
    %921 = vmatpush1.bf16.msra.mxu0 %v488
    %922 = vmatprep.subr.bf16.mxu0 %v492
    %923 = vmatpush1.bf16.msra.mxu0 %v491
    %924 = vmatprep.subr.bf16.mxu0 %v495
    %925 = vmatpush1.bf16.msra.mxu0 %v494
    %926 = vmatprep.subr.bf16.mxu0 %v498
    %927 = vmatpush1.bf16.msra.mxu0 %v497
    %928 = vmatprep.subr.bf16.mxu0 %v501
    %929 = vmatpush1.bf16.msra.mxu0 %v500
    %930 = vmatprep.subr.bf16.mxu0 0
    %931 = vmatpush1.bf16.msra.mxu0 0
    %932 = vmatprep.subr.bf16.mxu0 0
    %933 = vmatpush1.bf16.msra.mxu0 0
    %934 = vmatprep.subr.bf16.mxu0 0
    %935 = vmatpush1.bf16.msra.mxu0 0
    %936 = vmatprep.subr.bf16.mxu0 0
    %937 = vmatpush1.bf16.msra.mxu0 0
    %938 = vmatprep.subr.bf16.mxu0 0
    %939 = vmatpush1.bf16.msra.mxu0 0
    %940 = vmatprep.subr.bf16.mxu0 0
    %941 = vmatpush1.bf16.msra.mxu0 0
    %942 = vmatprep.subr.bf16.mxu0 0
    %943 = vmatpush1.bf16.msra.mxu0 0
    %944 = vmatprep.subr.bf16.mxu0 0
    %945 = vmatpush1.bf16.msra.mxu0 0
    %946 = vmatprep.mubr.bf16.mxu0 0
    %947 = vmatmul.mubr.bf16.gmra.mrb[0].mxu0 %v645
    %v948 = vpop.f32.mrb[0].mxu0
    %v949 = vadd.f32 %v531, %v948
    %v950 = vpop.f32.mrb[0].mxu0
    %v951 = vadd.f32 %v535, %v950
    %v952 = vpop.f32.mrb[0].mxu0
    %v953 = vpop.f32.mrb[0].mxu0
    %954 = vdwg.mxu0
    %955 = vmatprep.subr.bf16.mxu0 0
    %956 = vmatpush1.bf16.msra.mxu0 %v481
    %957 = vmatprep.subr.bf16.mxu0 0
    %958 = vmatpush1.bf16.msra.mxu0 %v484
    %959 = vmatprep.subr.bf16.mxu0 0
    %960 = vmatpush1.bf16.msra.mxu0 %v487
    %961 = vmatprep.subr.bf16.mxu0 0
    %962 = vmatpush1.bf16.msra.mxu0 %v490
    %963 = vmatprep.subr.bf16.mxu0 0
    %964 = vmatpush1.bf16.msra.mxu0 %v493
    %965 = vmatprep.subr.bf16.mxu0 0
    %966 = vmatpush1.bf16.msra.mxu0 %v496
    %967 = vmatprep.subr.bf16.mxu0 0
    %968 = vmatpush1.bf16.msra.mxu0 %v499
    %969 = vmatprep.subr.bf16.mxu0 0
    %970 = vmatpush1.bf16.msra.mxu0 %v502
    %971 = vmatprep.subr.bf16.mxu0 0
    %972 = vmatpush1.bf16.msra.mxu0 0
    %973 = vmatprep.subr.bf16.mxu0 0
    %974 = vmatpush1.bf16.msra.mxu0 0
    %975 = vmatprep.subr.bf16.mxu0 0
    %976 = vmatpush1.bf16.msra.mxu0 0
    %977 = vmatprep.subr.bf16.mxu0 0
    %978 = vmatpush1.bf16.msra.mxu0 0
    %979 = vmatprep.subr.bf16.mxu0 0
    %980 = vmatpush1.bf16.msra.mxu0 0
    %981 = vmatprep.subr.bf16.mxu0 0
    %982 = vmatpush1.bf16.msra.mxu0 0
    %983 = vmatprep.subr.bf16.mxu0 0
    %984 = vmatpush1.bf16.msra.mxu0 0
    %985 = vmatprep.subr.bf16.mxu0 0
    %986 = vmatpush1.bf16.msra.mxu0 0
    %987 = vmatprep.mubr.bf16.mxu0 0
    %988 = vmatmul.mubr.bf16.gmra.mrb[0].mxu0 %v645
    %v989 = vpop.f32.mrb[0].mxu0
    %v990 = vadd.f32 %v539, %v989
    %v991 = vpop.f32.mrb[0].mxu0
    %v992 = vpop.f32.mrb[0].mxu0
    %v993 = vpop.f32.mrb[0].mxu0
    %994 = vdwg.mxu0
    %v995 = vadd.f32 %v868, %v949
    %v996 = vxor.u32 %v995, 2147483648
    %v997 = vmul.f32 %v996, 1.442695
    %v998 = vpow.pop %v997
    %v999 = vadd.f32 %v998, 1.0
    %v1000 = vrcp.pop %v999
    %v1001 = vmul.f32 1.0, %v1000
    %v1002 = vadd.f32 %v870, %v951
    %v1003 = vxor.u32 %v1002, 2147483648
    %v1004 = vmul.f32 %v1003, 1.442695
    %v1005 = vpow.pop %v1004
    %v1006 = vadd.f32 %v1005, 1.0
    %v1007 = vrcp.pop %v1006
    %v1008 = vmul.f32 1.0, %v1007
    %v1009 = vmul.f32 %v1001, %v990
    %v1010 = vadd.f32 %v909, %v1009
    %v1011 = vtanh.pop %v1010
    %v1012 = vsub.f32 1.0, %v1008
    %v1013 = vmul.f32 %v1012, %v1011
    %v1014 = vmul.f32 %v1008, %v644
    %v1015 = vadd.f32 %v1013, %v1014
    %v1016 = vpack.c.bf16 %v1015, %v1015
    %1017 = vmatprep.subr.bf16.mxu0 %v695
    %1018 = vmatpush1.bf16.msra.mxu0 %v694
    %1019 = vmatprep.subr.bf16.mxu0 %v697
    %1020 = vmatpush1.bf16.msra.mxu0 %v696
    %1021 = vmatprep.subr.bf16.mxu0 %v699
    %1022 = vmatpush1.bf16.msra.mxu0 %v698
    %1023 = vmatprep.subr.bf16.mxu0 %v701
    %1024 = vmatpush1.bf16.msra.mxu0 %v700
    %1025 = vmatprep.subr.bf16.mxu0 %v703
    %1026 = vmatpush1.bf16.msra.mxu0 %v702
    %1027 = vmatprep.subr.bf16.mxu0 %v705
    %1028 = vmatpush1.bf16.msra.mxu0 %v704
    %1029 = vmatprep.subr.bf16.mxu0 %v707
    %1030 = vmatpush1.bf16.msra.mxu0 %v706
    %1031 = vmatprep.subr.bf16.mxu0 %v709
    %1032 = vmatpush1.bf16.msra.mxu0 %v708
    %1033 = vmatprep.subr.bf16.mxu0 0
    %1034 = vmatpush1.bf16.msra.mxu0 0
    %1035 = vmatprep.subr.bf16.mxu0 0
    %1036 = vmatpush1.bf16.msra.mxu0 0
    %1037 = vmatprep.subr.bf16.mxu0 0
    %1038 = vmatpush1.bf16.msra.mxu0 0
    %1039 = vmatprep.subr.bf16.mxu0 0
    %1040 = vmatpush1.bf16.msra.mxu0 0
    %1041 = vmatprep.subr.bf16.mxu0 0
    %1042 = vmatpush1.bf16.msra.mxu0 0
    %1043 = vmatprep.subr.bf16.mxu0 0
    %1044 = vmatpush1.bf16.msra.mxu0 0
    %1045 = vmatprep.subr.bf16.mxu0 0
    %1046 = vmatpush1.bf16.msra.mxu0 0
    %1047 = vmatprep.subr.bf16.mxu0 0
    %1048 = vmatpush1.bf16.msra.mxu0 0
    %1049 = vmatprep.mubr.bf16.mxu0 0
    %1050 = vmatmul.mubr.bf16.gmra.mrb[0].mxu0 %v1016
    %v1051 = vpop.f32.mrb[0].mxu0
    %v1052 = vadd.f32 %v730, %v1051
    %v1053 = vpop.f32.mrb[0].mxu0
    %v1054 = vadd.f32 %v734, %v1053
    %v1055 = vpop.f32.mrb[0].mxu0
    %v1056 = vpop.f32.mrb[0].mxu0
    %1057 = vdwg.mxu0
    %v1058 = vsel %vm778, %v1052, -inf
    %v1059 = vsel %vm778, %v1054, -inf
    %v1060 = vmax.f32 %v1058, %v1059
    %1061 = vmax.xlane.f32.xlu0 %v1060
    %v1062 = vpop.xlane.xlu0 %1061
    %v1063 = vsub.f32 %v1052, %v1062
    %v1064 = vsub.f32 %v1054, %v1062
    %v1065 = vmul.f32 %v1063, 1.442695
    %v1066 = vpow.pop %v1065
    %v1067 = vmul.f32 %v1064, 1.442695
    %v1068 = vpow.pop %v1067
    %v1069 = vsel %vm778, %v1066, 0.0
    %v1070 = vsel %vm778, %v1068, 0.0
    %v1071 = vadd.f32 %v1069, %v1070
    %1072 = vadd.xlane.f32.xlu0 %v1071
    %v1073 = vpop.xlane.xlu0 %1072
    %v1074 = vlog2.pop %v1073
    %v1075 = vmul.f32 %v1074, 0.6931472
    %v1076 = vadd.f32 %v1075, %v1062
    %v1077 = vsub.f32 %v1052, %v1076
    %v1078 = vsub.f32 %v1054, %v1076
    %v1081 = vcombine.low %v1077, %v1078
    %v1083 = vunpack.c.l.s4 1966171168
    %v1084 = vunpack.c.0.s8 %v1083
    %v1085 = vlaneseq
    %v1086 = vshrl.u32 %v1085, 7
    %v1087 = vsub.s32 %v1084, %v1086
    %v1088 = vrot.slane %v1081, %v1087
    %v1090 = vunpack.c.l.s4 1966171168
    %v1091 = vunpack.c.0.s8 %v1090
    %v1092 = vlaneseq
    %v1093 = vshrl.u32 %v1092, 7
    %v1094 = vsub.s32 %v1091, %v1093
    %v1095 = vrot.slane %v1088, %v1094
    %s1097 = scalar_lea.vmem [#allocation10], 1
    %1098 = vst.msk [vmem:[%s1097] ss:$8 sm:$0x3] %vm821, %v1095
    %1099 = vst.msk [vmem:[%s1097] ss:$8 sm:$0x0] %vm821, %v1095
    %v1100 = vld [vmem:[#allocation2] sm:$0x2]
    %v1101 = vmax.bf16 %v1100, 0
    %v1103 = vunpack.c.l.b16 %v1101
    %v1104 = vpack.c.b16 %v1103, %v1103
    %v1105 = vrot.slane %v1104, 1
    %1107 = vmatprep.subr.bf16.mxu0 %v254
    %1108 = vmatpush1.bf16.msra.mxu0 %v253
    %1109 = vmatprep.subr.bf16.mxu0 %v257
    %1110 = vmatpush1.bf16.msra.mxu0 %v256
    %1111 = vmatprep.subr.bf16.mxu0 %v260
    %1112 = vmatpush1.bf16.msra.mxu0 %v259
    %1113 = vmatprep.subr.bf16.mxu0 %v263
    %1114 = vmatpush1.bf16.msra.mxu0 %v262
    %1115 = vmatprep.subr.bf16.mxu0 %v266
    %1116 = vmatpush1.bf16.msra.mxu0 %v265
    %1117 = vmatprep.subr.bf16.mxu0 %v269
    %1118 = vmatpush1.bf16.msra.mxu0 %v268
    %1119 = vmatprep.subr.bf16.mxu0 %v272
    %1120 = vmatpush1.bf16.msra.mxu0 %v271
    %1121 = vmatprep.subr.bf16.mxu0 %v275
    %1122 = vmatpush1.bf16.msra.mxu0 %v274
    %1123 = vmatprep.subr.bf16.mxu0 0
    %1124 = vmatpush1.bf16.msra.mxu0 0
    %1125 = vmatprep.subr.bf16.mxu0 0
    %1126 = vmatpush1.bf16.msra.mxu0 0
    %1127 = vmatprep.subr.bf16.mxu0 0
    %1128 = vmatpush1.bf16.msra.mxu0 0
    %1129 = vmatprep.subr.bf16.mxu0 0
    %1130 = vmatpush1.bf16.msra.mxu0 0
    %1131 = vmatprep.subr.bf16.mxu0 0
    %1132 = vmatpush1.bf16.msra.mxu0 0
    %1133 = vmatprep.subr.bf16.mxu0 0
    %1134 = vmatpush1.bf16.msra.mxu0 0
    %1135 = vmatprep.subr.bf16.mxu0 0
    %1136 = vmatpush1.bf16.msra.mxu0 0
    %1137 = vmatprep.subr.bf16.mxu0 0
    %1138 = vmatpush1.bf16.msra.mxu0 0
    %1139 = vmatprep.mubr.bf16.mxu0 0
    %1140 = vmatmul.mubr.bf16.gmra.mrb[0].mxu0 %v1105
    %v1141 = vpop.f32.mrb[0].mxu0
    %v1142 = vadd.f32 %v305, %v1141
    %v1143 = vpop.f32.mrb[0].mxu0
    %v1144 = vadd.f32 %v309, %v1143
    %v1145 = vpop.f32.mrb[0].mxu0
    %v1146 = vpop.f32.mrb[0].mxu0
    %1147 = vdwg.mxu0
    %1148 = vmatprep.subr.bf16.mxu0 0
    %1149 = vmatpush1.bf16.msra.mxu0 %v255
    %1150 = vmatprep.subr.bf16.mxu0 0
    %1151 = vmatpush1.bf16.msra.mxu0 %v258
    %1152 = vmatprep.subr.bf16.mxu0 0
    %1153 = vmatpush1.bf16.msra.mxu0 %v261
    %1154 = vmatprep.subr.bf16.mxu0 0
    %1155 = vmatpush1.bf16.msra.mxu0 %v264
    %1156 = vmatprep.subr.bf16.mxu0 0
    %1157 = vmatpush1.bf16.msra.mxu0 %v267
    %1158 = vmatprep.subr.bf16.mxu0 0
    %1159 = vmatpush1.bf16.msra.mxu0 %v270
    %1160 = vmatprep.subr.bf16.mxu0 0
    %1161 = vmatpush1.bf16.msra.mxu0 %v273
    %1162 = vmatprep.subr.bf16.mxu0 0
    %1163 = vmatpush1.bf16.msra.mxu0 %v276
    %1164 = vmatprep.subr.bf16.mxu0 0
    %1165 = vmatpush1.bf16.msra.mxu0 0
    %1166 = vmatprep.subr.bf16.mxu0 0
    %1167 = vmatpush1.bf16.msra.mxu0 0
    %1168 = vmatprep.subr.bf16.mxu0 0
    %1169 = vmatpush1.bf16.msra.mxu0 0
    %1170 = vmatprep.subr.bf16.mxu0 0
    %1171 = vmatpush1.bf16.msra.mxu0 0
    %1172 = vmatprep.subr.bf16.mxu0 0
    %1173 = vmatpush1.bf16.msra.mxu0 0
    %1174 = vmatprep.subr.bf16.mxu0 0
    %1175 = vmatpush1.bf16.msra.mxu0 0
    %1176 = vmatprep.subr.bf16.mxu0 0
    %1177 = vmatpush1.bf16.msra.mxu0 0
    %1178 = vmatprep.subr.bf16.mxu0 0
    %1179 = vmatpush1.bf16.msra.mxu0 0
    %1180 = vmatprep.mubr.bf16.mxu0 0
    %1181 = vmatmul.mubr.bf16.gmra.mrb[0].mxu0 %v1105
    %v1182 = vpop.f32.mrb[0].mxu0
    %v1183 = vadd.f32 %v313, %v1182
    %v1184 = vpop.f32.mrb[0].mxu0
    %v1185 = vpop.f32.mrb[0].mxu0
    %v1186 = vpop.f32.mrb[0].mxu0
    %1187 = vdwg.mxu0
    %1188 = vmatprep.subr.bf16.mxu0 %v480
    %1189 = vmatpush1.bf16.msra.mxu0 %v479
    %1190 = vmatprep.subr.bf16.mxu0 %v483
    %1191 = vmatpush1.bf16.msra.mxu0 %v482
    %1192 = vmatprep.subr.bf16.mxu0 %v486
    %1193 = vmatpush1.bf16.msra.mxu0 %v485
    %1194 = vmatprep.subr.bf16.mxu0 %v489
    %1195 = vmatpush1.bf16.msra.mxu0 %v488
    %1196 = vmatprep.subr.bf16.mxu0 %v492
    %1197 = vmatpush1.bf16.msra.mxu0 %v491
    %1198 = vmatprep.subr.bf16.mxu0 %v495
    %1199 = vmatpush1.bf16.msra.mxu0 %v494
    %1200 = vmatprep.subr.bf16.mxu0 %v498
    %1201 = vmatpush1.bf16.msra.mxu0 %v497
    %1202 = vmatprep.subr.bf16.mxu0 %v501
    %1203 = vmatpush1.bf16.msra.mxu0 %v500
    %1204 = vmatprep.subr.bf16.mxu0 0
    %1205 = vmatpush1.bf16.msra.mxu0 0
    %1206 = vmatprep.subr.bf16.mxu0 0
    %1207 = vmatpush1.bf16.msra.mxu0 0
    %1208 = vmatprep.subr.bf16.mxu0 0
    %1209 = vmatpush1.bf16.msra.mxu0 0
    %1210 = vmatprep.subr.bf16.mxu0 0
    %1211 = vmatpush1.bf16.msra.mxu0 0
    %1212 = vmatprep.subr.bf16.mxu0 0
    %1213 = vmatpush1.bf16.msra.mxu0 0
    %1214 = vmatprep.subr.bf16.mxu0 0
    %1215 = vmatpush1.bf16.msra.mxu0 0
    %1216 = vmatprep.subr.bf16.mxu0 0
    %1217 = vmatpush1.bf16.msra.mxu0 0
    %1218 = vmatprep.subr.bf16.mxu0 0
    %1219 = vmatpush1.bf16.msra.mxu0 0
    %1220 = vmatprep.mubr.bf16.mxu0 0
    %1221 = vmatmul.mubr.bf16.gmra.mrb[0].mxu0 %v1016
    %v1222 = vpop.f32.mrb[0].mxu0
    %v1223 = vadd.f32 %v531, %v1222
    %v1224 = vpop.f32.mrb[0].mxu0
    %v1225 = vadd.f32 %v535, %v1224
    %v1226 = vpop.f32.mrb[0].mxu0
    %v1227 = vpop.f32.mrb[0].mxu0
    %1228 = vdwg.mxu0
    %1229 = vmatprep.subr.bf16.mxu0 0
    %1230 = vmatpush1.bf16.msra.mxu0 %v481
    %1231 = vmatprep.subr.bf16.mxu0 0
    %1232 = vmatpush1.bf16.msra.mxu0 %v484
    %1233 = vmatprep.subr.bf16.mxu0 0
    %1234 = vmatpush1.bf16.msra.mxu0 %v487
    %1235 = vmatprep.subr.bf16.mxu0 0
    %1236 = vmatpush1.bf16.msra.mxu0 %v490
    %1237 = vmatprep.subr.bf16.mxu0 0
    %1238 = vmatpush1.bf16.msra.mxu0 %v493
    %1239 = vmatprep.subr.bf16.mxu0 0
    %1240 = vmatpush1.bf16.msra.mxu0 %v496
    %1241 = vmatprep.subr.bf16.mxu0 0
    %1242 = vmatpush1.bf16.msra.mxu0 %v499
    %1243 = vmatprep.subr.bf16.mxu0 0
    %1244 = vmatpush1.bf16.msra.mxu0 %v502
    %1245 = vmatprep.subr.bf16.mxu0 0
    %1246 = vmatpush1.bf16.msra.mxu0 0
    %1247 = vmatprep.subr.bf16.mxu0 0
    %1248 = vmatpush1.bf16.msra.mxu0 0
    %1249 = vmatprep.subr.bf16.mxu0 0
    %1250 = vmatpush1.bf16.msra.mxu0 0
    %1251 = vmatprep.subr.bf16.mxu0 0
    %1252 = vmatpush1.bf16.msra.mxu0 0
    %1253 = vmatprep.subr.bf16.mxu0 0
    %1254 = vmatpush1.bf16.msra.mxu0 0
    %1255 = vmatprep.subr.bf16.mxu0 0
    %1256 = vmatpush1.bf16.msra.mxu0 0
    %1257 = vmatprep.subr.bf16.mxu0 0
    %1258 = vmatpush1.bf16.msra.mxu0 0
    %1259 = vmatprep.subr.bf16.mxu0 0
    %1260 = vmatpush1.bf16.msra.mxu0 0
    %1261 = vmatprep.mubr.bf16.mxu0 0
    %1262 = vmatmul.mubr.bf16.gmra.mrb[0].mxu0 %v1016
    %v1263 = vpop.f32.mrb[0].mxu0
    %v1264 = vadd.f32 %v539, %v1263
    %v1265 = vpop.f32.mrb[0].mxu0
    %v1266 = vpop.f32.mrb[0].mxu0
    %v1267 = vpop.f32.mrb[0].mxu0
    %1268 = vdwg.mxu0
    %v1269 = vadd.f32 %v1142, %v1223
    %v1270 = vxor.u32 %v1269, 2147483648
    %v1271 = vmul.f32 %v1270, 1.442695
    %v1272 = vpow.pop %v1271
    %v1273 = vadd.f32 %v1272, 1.0
    %v1274 = vrcp.pop %v1273
    %v1275 = vmul.f32 1.0, %v1274
    %v1276 = vadd.f32 %v1144, %v1225
    %v1277 = vxor.u32 %v1276, 2147483648
    %v1278 = vmul.f32 %v1277, 1.442695
    %v1279 = vpow.pop %v1278
    %v1280 = vadd.f32 %v1279, 1.0
    %v1281 = vrcp.pop %v1280
    %v1282 = vmul.f32 1.0, %v1281
    %v1283 = vmul.f32 %v1275, %v1264
    %v1284 = vadd.f32 %v1183, %v1283
    %v1285 = vtanh.pop %v1284
    %v1286 = vsub.f32 1.0, %v1282
    %v1287 = vmul.f32 %v1286, %v1285
    %v1288 = vmul.f32 %v1282, %v1015
    %v1289 = vadd.f32 %v1287, %v1288
    %v1290 = vpack.c.bf16 %v1289, %v1289
    %1291 = vmatprep.subr.bf16.mxu0 %v695
    %1292 = vmatpush1.bf16.msra.mxu0 %v694
    %1293 = vmatprep.subr.bf16.mxu0 %v697
    %1294 = vmatpush1.bf16.msra.mxu0 %v696
    %1295 = vmatprep.subr.bf16.mxu0 %v699
    %1296 = vmatpush1.bf16.msra.mxu0 %v698
    %1297 = vmatprep.subr.bf16.mxu0 %v701
    %1298 = vmatpush1.bf16.msra.mxu0 %v700
    %1299 = vmatprep.subr.bf16.mxu0 %v703
    %1300 = vmatpush1.bf16.msra.mxu0 %v702
    %1301 = vmatprep.subr.bf16.mxu0 %v705
    %1302 = vmatpush1.bf16.msra.mxu0 %v704
    %1303 = vmatprep.subr.bf16.mxu0 %v707
    %1304 = vmatpush1.bf16.msra.mxu0 %v706
    %1305 = vmatprep.subr.bf16.mxu0 %v709
    %1306 = vmatpush1.bf16.msra.mxu0 %v708
    %1307 = vmatprep.subr.bf16.mxu0 0
    %1308 = vmatpush1.bf16.msra.mxu0 0
    %1309 = vmatprep.subr.bf16.mxu0 0
    %1310 = vmatpush1.bf16.msra.mxu0 0
    %1311 = vmatprep.subr.bf16.mxu0 0
    %1312 = vmatpush1.bf16.msra.mxu0 0
    %1313 = vmatprep.subr.bf16.mxu0 0
    %1314 = vmatpush1.bf16.msra.mxu0 0
    %1315 = vmatprep.subr.bf16.mxu0 0
    %1316 = vmatpush1.bf16.msra.mxu0 0
    %1317 = vmatprep.subr.bf16.mxu0 0
    %1318 = vmatpush1.bf16.msra.mxu0 0
    %1319 = vmatprep.subr.bf16.mxu0 0
    %1320 = vmatpush1.bf16.msra.mxu0 0
    %1321 = vmatprep.subr.bf16.mxu0 0
    %1322 = vmatpush1.bf16.msra.mxu0 0
    %1323 = vmatprep.mubr.bf16.mxu0 0
    %1324 = vmatmul.mubr.bf16.gmra.mrb[0].mxu0 %v1290
    %v1325 = vpop.f32.mrb[0].mxu0
    %v1326 = vadd.f32 %v730, %v1325
    %v1327 = vpop.f32.mrb[0].mxu0
    %v1328 = vadd.f32 %v734, %v1327
    %v1329 = vpop.f32.mrb[0].mxu0
    %v1330 = vpop.f32.mrb[0].mxu0
    %1331 = vdwg.mxu0
    %v1332 = vsel %vm778, %v1326, -inf
    %v1333 = vsel %vm778, %v1328, -inf
    %v1334 = vmax.f32 %v1332, %v1333
    %1335 = vmax.xlane.f32.xlu0 %v1334
    %v1336 = vpop.xlane.xlu0 %1335
    %v1337 = vsub.f32 %v1326, %v1336
    %v1338 = vsub.f32 %v1328, %v1336
    %v1339 = vmul.f32 %v1337, 1.442695
    %v1340 = vpow.pop %v1339
    %v1341 = vmul.f32 %v1338, 1.442695
    %v1342 = vpow.pop %v1341
    %v1343 = vsel %vm778, %v1340, 0.0
    %v1344 = vsel %vm778, %v1342, 0.0
    %v1345 = vadd.f32 %v1343, %v1344
    %1346 = vadd.xlane.f32.xlu0 %v1345
    %v1347 = vpop.xlane.xlu0 %1346
    %v1348 = vlog2.pop %v1347
    %v1349 = vmul.f32 %v1348, 0.6931472
    %v1350 = vadd.f32 %v1349, %v1336
    %v1351 = vsub.f32 %v1326, %v1350
    %v1352 = vsub.f32 %v1328, %v1350
    %v1355 = vcombine.low %v1351, %v1352
    %v1357 = vunpack.c.l.s4 1966171168
    %v1358 = vunpack.c.0.s8 %v1357
    %v1359 = vlaneseq
    %v1360 = vshrl.u32 %v1359, 7
    %v1361 = vsub.s32 %v1358, %v1360
    %v1362 = vrot.slane %v1355, %v1361
    %v1364 = vunpack.c.l.s4 1966171168
    %v1365 = vunpack.c.0.s8 %v1364
    %v1366 = vlaneseq
    %v1367 = vshrl.u32 %v1366, 7
    %v1368 = vsub.s32 %v1365, %v1367
    %v1369 = vrot.slane %v1362, %v1368
    %s1371 = scalar_lea.vmem [#allocation10], 2
    %1372 = vst.msk [vmem:[%s1371] ss:$8 sm:$0x3] %vm821, %v1369
    %1373 = vst.msk [vmem:[%s1371] ss:$8 sm:$0x0] %vm821, %v1369
    %v1374 = vld [vmem:[#allocation2] sm:$0x2]
    %v1375 = vmax.bf16 %v1374, 0
    %v1377 = vunpack.c.l.b16 %v1375
    %v1378 = vpack.c.b16 %v1377, %v1377
    %v1380 = vshrl.u32 %v1378, 16
    %v1382 = vrot.slane %v1380, 1
    %1384 = vmatprep.subr.bf16.mxu0 %v254
    %1385 = vmatpush1.bf16.msra.mxu0 %v253
    %1386 = vmatprep.subr.bf16.mxu0 %v257
    %1387 = vmatpush1.bf16.msra.mxu0 %v256
    %1388 = vmatprep.subr.bf16.mxu0 %v260
    %1389 = vmatpush1.bf16.msra.mxu0 %v259
    %1390 = vmatprep.subr.bf16.mxu0 %v263
    %1391 = vmatpush1.bf16.msra.mxu0 %v262
    %1392 = vmatprep.subr.bf16.mxu0 %v266
    %1393 = vmatpush1.bf16.msra.mxu0 %v265
    %1394 = vmatprep.subr.bf16.mxu0 %v269
    %1395 = vmatpush1.bf16.msra.mxu0 %v268
    %1396 = vmatprep.subr.bf16.mxu0 %v272
    %1397 = vmatpush1.bf16.msra.mxu0 %v271
    %1398 = vmatprep.subr.bf16.mxu0 %v275
    %1399 = vmatpush1.bf16.msra.mxu0 %v274
    %1400 = vmatprep.subr.bf16.mxu0 0
    %1401 = vmatpush1.bf16.msra.mxu0 0
    %1402 = vmatprep.subr.bf16.mxu0 0
    %1403 = vmatpush1.bf16.msra.mxu0 0
    %1404 = vmatprep.subr.bf16.mxu0 0
    %1405 = vmatpush1.bf16.msra.mxu0 0
    %1406 = vmatprep.subr.bf16.mxu0 0
    %1407 = vmatpush1.bf16.msra.mxu0 0
    %1408 = vmatprep.subr.bf16.mxu0 0
    %1409 = vmatpush1.bf16.msra.mxu0 0
    %1410 = vmatprep.subr.bf16.mxu0 0
    %1411 = vmatpush1.bf16.msra.mxu0 0
    %1412 = vmatprep.subr.bf16.mxu0 0
    %1413 = vmatpush1.bf16.msra.mxu0 0
    %1414 = vmatprep.subr.bf16.mxu0 0
    %1415 = vmatpush1.bf16.msra.mxu0 0
    %1416 = vmatprep.mubr.bf16.mxu0 0
    %1417 = vmatmul.mubr.bf16.gmra.mrb[0].mxu0 %v1382
    %v1418 = vpop.f32.mrb[0].mxu0
    %v1419 = vadd.f32 %v305, %v1418
    %v1420 = vpop.f32.mrb[0].mxu0
    %v1421 = vadd.f32 %v309, %v1420
    %v1422 = vpop.f32.mrb[0].mxu0
    %v1423 = vpop.f32.mrb[0].mxu0
    %1424 = vdwg.mxu0
    %1425 = vmatprep.subr.bf16.mxu0 0
    %1426 = vmatpush1.bf16.msra.mxu0 %v255
    %1427 = vmatprep.subr.bf16.mxu0 0
    %1428 = vmatpush1.bf16.msra.mxu0 %v258
    %1429 = vmatprep.subr.bf16.mxu0 0
    %1430 = vmatpush1.bf16.msra.mxu0 %v261
    %1431 = vmatprep.subr.bf16.mxu0 0
    %1432 = vmatpush1.bf16.msra.mxu0 %v264
    %1433 = vmatprep.subr.bf16.mxu0 0
    %1434 = vmatpush1.bf16.msra.mxu0 %v267
    %1435 = vmatprep.subr.bf16.mxu0 0
    %1436 = vmatpush1.bf16.msra.mxu0 %v270
    %1437 = vmatprep.subr.bf16.mxu0 0
    %1438 = vmatpush1.bf16.msra.mxu0 %v273
    %1439 = vmatprep.subr.bf16.mxu0 0
    %1440 = vmatpush1.bf16.msra.mxu0 %v276
    %1441 = vmatprep.subr.bf16.mxu0 0
    %1442 = vmatpush1.bf16.msra.mxu0 0
    %1443 = vmatprep.subr.bf16.mxu0 0
    %1444 = vmatpush1.bf16.msra.mxu0 0
    %1445 = vmatprep.subr.bf16.mxu0 0
    %1446 = vmatpush1.bf16.msra.mxu0 0
    %1447 = vmatprep.subr.bf16.mxu0 0
    %1448 = vmatpush1.bf16.msra.mxu0 0
    %1449 = vmatprep.subr.bf16.mxu0 0
    %1450 = vmatpush1.bf16.msra.mxu0 0
    %1451 = vmatprep.subr.bf16.mxu0 0
    %1452 = vmatpush1.bf16.msra.mxu0 0
    %1453 = vmatprep.subr.bf16.mxu0 0
    %1454 = vmatpush1.bf16.msra.mxu0 0
    %1455 = vmatprep.subr.bf16.mxu0 0
    %1456 = vmatpush1.bf16.msra.mxu0 0
    %1457 = vmatprep.mubr.bf16.mxu0 0
    %1458 = vmatmul.mubr.bf16.gmra.mrb[0].mxu0 %v1382
    %v1459 = vpop.f32.mrb[0].mxu0
    %v1460 = vadd.f32 %v313, %v1459
    %v1461 = vpop.f32.mrb[0].mxu0
    %v1462 = vpop.f32.mrb[0].mxu0
    %v1463 = vpop.f32.mrb[0].mxu0
    %1464 = vdwg.mxu0
    %1465 = vmatprep.subr.bf16.mxu0 %v480
    %1466 = vmatpush1.bf16.msra.mxu0 %v479
    %1467 = vmatprep.subr.bf16.mxu0 %v483
    %1468 = vmatpush1.bf16.msra.mxu0 %v482
    %1469 = vmatprep.subr.bf16.mxu0 %v486
    %1470 = vmatpush1.bf16.msra.mxu0 %v485
    %1471 = vmatprep.subr.bf16.mxu0 %v489
    %1472 = vmatpush1.bf16.msra.mxu0 %v488
    %1473 = vmatprep.subr.bf16.mxu0 %v492
    %1474 = vmatpush1.bf16.msra.mxu0 %v491
    %1475 = vmatprep.subr.bf16.mxu0 %v495
    %1476 = vmatpush1.bf16.msra.mxu0 %v494
    %1477 = vmatprep.subr.bf16.mxu0 %v498
    %1478 = vmatpush1.bf16.msra.mxu0 %v497
    %1479 = vmatprep.subr.bf16.mxu0 %v501
    %1480 = vmatpush1.bf16.msra.mxu0 %v500
    %1481 = vmatprep.subr.bf16.mxu0 0
    %1482 = vmatpush1.bf16.msra.mxu0 0
    %1483 = vmatprep.subr.bf16.mxu0 0
    %1484 = vmatpush1.bf16.msra.mxu0 0
    %1485 = vmatprep.subr.bf16.mxu0 0
    %1486 = vmatpush1.bf16.msra.mxu0 0
    %1487 = vmatprep.subr.bf16.mxu0 0
    %1488 = vmatpush1.bf16.msra.mxu0 0
    %1489 = vmatprep.subr.bf16.mxu0 0
    %1490 = vmatpush1.bf16.msra.mxu0 0
    %1491 = vmatprep.subr.bf16.mxu0 0
    %1492 = vmatpush1.bf16.msra.mxu0 0
    %1493 = vmatprep.subr.bf16.mxu0 0
    %1494 = vmatpush1.bf16.msra.mxu0 0
    %1495 = vmatprep.subr.bf16.mxu0 0
    %1496 = vmatpush1.bf16.msra.mxu0 0
    %1497 = vmatprep.mubr.bf16.mxu0 0
    %1498 = vmatmul.mubr.bf16.gmra.mrb[0].mxu0 %v1290
    %v1499 = vpop.f32.mrb[0].mxu0
    %v1500 = vadd.f32 %v531, %v1499
    %v1501 = vpop.f32.mrb[0].mxu0
    %v1502 = vadd.f32 %v535, %v1501
    %v1503 = vpop.f32.mrb[0].mxu0
    %v1504 = vpop.f32.mrb[0].mxu0
    %1505 = vdwg.mxu0
    %1506 = vmatprep.subr.bf16.mxu0 0
    %1507 = vmatpush1.bf16.msra.mxu0 %v481
    %1508 = vmatprep.subr.bf16.mxu0 0
    %1509 = vmatpush1.bf16.msra.mxu0 %v484
    %1510 = vmatprep.subr.bf16.mxu0 0
    %1511 = vmatpush1.bf16.msra.mxu0 %v487
    %1512 = vmatprep.subr.bf16.mxu0 0
    %1513 = vmatpush1.bf16.msra.mxu0 %v490
    %1514 = vmatprep.subr.bf16.mxu0 0
    %1515 = vmatpush1.bf16.msra.mxu0 %v493
    %1516 = vmatprep.subr.bf16.mxu0 0
    %1517 = vmatpush1.bf16.msra.mxu0 %v496
    %1518 = vmatprep.subr.bf16.mxu0 0
    %1519 = vmatpush1.bf16.msra.mxu0 %v499
    %1520 = vmatprep.subr.bf16.mxu0 0
    %1521 = vmatpush1.bf16.msra.mxu0 %v502
    %1522 = vmatprep.subr.bf16.mxu0 0
    %1523 = vmatpush1.bf16.msra.mxu0 0
    %1524 = vmatprep.subr.bf16.mxu0 0
    %1525 = vmatpush1.bf16.msra.mxu0 0
    %1526 = vmatprep.subr.bf16.mxu0 0
    %1527 = vmatpush1.bf16.msra.mxu0 0
    %1528 = vmatprep.subr.bf16.mxu0 0
    %1529 = vmatpush1.bf16.msra.mxu0 0
    %1530 = vmatprep.subr.bf16.mxu0 0
    %1531 = vmatpush1.bf16.msra.mxu0 0
    %1532 = vmatprep.subr.bf16.mxu0 0
    %1533 = vmatpush1.bf16.msra.mxu0 0
    %1534 = vmatprep.subr.bf16.mxu0 0
    %1535 = vmatpush1.bf16.msra.mxu0 0
    %1536 = vmatprep.subr.bf16.mxu0 0
    %1537 = vmatpush1.bf16.msra.mxu0 0
    %1538 = vmatprep.mubr.bf16.mxu0 0
    %1539 = vmatmul.mubr.bf16.gmra.mrb[0].mxu0 %v1290
    %v1540 = vpop.f32.mrb[0].mxu0
    %v1541 = vadd.f32 %v539, %v1540
    %v1542 = vpop.f32.mrb[0].mxu0
    %v1543 = vpop.f32.mrb[0].mxu0
    %v1544 = vpop.f32.mrb[0].mxu0
    %1545 = vdwg.mxu0
    %v1546 = vadd.f32 %v1419, %v1500
    %v1547 = vxor.u32 %v1546, 2147483648
    %v1548 = vmul.f32 %v1547, 1.442695
    %v1549 = vpow.pop %v1548
    %v1550 = vadd.f32 %v1549, 1.0
    %v1551 = vrcp.pop %v1550
    %v1552 = vmul.f32 1.0, %v1551
    %v1553 = vadd.f32 %v1421, %v1502
    %v1554 = vxor.u32 %v1553, 2147483648
    %v1555 = vmul.f32 %v1554, 1.442695
    %v1556 = vpow.pop %v1555
    %v1557 = vadd.f32 %v1556, 1.0
    %v1558 = vrcp.pop %v1557
    %v1559 = vmul.f32 1.0, %v1558
    %v1560 = vmul.f32 %v1552, %v1541
    %v1561 = vadd.f32 %v1460, %v1560
    %v1562 = vtanh.pop %v1561
    %v1563 = vsub.f32 1.0, %v1559
    %v1564 = vmul.f32 %v1563, %v1562
    %v1565 = vmul.f32 %v1559, %v1289
    %v1566 = vadd.f32 %v1564, %v1565
    %v1567 = vpack.c.bf16 %v1566, %v1566
    %1568 = vmatprep.subr.bf16.mxu0 %v695
    %1569 = vmatpush1.bf16.msra.mxu0 %v694
    %1570 = vmatprep.subr.bf16.mxu0 %v697
    %1571 = vmatpush1.bf16.msra.mxu0 %v696
    %1572 = vmatprep.subr.bf16.mxu0 %v699
    %1573 = vmatpush1.bf16.msra.mxu0 %v698
    %1574 = vmatprep.subr.bf16.mxu0 %v701
    %1575 = vmatpush1.bf16.msra.mxu0 %v700
    %1576 = vmatprep.subr.bf16.mxu0 %v703
    %1577 = vmatpush1.bf16.msra.mxu0 %v702
    %1578 = vmatprep.subr.bf16.mxu0 %v705
    %1579 = vmatpush1.bf16.msra.mxu0 %v704
    %1580 = vmatprep.subr.bf16.mxu0 %v707
    %1581 = vmatpush1.bf16.msra.mxu0 %v706
    %1582 = vmatprep.subr.bf16.mxu0 %v709
    %1583 = vmatpush1.bf16.msra.mxu0 %v708
    %1584 = vmatprep.subr.bf16.mxu0 0
    %1585 = vmatpush1.bf16.msra.mxu0 0
    %1586 = vmatprep.subr.bf16.mxu0 0
    %1587 = vmatpush1.bf16.msra.mxu0 0
    %1588 = vmatprep.subr.bf16.mxu0 0
    %1589 = vmatpush1.bf16.msra.mxu0 0
    %1590 = vmatprep.subr.bf16.mxu0 0
    %1591 = vmatpush1.bf16.msra.mxu0 0
    %1592 = vmatprep.subr.bf16.mxu0 0
    %1593 = vmatpush1.bf16.msra.mxu0 0
    %1594 = vmatprep.subr.bf16.mxu0 0
    %1595 = vmatpush1.bf16.msra.mxu0 0
    %1596 = vmatprep.subr.bf16.mxu0 0
    %1597 = vmatpush1.bf16.msra.mxu0 0
    %1598 = vmatprep.subr.bf16.mxu0 0
    %1599 = vmatpush1.bf16.msra.mxu0 0
    %1600 = vmatprep.mubr.bf16.mxu0 0
    %1601 = vmatmul.mubr.bf16.gmra.mrb[0].mxu0 %v1567
    %v1602 = vpop.f32.mrb[0].mxu0
    %v1603 = vadd.f32 %v730, %v1602
    %v1604 = vpop.f32.mrb[0].mxu0
    %v1605 = vadd.f32 %v734, %v1604
    %v1606 = vpop.f32.mrb[0].mxu0
    %v1607 = vpop.f32.mrb[0].mxu0
    %1608 = vdwg.mxu0
    %v1609 = vsel %vm778, %v1603, -inf
    %v1610 = vsel %vm778, %v1605, -inf
    %v1611 = vmax.f32 %v1609, %v1610
    %1612 = vmax.xlane.f32.xlu0 %v1611
    %v1613 = vpop.xlane.xlu0 %1612
    %v1614 = vsub.f32 %v1603, %v1613
    %v1615 = vsub.f32 %v1605, %v1613
    %v1616 = vmul.f32 %v1614, 1.442695
    %v1617 = vpow.pop %v1616
    %v1618 = vmul.f32 %v1615, 1.442695
    %v1619 = vpow.pop %v1618
    %v1620 = vsel %vm778, %v1617, 0.0
    %v1621 = vsel %vm778, %v1619, 0.0
    %v1622 = vadd.f32 %v1620, %v1621
    %1623 = vadd.xlane.f32.xlu0 %v1622
    %v1624 = vpop.xlane.xlu0 %1623
    %v1625 = vlog2.pop %v1624
    %v1626 = vmul.f32 %v1625, 0.6931472
    %v1627 = vadd.f32 %v1626, %v1613
    %v1628 = vsub.f32 %v1603, %v1627
    %v1629 = vsub.f32 %v1605, %v1627
    %v1632 = vcombine.low %v1628, %v1629
    %v1634 = vunpack.c.l.s4 1966171168
    %v1635 = vunpack.c.0.s8 %v1634
    %v1636 = vlaneseq
    %v1637 = vshrl.u32 %v1636, 7
    %v1638 = vsub.s32 %v1635, %v1637
    %v1639 = vrot.slane %v1632, %v1638
    %v1641 = vunpack.c.l.s4 1966171168
    %v1642 = vunpack.c.0.s8 %v1641
    %v1643 = vlaneseq
    %v1644 = vshrl.u32 %v1643, 7
    %v1645 = vsub.s32 %v1642, %v1644
    %v1646 = vrot.slane %v1639, %v1645
    %s1648 = scalar_lea.vmem [#allocation10], 3
    %1649 = vst.msk [vmem:[%s1648] ss:$8 sm:$0x3] %vm821, %v1646
    %1650 = vst.msk [vmem:[%s1648] ss:$8 sm:$0x0] %vm821, %v1646
    %v1651 = vld [vmem:[#allocation2] sm:$0x4]
    %v1652 = vmax.bf16 %v1651, 0
    %v1654 = vunpack.c.l.b16 %v1652
    %v1655 = vpack.c.b16 %v1654, %v1654
    %v1656 = vrot.slane %v1655, 2
    %1658 = vmatprep.subr.bf16.mxu0 %v254
    %1659 = vmatpush1.bf16.msra.mxu0 %v253
    %1660 = vmatprep.subr.bf16.mxu0 %v257
    %1661 = vmatpush1.bf16.msra.mxu0 %v256
    %1662 = vmatprep.subr.bf16.mxu0 %v260
    %1663 = vmatpush1.bf16.msra.mxu0 %v259
    %1664 = vmatprep.subr.bf16.mxu0 %v263
    %1665 = vmatpush1.bf16.msra.mxu0 %v262
    %1666 = vmatprep.subr.bf16.mxu0 %v266
    %1667 = vmatpush1.bf16.msra.mxu0 %v265
    %1668 = vmatprep.subr.bf16.mxu0 %v269
    %1669 = vmatpush1.bf16.msra.mxu0 %v268
    %1670 = vmatprep.subr.bf16.mxu0 %v272
    %1671 = vmatpush1.bf16.msra.mxu0 %v271
    %1672 = vmatprep.subr.bf16.mxu0 %v275
    %1673 = vmatpush1.bf16.msra.mxu0 %v274
    %1674 = vmatprep.subr.bf16.mxu0 0
    %1675 = vmatpush1.bf16.msra.mxu0 0
    %1676 = vmatprep.subr.bf16.mxu0 0
    %1677 = vmatpush1.bf16.msra.mxu0 0
    %1678 = vmatprep.subr.bf16.mxu0 0
    %1679 = vmatpush1.bf16.msra.mxu0 0
    %1680 = vmatprep.subr.bf16.mxu0 0
    %1681 = vmatpush1.bf16.msra.mxu0 0
    %1682 = vmatprep.subr.bf16.mxu0 0
    %1683 = vmatpush1.bf16.msra.mxu0 0
    %1684 = vmatprep.subr.bf16.mxu0 0
    %1685 = vmatpush1.bf16.msra.mxu0 0
    %1686 = vmatprep.subr.bf16.mxu0 0
    %1687 = vmatpush1.bf16.msra.mxu0 0
    %1688 = vmatprep.subr.bf16.mxu0 0
    %1689 = vmatpush1.bf16.msra.mxu0 0
    %1690 = vmatprep.mubr.bf16.mxu0 0
    %1691 = vmatmul.mubr.bf16.gmra.mrb[0].mxu0 %v1656
    %v1692 = vpop.f32.mrb[0].mxu0
    %v1693 = vadd.f32 %v305, %v1692
    %v1694 = vpop.f32.mrb[0].mxu0
    %v1695 = vadd.f32 %v309, %v1694
    %v1696 = vpop.f32.mrb[0].mxu0
    %v1697 = vpop.f32.mrb[0].mxu0
    %1698 = vdwg.mxu0
    %1699 = vmatprep.subr.bf16.mxu0 0
    %1700 = vmatpush1.bf16.msra.mxu0 %v255
    %1701 = vmatprep.subr.bf16.mxu0 0
    %1702 = vmatpush1.bf16.msra.mxu0 %v258
    %1703 = vmatprep.subr.bf16.mxu0 0
    %1704 = vmatpush1.bf16.msra.mxu0 %v261
    %1705 = vmatprep.subr.bf16.mxu0 0
    %1706 = vmatpush1.bf16.msra.mxu0 %v264
    %1707 = vmatprep.subr.bf16.mxu0 0
    %1708 = vmatpush1.bf16.msra.mxu0 %v267
    %1709 = vmatprep.subr.bf16.mxu0 0
    %1710 = vmatpush1.bf16.msra.mxu0 %v270
    %1711 = vmatprep.subr.bf16.mxu0 0
    %1712 = vmatpush1.bf16.msra.mxu0 %v273
    %1713 = vmatprep.subr.bf16.mxu0 0
    %1714 = vmatpush1.bf16.msra.mxu0 %v276
    %1715 = vmatprep.subr.bf16.mxu0 0
    %1716 = vmatpush1.bf16.msra.mxu0 0
    %1717 = vmatprep.subr.bf16.mxu0 0
    %1718 = vmatpush1.bf16.msra.mxu0 0
    %1719 = vmatprep.subr.bf16.mxu0 0
    %1720 = vmatpush1.bf16.msra.mxu0 0
    %1721 = vmatprep.subr.bf16.mxu0 0
    %1722 = vmatpush1.bf16.msra.mxu0 0
    %1723 = vmatprep.subr.bf16.mxu0 0
    %1724 = vmatpush1.bf16.msra.mxu0 0
    %1725 = vmatprep.subr.bf16.mxu0 0
    %1726 = vmatpush1.bf16.msra.mxu0 0
    %1727 = vmatprep.subr.bf16.mxu0 0
    %1728 = vmatpush1.bf16.msra.mxu0 0
    %1729 = vmatprep.subr.bf16.mxu0 0
    %1730 = vmatpush1.bf16.msra.mxu0 0
    %1731 = vmatprep.mubr.bf16.mxu0 0
    %1732 = vmatmul.mubr.bf16.gmra.mrb[0].mxu0 %v1656
    %v1733 = vpop.f32.mrb[0].mxu0
    %v1734 = vadd.f32 %v313, %v1733
    %v1735 = vpop.f32.mrb[0].mxu0
    %v1736 = vpop.f32.mrb[0].mxu0
    %v1737 = vpop.f32.mrb[0].mxu0
    %1738 = vdwg.mxu0
    %1739 = vmatprep.subr.bf16.mxu0 %v480
    %1740 = vmatpush1.bf16.msra.mxu0 %v479
    %1741 = vmatprep.subr.bf16.mxu0 %v483
    %1742 = vmatpush1.bf16.msra.mxu0 %v482
    %1743 = vmatprep.subr.bf16.mxu0 %v486
    %1744 = vmatpush1.bf16.msra.mxu0 %v485
    %1745 = vmatprep.subr.bf16.mxu0 %v489
    %1746 = vmatpush1.bf16.msra.mxu0 %v488
    %1747 = vmatprep.subr.bf16.mxu0 %v492
    %1748 = vmatpush1.bf16.msra.mxu0 %v491
    %1749 = vmatprep.subr.bf16.mxu0 %v495
    %1750 = vmatpush1.bf16.msra.mxu0 %v494
    %1751 = vmatprep.subr.bf16.mxu0 %v498
    %1752 = vmatpush1.bf16.msra.mxu0 %v497
    %1753 = vmatprep.subr.bf16.mxu0 %v501
    %1754 = vmatpush1.bf16.msra.mxu0 %v500
    %1755 = vmatprep.subr.bf16.mxu0 0
    %1756 = vmatpush1.bf16.msra.mxu0 0
    %1757 = vmatprep.subr.bf16.mxu0 0
    %1758 = vmatpush1.bf16.msra.mxu0 0
    %1759 = vmatprep.subr.bf16.mxu0 0
    %1760 = vmatpush1.bf16.msra.mxu0 0
    %1761 = vmatprep.subr.bf16.mxu0 0
    %1762 = vmatpush1.bf16.msra.mxu0 0
    %1763 = vmatprep.subr.bf16.mxu0 0
    %1764 = vmatpush1.bf16.msra.mxu0 0
    %1765 = vmatprep.subr.bf16.mxu0 0
    %1766 = vmatpush1.bf16.msra.mxu0 0
    %1767 = vmatprep.subr.bf16.mxu0 0
    %1768 = vmatpush1.bf16.msra.mxu0 0
    %1769 = vmatprep.subr.bf16.mxu0 0
    %1770 = vmatpush1.bf16.msra.mxu0 0
    %1771 = vmatprep.mubr.bf16.mxu0 0
    %1772 = vmatmul.mubr.bf16.gmra.mrb[0].mxu0 %v1567
    %v1773 = vpop.f32.mrb[0].mxu0
    %v1774 = vadd.f32 %v531, %v1773
    %v1775 = vpop.f32.mrb[0].mxu0
    %v1776 = vadd.f32 %v535, %v1775
    %v1777 = vpop.f32.mrb[0].mxu0
    %v1778 = vpop.f32.mrb[0].mxu0
    %1779 = vdwg.mxu0
    %1780 = vmatprep.subr.bf16.mxu0 0
    %1781 = vmatpush1.bf16.msra.mxu0 %v481
    %1782 = vmatprep.subr.bf16.mxu0 0
    %1783 = vmatpush1.bf16.msra.mxu0 %v484
    %1784 = vmatprep.subr.bf16.mxu0 0
    %1785 = vmatpush1.bf16.msra.mxu0 %v487
    %1786 = vmatprep.subr.bf16.mxu0 0
    %1787 = vmatpush1.bf16.msra.mxu0 %v490
    %1788 = vmatprep.subr.bf16.mxu0 0
    %1789 = vmatpush1.bf16.msra.mxu0 %v493
    %1790 = vmatprep.subr.bf16.mxu0 0
    %1791 = vmatpush1.bf16.msra.mxu0 %v496
    %1792 = vmatprep.subr.bf16.mxu0 0
    %1793 = vmatpush1.bf16.msra.mxu0 %v499
    %1794 = vmatprep.subr.bf16.mxu0 0
    %1795 = vmatpush1.bf16.msra.mxu0 %v502
    %1796 = vmatprep.subr.bf16.mxu0 0
    %1797 = vmatpush1.bf16.msra.mxu0 0
    %1798 = vmatprep.subr.bf16.mxu0 0
    %1799 = vmatpush1.bf16.msra.mxu0 0
    %1800 = vmatprep.subr.bf16.mxu0 0
    %1801 = vmatpush1.bf16.msra.mxu0 0
    %1802 = vmatprep.subr.bf16.mxu0 0
    %1803 = vmatpush1.bf16.msra.mxu0 0
    %1804 = vmatprep.subr.bf16.mxu0 0
    %1805 = vmatpush1.bf16.msra.mxu0 0
    %1806 = vmatprep.subr.bf16.mxu0 0
    %1807 = vmatpush1.bf16.msra.mxu0 0
    %1808 = vmatprep.subr.bf16.mxu0 0
    %1809 = vmatpush1.bf16.msra.mxu0 0
    %1810 = vmatprep.subr.bf16.mxu0 0
    %1811 = vmatpush1.bf16.msra.mxu0 0
    %1812 = vmatprep.mubr.bf16.mxu0 0
    %1813 = vmatmul.mubr.bf16.gmra.mrb[0].mxu0 %v1567
    %v1814 = vpop.f32.mrb[0].mxu0
    %v1815 = vadd.f32 %v539, %v1814
    %v1816 = vpop.f32.mrb[0].mxu0
    %v1817 = vpop.f32.mrb[0].mxu0
    %v1818 = vpop.f32.mrb[0].mxu0
    %1819 = vdwg.mxu0
    %v1820 = vadd.f32 %v1693, %v1774
    %v1821 = vxor.u32 %v1820, 2147483648
    %v1822 = vmul.f32 %v1821, 1.442695
    %v1823 = vpow.pop %v1822
    %v1824 = vadd.f32 %v1823, 1.0
    %v1825 = vrcp.pop %v1824
    %v1826 = vmul.f32 1.0, %v1825
    %v1827 = vadd.f32 %v1695, %v1776
    %v1828 = vxor.u32 %v1827, 2147483648
    %v1829 = vmul.f32 %v1828, 1.442695
    %v1830 = vpow.pop %v1829
    %v1831 = vadd.f32 %v1830, 1.0
    %v1832 = vrcp.pop %v1831
    %v1833 = vmul.f32 1.0, %v1832
    %v1834 = vmul.f32 %v1826, %v1815
    %v1835 = vadd.f32 %v1734, %v1834
    %v1836 = vtanh.pop %v1835
    %v1837 = vsub.f32 1.0, %v1833
    %v1838 = vmul.f32 %v1837, %v1836
    %v1839 = vmul.f32 %v1833, %v1566
    %v1840 = vadd.f32 %v1838, %v1839
    %v1841 = vpack.c.bf16 %v1840, %v1840
    %1842 = vmatprep.subr.bf16.mxu0 %v695
    %1843 = vmatpush1.bf16.msra.mxu0 %v694
    %1844 = vmatprep.subr.bf16.mxu0 %v697
    %1845 = vmatpush1.bf16.msra.mxu0 %v696
    %1846 = vmatprep.subr.bf16.mxu0 %v699
    %1847 = vmatpush1.bf16.msra.mxu0 %v698
    %1848 = vmatprep.subr.bf16.mxu0 %v701
    %1849 = vmatpush1.bf16.msra.mxu0 %v700
    %1850 = vmatprep.subr.bf16.mxu0 %v703
    %1851 = vmatpush1.bf16.msra.mxu0 %v702
    %1852 = vmatprep.subr.bf16.mxu0 %v705
    %1853 = vmatpush1.bf16.msra.mxu0 %v704
    %1854 = vmatprep.subr.bf16.mxu0 %v707
    %1855 = vmatpush1.bf16.msra.mxu0 %v706
    %1856 = vmatprep.subr.bf16.mxu0 %v709
    %1857 = vmatpush1.bf16.msra.mxu0 %v708
    %1858 = vmatprep.subr.bf16.mxu0 0
    %1859 = vmatpush1.bf16.msra.mxu0 0
    %1860 = vmatprep.subr.bf16.mxu0 0
    %1861 = vmatpush1.bf16.msra.mxu0 0
    %1862 = vmatprep.subr.bf16.mxu0 0
    %1863 = vmatpush1.bf16.msra.mxu0 0
    %1864 = vmatprep.subr.bf16.mxu0 0
    %1865 = vmatpush1.bf16.msra.mxu0 0
    %1866 = vmatprep.subr.bf16.mxu0 0
    %1867 = vmatpush1.bf16.msra.mxu0 0
    %1868 = vmatprep.subr.bf16.mxu0 0
    %1869 = vmatpush1.bf16.msra.mxu0 0
    %1870 = vmatprep.subr.bf16.mxu0 0
    %1871 = vmatpush1.bf16.msra.mxu0 0
    %1872 = vmatprep.subr.bf16.mxu0 0
    %1873 = vmatpush1.bf16.msra.mxu0 0
    %1874 = vmatprep.mubr.bf16.mxu0 0
    %1875 = vmatmul.mubr.bf16.gmra.mrb[0].mxu0 %v1841
    %v1876 = vpop.f32.mrb[0].mxu0
    %v1877 = vadd.f32 %v730, %v1876
    %v1878 = vpop.f32.mrb[0].mxu0
    %v1879 = vadd.f32 %v734, %v1878
    %v1880 = vpop.f32.mrb[0].mxu0
    %v1881 = vpop.f32.mrb[0].mxu0
    %1882 = vdwg.mxu0
    %v1883 = vsel %vm778, %v1877, -inf
    %v1884 = vsel %vm778, %v1879, -inf
    %v1885 = vmax.f32 %v1883, %v1884
    %1886 = vmax.xlane.f32.xlu0 %v1885
    %v1887 = vpop.xlane.xlu0 %1886
    %v1888 = vsub.f32 %v1877, %v1887
    %v1889 = vsub.f32 %v1879, %v1887
    %v1890 = vmul.f32 %v1888, 1.442695
    %v1891 = vpow.pop %v1890
    %v1892 = vmul.f32 %v1889, 1.442695
    %v1893 = vpow.pop %v1892
    %v1894 = vsel %vm778, %v1891, 0.0
    %v1895 = vsel %vm778, %v1893, 0.0
    %v1896 = vadd.f32 %v1894, %v1895
    %1897 = vadd.xlane.f32.xlu0 %v1896
    %v1898 = vpop.xlane.xlu0 %1897
    %v1899 = vlog2.pop %v1898
    %v1900 = vmul.f32 %v1899, 0.6931472
    %v1901 = vadd.f32 %v1900, %v1887
    %v1902 = vsub.f32 %v1877, %v1901
    %v1903 = vsub.f32 %v1879, %v1901
    %v1906 = vcombine.low %v1902, %v1903
    %v1908 = vunpack.c.l.s4 1966171168
    %v1909 = vunpack.c.0.s8 %v1908
    %v1910 = vlaneseq
    %v1911 = vshrl.u32 %v1910, 7
    %v1912 = vsub.s32 %v1909, %v1911
    %v1913 = vrot.slane %v1906, %v1912
    %v1915 = vunpack.c.l.s4 1966171168
    %v1916 = vunpack.c.0.s8 %v1915
    %v1917 = vlaneseq
    %v1918 = vshrl.u32 %v1917, 7
    %v1919 = vsub.s32 %v1916, %v1918
    %v1920 = vrot.slane %v1913, %v1919
    %s1922 = scalar_lea.vmem [#allocation10], 4
    %1923 = vst.msk [vmem:[%s1922] ss:$8 sm:$0x3] %vm821, %v1920
    %1924 = vst.msk [vmem:[%s1922] ss:$8 sm:$0x0] %vm821, %v1920
    %v1925 = vld [vmem:[#allocation2] sm:$0x4]
    %v1926 = vmax.bf16 %v1925, 0
    %v1928 = vunpack.c.l.b16 %v1926
    %v1929 = vpack.c.b16 %v1928, %v1928
    %v1931 = vshrl.u32 %v1929, 16
    %v1933 = vrot.slane %v1931, 2
    %1935 = vmatprep.subr.bf16.mxu0 %v254
    %1936 = vmatpush1.bf16.msra.mxu0 %v253
    %1937 = vmatprep.subr.bf16.mxu0 %v257
    %1938 = vmatpush1.bf16.msra.mxu0 %v256
    %1939 = vmatprep.subr.bf16.mxu0 %v260
    %1940 = vmatpush1.bf16.msra.mxu0 %v259
    %1941 = vmatprep.subr.bf16.mxu0 %v263
    %1942 = vmatpush1.bf16.msra.mxu0 %v262
    %1943 = vmatprep.subr.bf16.mxu0 %v266
    %1944 = vmatpush1.bf16.msra.mxu0 %v265
    %1945 = vmatprep.subr.bf16.mxu0 %v269
    %1946 = vmatpush1.bf16.msra.mxu0 %v268
    %1947 = vmatprep.subr.bf16.mxu0 %v272
    %1948 = vmatpush1.bf16.msra.mxu0 %v271
    %1949 = vmatprep.subr.bf16.mxu0 %v275
    %1950 = vmatpush1.bf16.msra.mxu0 %v274
    %1951 = vmatprep.subr.bf16.mxu0 0
    %1952 = vmatpush1.bf16.msra.mxu0 0
    %1953 = vmatprep.subr.bf16.mxu0 0
    %1954 = vmatpush1.bf16.msra.mxu0 0
    %1955 = vmatprep.subr.bf16.mxu0 0
    %1956 = vmatpush1.bf16.msra.mxu0 0
    %1957 = vmatprep.subr.bf16.mxu0 0
    %1958 = vmatpush1.bf16.msra.mxu0 0
    %1959 = vmatprep.subr.bf16.mxu0 0
    %1960 = vmatpush1.bf16.msra.mxu0 0
    %1961 = vmatprep.subr.bf16.mxu0 0
    %1962 = vmatpush1.bf16.msra.mxu0 0
    %1963 = vmatprep.subr.bf16.mxu0 0
    %1964 = vmatpush1.bf16.msra.mxu0 0
    %1965 = vmatprep.subr.bf16.mxu0 0
    %1966 = vmatpush1.bf16.msra.mxu0 0
    %1967 = vmatprep.mubr.bf16.mxu0 0
    %1968 = vmatmul.mubr.bf16.gmra.mrb[0].mxu0 %v1933
    %v1969 = vpop.f32.mrb[0].mxu0
    %v1970 = vadd.f32 %v305, %v1969
    %v1971 = vpop.f32.mrb[0].mxu0
    %v1972 = vadd.f32 %v309, %v1971
    %v1973 = vpop.f32.mrb[0].mxu0
    %v1974 = vpop.f32.mrb[0].mxu0
    %1975 = vdwg.mxu0
    %1976 = vmatprep.subr.bf16.mxu0 0
    %1977 = vmatpush1.bf16.msra.mxu0 %v255
    %1978 = vmatprep.subr.bf16.mxu0 0
    %1979 = vmatpush1.bf16.msra.mxu0 %v258
    %1980 = vmatprep.subr.bf16.mxu0 0
    %1981 = vmatpush1.bf16.msra.mxu0 %v261
    %1982 = vmatprep.subr.bf16.mxu0 0
    %1983 = vmatpush1.bf16.msra.mxu0 %v264
    %1984 = vmatprep.subr.bf16.mxu0 0
    %1985 = vmatpush1.bf16.msra.mxu0 %v267
    %1986 = vmatprep.subr.bf16.mxu0 0
    %1987 = vmatpush1.bf16.msra.mxu0 %v270
    %1988 = vmatprep.subr.bf16.mxu0 0
    %1989 = vmatpush1.bf16.msra.mxu0 %v273
    %1990 = vmatprep.subr.bf16.mxu0 0
    %1991 = vmatpush1.bf16.msra.mxu0 %v276
    %1992 = vmatprep.subr.bf16.mxu0 0
    %1993 = vmatpush1.bf16.msra.mxu0 0
    %1994 = vmatprep.subr.bf16.mxu0 0
    %1995 = vmatpush1.bf16.msra.mxu0 0
    %1996 = vmatprep.subr.bf16.mxu0 0
    %1997 = vmatpush1.bf16.msra.mxu0 0
    %1998 = vmatprep.subr.bf16.mxu0 0
    %1999 = vmatpush1.bf16.msra.mxu0 0
    %2000 = vmatprep.subr.bf16.mxu0 0
    %2001 = vmatpush1.bf16.msra.mxu0 0
    %2002 = vmatprep.subr.bf16.mxu0 0
    %2003 = vmatpush1.bf16.msra.mxu0 0
    %2004 = vmatprep.subr.bf16.mxu0 0
    %2005 = vmatpush1.bf16.msra.mxu0 0
    %2006 = vmatprep.subr.bf16.mxu0 0
    %2007 = vmatpush1.bf16.msra.mxu0 0
    %2008 = vmatprep.mubr.bf16.mxu0 0
    %2009 = vmatmul.mubr.bf16.gmra.mrb[0].mxu0 %v1933
    %v2010 = vpop.f32.mrb[0].mxu0
    %v2011 = vadd.f32 %v313, %v2010
    %v2012 = vpop.f32.mrb[0].mxu0
    %v2013 = vpop.f32.mrb[0].mxu0
    %v2014 = vpop.f32.mrb[0].mxu0
    %2015 = vdwg.mxu0
    %2016 = vmatprep.subr.bf16.mxu0 %v480
    %2017 = vmatpush1.bf16.msra.mxu0 %v479
    %2018 = vmatprep.subr.bf16.mxu0 %v483
    %2019 = vmatpush1.bf16.msra.mxu0 %v482
    %2020 = vmatprep.subr.bf16.mxu0 %v486
    %2021 = vmatpush1.bf16.msra.mxu0 %v485
    %2022 = vmatprep.subr.bf16.mxu0 %v489
    %2023 = vmatpush1.bf16.msra.mxu0 %v488
    %2024 = vmatprep.subr.bf16.mxu0 %v492
    %2025 = vmatpush1.bf16.msra.mxu0 %v491
    %2026 = vmatprep.subr.bf16.mxu0 %v495
    %2027 = vmatpush1.bf16.msra.mxu0 %v494
    %2028 = vmatprep.subr.bf16.mxu0 %v498
    %2029 = vmatpush1.bf16.msra.mxu0 %v497
    %2030 = vmatprep.subr.bf16.mxu0 %v501
    %2031 = vmatpush1.bf16.msra.mxu0 %v500
    %2032 = vmatprep.subr.bf16.mxu0 0
    %2033 = vmatpush1.bf16.msra.mxu0 0
    %2034 = vmatprep.subr.bf16.mxu0 0
    %2035 = vmatpush1.bf16.msra.mxu0 0
    %2036 = vmatprep.subr.bf16.mxu0 0
    %2037 = vmatpush1.bf16.msra.mxu0 0
    %2038 = vmatprep.subr.bf16.mxu0 0
    %2039 = vmatpush1.bf16.msra.mxu0 0
    %2040 = vmatprep.subr.bf16.mxu0 0
    %2041 = vmatpush1.bf16.msra.mxu0 0
    %2042 = vmatprep.subr.bf16.mxu0 0
    %2043 = vmatpush1.bf16.msra.mxu0 0
    %2044 = vmatprep.subr.bf16.mxu0 0
    %2045 = vmatpush1.bf16.msra.mxu0 0
    %2046 = vmatprep.subr.bf16.mxu0 0
    %2047 = vmatpush1.bf16.msra.mxu0 0
    %2048 = vmatprep.mubr.bf16.mxu0 0
    %2049 = vmatmul.mubr.bf16.gmra.mrb[0].mxu0 %v1841
    %v2050 = vpop.f32.mrb[0].mxu0
    %v2051 = vadd.f32 %v531, %v2050
    %v2052 = vpop.f32.mrb[0].mxu0
    %v2053 = vadd.f32 %v535, %v2052
    %v2054 = vpop.f32.mrb[0].mxu0
    %v2055 = vpop.f32.mrb[0].mxu0
    %2056 = vdwg.mxu0
    %2057 = vmatprep.subr.bf16.mxu0 0
    %2058 = vmatpush1.bf16.msra.mxu0 %v481
    %2059 = vmatprep.subr.bf16.mxu0 0
    %2060 = vmatpush1.bf16.msra.mxu0 %v484
    %2061 = vmatprep.subr.bf16.mxu0 0
    %2062 = vmatpush1.bf16.msra.mxu0 %v487
    %2063 = vmatprep.subr.bf16.mxu0 0
    %2064 = vmatpush1.bf16.msra.mxu0 %v490
    %2065 = vmatprep.subr.bf16.mxu0 0
    %2066 = vmatpush1.bf16.msra.mxu0 %v493
    %2067 = vmatprep.subr.bf16.mxu0 0
    %2068 = vmatpush1.bf16.msra.mxu0 %v496
    %2069 = vmatprep.subr.bf16.mxu0 0
    %2070 = vmatpush1.bf16.msra.mxu0 %v499
    %2071 = vmatprep.subr.bf16.mxu0 0
    %2072 = vmatpush1.bf16.msra.mxu0 %v502
    %2073 = vmatprep.subr.bf16.mxu0 0
    %2074 = vmatpush1.bf16.msra.mxu0 0
    %2075 = vmatprep.subr.bf16.mxu0 0
    %2076 = vmatpush1.bf16.msra.mxu0 0
    %2077 = vmatprep.subr.bf16.mxu0 0
    %2078 = vmatpush1.bf16.msra.mxu0 0
    %2079 = vmatprep.subr.bf16.mxu0 0
    %2080 = vmatpush1.bf16.msra.mxu0 0
    %2081 = vmatprep.subr.bf16.mxu0 0
    %2082 = vmatpush1.bf16.msra.mxu0 0
    %2083 = vmatprep.subr.bf16.mxu0 0
    %2084 = vmatpush1.bf16.msra.mxu0 0
    %2085 = vmatprep.subr.bf16.mxu0 0
    %2086 = vmatpush1.bf16.msra.mxu0 0
    %2087 = vmatprep.subr.bf16.mxu0 0
    %2088 = vmatpush1.bf16.msra.mxu0 0
    %2089 = vmatprep.mubr.bf16.mxu0 0
    %2090 = vmatmul.mubr.bf16.gmra.mrb[0].mxu0 %v1841
    %v2091 = vpop.f32.mrb[0].mxu0
    %v2092 = vadd.f32 %v539, %v2091
    %v2093 = vpop.f32.mrb[0].mxu0
    %v2094 = vpop.f32.mrb[0].mxu0
    %v2095 = vpop.f32.mrb[0].mxu0
    %2096 = vdwg.mxu0
    %v2097 = vadd.f32 %v1970, %v2051
    %v2098 = vxor.u32 %v2097, 2147483648
    %v2099 = vmul.f32 %v2098, 1.442695
    %v2100 = vpow.pop %v2099
    %v2101 = vadd.f32 %v2100, 1.0
    %v2102 = vrcp.pop %v2101
    %v2103 = vmul.f32 1.0, %v2102
    %v2104 = vadd.f32 %v1972, %v2053
    %v2105 = vxor.u32 %v2104, 2147483648
    %v2106 = vmul.f32 %v2105, 1.442695
    %v2107 = vpow.pop %v2106
    %v2108 = vadd.f32 %v2107, 1.0
    %v2109 = vrcp.pop %v2108
    %v2110 = vmul.f32 1.0, %v2109
    %v2111 = vmul.f32 %v2103, %v2092
    %v2112 = vadd.f32 %v2011, %v2111
    %v2113 = vtanh.pop %v2112
    %v2114 = vsub.f32 1.0, %v2110
    %v2115 = vmul.f32 %v2114, %v2113
    %v2116 = vmul.f32 %v2110, %v1840
    %v2117 = vadd.f32 %v2115, %v2116
    %v2118 = vpack.c.bf16 %v2117, %v2117
    %2119 = vmatprep.subr.bf16.mxu0 %v695
    %2120 = vmatpush1.bf16.msra.mxu0 %v694
    %2121 = vmatprep.subr.bf16.mxu0 %v697
    %2122 = vmatpush1.bf16.msra.mxu0 %v696
    %2123 = vmatprep.subr.bf16.mxu0 %v699
    %2124 = vmatpush1.bf16.msra.mxu0 %v698
    %2125 = vmatprep.subr.bf16.mxu0 %v701
    %2126 = vmatpush1.bf16.msra.mxu0 %v700
    %2127 = vmatprep.subr.bf16.mxu0 %v703
    %2128 = vmatpush1.bf16.msra.mxu0 %v702
    %2129 = vmatprep.subr.bf16.mxu0 %v705
    %2130 = vmatpush1.bf16.msra.mxu0 %v704
    %2131 = vmatprep.subr.bf16.mxu0 %v707
    %2132 = vmatpush1.bf16.msra.mxu0 %v706
    %2133 = vmatprep.subr.bf16.mxu0 %v709
    %2134 = vmatpush1.bf16.msra.mxu0 %v708
    %2135 = vmatprep.subr.bf16.mxu0 0
    %2136 = vmatpush1.bf16.msra.mxu0 0
    %2137 = vmatprep.subr.bf16.mxu0 0
    %2138 = vmatpush1.bf16.msra.mxu0 0
    %2139 = vmatprep.subr.bf16.mxu0 0
    %2140 = vmatpush1.bf16.msra.mxu0 0
    %2141 = vmatprep.subr.bf16.mxu0 0
    %2142 = vmatpush1.bf16.msra.mxu0 0
    %2143 = vmatprep.subr.bf16.mxu0 0
    %2144 = vmatpush1.bf16.msra.mxu0 0
    %2145 = vmatprep.subr.bf16.mxu0 0
    %2146 = vmatpush1.bf16.msra.mxu0 0
    %2147 = vmatprep.subr.bf16.mxu0 0
    %2148 = vmatpush1.bf16.msra.mxu0 0
    %2149 = vmatprep.subr.bf16.mxu0 0
    %2150 = vmatpush1.bf16.msra.mxu0 0
    %2151 = vmatprep.mubr.bf16.mxu0 0
    %2152 = vmatmul.mubr.bf16.gmra.mrb[0].mxu0 %v2118
    %v2153 = vpop.f32.mrb[0].mxu0
    %v2154 = vadd.f32 %v730, %v2153
    %v2155 = vpop.f32.mrb[0].mxu0
    %v2156 = vadd.f32 %v734, %v2155
    %v2157 = vpop.f32.mrb[0].mxu0
    %v2158 = vpop.f32.mrb[0].mxu0
    %2159 = vdwg.mxu0
    %v2160 = vsel %vm778, %v2154, -inf
    %v2161 = vsel %vm778, %v2156, -inf
    %v2162 = vmax.f32 %v2160, %v2161
    %2163 = vmax.xlane.f32.xlu0 %v2162
    %v2164 = vpop.xlane.xlu0 %2163
    %v2165 = vsub.f32 %v2154, %v2164
    %v2166 = vsub.f32 %v2156, %v2164
    %v2167 = vmul.f32 %v2165, 1.442695
    %v2168 = vpow.pop %v2167
    %v2169 = vmul.f32 %v2166, 1.442695
    %v2170 = vpow.pop %v2169
    %v2171 = vsel %vm778, %v2168, 0.0
    %v2172 = vsel %vm778, %v2170, 0.0
    %v2173 = vadd.f32 %v2171, %v2172
    %2174 = vadd.xlane.f32.xlu0 %v2173
    %v2175 = vpop.xlane.xlu0 %2174
    %v2176 = vlog2.pop %v2175
    %v2177 = vmul.f32 %v2176, 0.6931472
    %v2178 = vadd.f32 %v2177, %v2164
    %v2179 = vsub.f32 %v2154, %v2178
    %v2180 = vsub.f32 %v2156, %v2178
    %v2183 = vcombine.low %v2179, %v2180
    %v2185 = vunpack.c.l.s4 1966171168
    %v2186 = vunpack.c.0.s8 %v2185
    %v2187 = vlaneseq
    %v2188 = vshrl.u32 %v2187, 7
    %v2189 = vsub.s32 %v2186, %v2188
    %v2190 = vrot.slane %v2183, %v2189
    %v2192 = vunpack.c.l.s4 1966171168
    %v2193 = vunpack.c.0.s8 %v2192
    %v2194 = vlaneseq
    %v2195 = vshrl.u32 %v2194, 7
    %v2196 = vsub.s32 %v2193, %v2195
    %v2197 = vrot.slane %v2190, %v2196
    %s2199 = scalar_lea.vmem [#allocation10], 5
    %2200 = vst.msk [vmem:[%s2199] ss:$8 sm:$0x3] %vm821, %v2197
    %2201 = vst.msk [vmem:[%s2199] ss:$8 sm:$0x0] %vm821, %v2197
    %v2202 = vld [vmem:[#allocation2] sm:$0x8]
    %v2203 = vmax.bf16 %v2202, 0
    %v2205 = vunpack.c.l.b16 %v2203
    %v2206 = vpack.c.b16 %v2205, %v2205
    %v2207 = vrot.slane %v2206, 3
    %2209 = vmatprep.subr.bf16.mxu0 %v254
    %2210 = vmatpush1.bf16.msra.mxu0 %v253
    %2211 = vmatprep.subr.bf16.mxu0 %v257
    %2212 = vmatpush1.bf16.msra.mxu0 %v256
    %2213 = vmatprep.subr.bf16.mxu0 %v260
    %2214 = vmatpush1.bf16.msra.mxu0 %v259
    %2215 = vmatprep.subr.bf16.mxu0 %v263
    %2216 = vmatpush1.bf16.msra.mxu0 %v262
    %2217 = vmatprep.subr.bf16.mxu0 %v266
    %2218 = vmatpush1.bf16.msra.mxu0 %v265
    %2219 = vmatprep.subr.bf16.mxu0 %v269
    %2220 = vmatpush1.bf16.msra.mxu0 %v268
    %2221 = vmatprep.subr.bf16.mxu0 %v272
    %2222 = vmatpush1.bf16.msra.mxu0 %v271
    %2223 = vmatprep.subr.bf16.mxu0 %v275
    %2224 = vmatpush1.bf16.msra.mxu0 %v274
    %2225 = vmatprep.subr.bf16.mxu0 0
    %2226 = vmatpush1.bf16.msra.mxu0 0
    %2227 = vmatprep.subr.bf16.mxu0 0
    %2228 = vmatpush1.bf16.msra.mxu0 0
    %2229 = vmatprep.subr.bf16.mxu0 0
    %2230 = vmatpush1.bf16.msra.mxu0 0
    %2231 = vmatprep.subr.bf16.mxu0 0
    %2232 = vmatpush1.bf16.msra.mxu0 0
    %2233 = vmatprep.subr.bf16.mxu0 0
    %2234 = vmatpush1.bf16.msra.mxu0 0
    %2235 = vmatprep.subr.bf16.mxu0 0
    %2236 = vmatpush1.bf16.msra.mxu0 0
    %2237 = vmatprep.subr.bf16.mxu0 0
    %2238 = vmatpush1.bf16.msra.mxu0 0
    %2239 = vmatprep.subr.bf16.mxu0 0
    %2240 = vmatpush1.bf16.msra.mxu0 0
    %2241 = vmatprep.mubr.bf16.mxu0 0
    %2242 = vmatmul.mubr.bf16.gmra.mrb[0].mxu0 %v2207
    %v2243 = vpop.f32.mrb[0].mxu0
    %v2244 = vadd.f32 %v305, %v2243
    %v2245 = vpop.f32.mrb[0].mxu0
    %v2246 = vadd.f32 %v309, %v2245
    %v2247 = vpop.f32.mrb[0].mxu0
    %v2248 = vpop.f32.mrb[0].mxu0
    %2249 = vdwg.mxu0
    %2250 = vmatprep.subr.bf16.mxu0 0
    %2251 = vmatpush1.bf16.msra.mxu0 %v255
    %2252 = vmatprep.subr.bf16.mxu0 0
    %2253 = vmatpush1.bf16.msra.mxu0 %v258
    %2254 = vmatprep.subr.bf16.mxu0 0
    %2255 = vmatpush1.bf16.msra.mxu0 %v261
    %2256 = vmatprep.subr.bf16.mxu0 0
    %2257 = vmatpush1.bf16.msra.mxu0 %v264
    %2258 = vmatprep.subr.bf16.mxu0 0
    %2259 = vmatpush1.bf16.msra.mxu0 %v267
    %2260 = vmatprep.subr.bf16.mxu0 0
    %2261 = vmatpush1.bf16.msra.mxu0 %v270
    %2262 = vmatprep.subr.bf16.mxu0 0
    %2263 = vmatpush1.bf16.msra.mxu0 %v273
    %2264 = vmatprep.subr.bf16.mxu0 0
    %2265 = vmatpush1.bf16.msra.mxu0 %v276
    %2266 = vmatprep.subr.bf16.mxu0 0
    %2267 = vmatpush1.bf16.msra.mxu0 0
    %2268 = vmatprep.subr.bf16.mxu0 0
    %2269 = vmatpush1.bf16.msra.mxu0 0
    %2270 = vmatprep.subr.bf16.mxu0 0
    %2271 = vmatpush1.bf16.msra.mxu0 0
    %2272 = vmatprep.subr.bf16.mxu0 0
    %2273 = vmatpush1.bf16.msra.mxu0 0
    %2274 = vmatprep.subr.bf16.mxu0 0
    %2275 = vmatpush1.bf16.msra.mxu0 0
    %2276 = vmatprep.subr.bf16.mxu0 0
    %2277 = vmatpush1.bf16.msra.mxu0 0
    %2278 = vmatprep.subr.bf16.mxu0 0
    %2279 = vmatpush1.bf16.msra.mxu0 0
    %2280 = vmatprep.subr.bf16.mxu0 0
    %2281 = vmatpush1.bf16.msra.mxu0 0
    %2282 = vmatprep.mubr.bf16.mxu0 0
    %2283 = vmatmul.mubr.bf16.gmra.mrb[0].mxu0 %v2207
    %v2284 = vpop.f32.mrb[0].mxu0
    %v2285 = vadd.f32 %v313, %v2284
    %v2286 = vpop.f32.mrb[0].mxu0
    %v2287 = vpop.f32.mrb[0].mxu0
    %v2288 = vpop.f32.mrb[0].mxu0
    %2289 = vdwg.mxu0
    %2290 = vmatprep.subr.bf16.mxu0 %v480
    %2291 = vmatpush1.bf16.msra.mxu0 %v479
    %2292 = vmatprep.subr.bf16.mxu0 %v483
    %2293 = vmatpush1.bf16.msra.mxu0 %v482
    %2294 = vmatprep.subr.bf16.mxu0 %v486
    %2295 = vmatpush1.bf16.msra.mxu0 %v485
    %2296 = vmatprep.subr.bf16.mxu0 %v489
    %2297 = vmatpush1.bf16.msra.mxu0 %v488
    %2298 = vmatprep.subr.bf16.mxu0 %v492
    %2299 = vmatpush1.bf16.msra.mxu0 %v491
    %2300 = vmatprep.subr.bf16.mxu0 %v495
    %2301 = vmatpush1.bf16.msra.mxu0 %v494
    %2302 = vmatprep.subr.bf16.mxu0 %v498
    %2303 = vmatpush1.bf16.msra.mxu0 %v497
    %2304 = vmatprep.subr.bf16.mxu0 %v501
    %2305 = vmatpush1.bf16.msra.mxu0 %v500
    %2306 = vmatprep.subr.bf16.mxu0 0
    %2307 = vmatpush1.bf16.msra.mxu0 0
    %2308 = vmatprep.subr.bf16.mxu0 0
    %2309 = vmatpush1.bf16.msra.mxu0 0
    %2310 = vmatprep.subr.bf16.mxu0 0
    %2311 = vmatpush1.bf16.msra.mxu0 0
    %2312 = vmatprep.subr.bf16.mxu0 0
    %2313 = vmatpush1.bf16.msra.mxu0 0
    %2314 = vmatprep.subr.bf16.mxu0 0
    %2315 = vmatpush1.bf16.msra.mxu0 0
    %2316 = vmatprep.subr.bf16.mxu0 0
    %2317 = vmatpush1.bf16.msra.mxu0 0
    %2318 = vmatprep.subr.bf16.mxu0 0
    %2319 = vmatpush1.bf16.msra.mxu0 0
    %2320 = vmatprep.subr.bf16.mxu0 0
    %2321 = vmatpush1.bf16.msra.mxu0 0
    %2322 = vmatprep.mubr.bf16.mxu0 0
    %2323 = vmatmul.mubr.bf16.gmra.mrb[0].mxu0 %v2118
    %v2324 = vpop.f32.mrb[0].mxu0
    %v2325 = vadd.f32 %v531, %v2324
    %v2326 = vpop.f32.mrb[0].mxu0
    %v2327 = vadd.f32 %v535, %v2326
    %v2328 = vpop.f32.mrb[0].mxu0
    %v2329 = vpop.f32.mrb[0].mxu0
    %2330 = vdwg.mxu0
    %2331 = vmatprep.subr.bf16.mxu0 0
    %2332 = vmatpush1.bf16.msra.mxu0 %v481
    %2333 = vmatprep.subr.bf16.mxu0 0
    %2334 = vmatpush1.bf16.msra.mxu0 %v484
    %2335 = vmatprep.subr.bf16.mxu0 0
    %2336 = vmatpush1.bf16.msra.mxu0 %v487
    %2337 = vmatprep.subr.bf16.mxu0 0
    %2338 = vmatpush1.bf16.msra.mxu0 %v490
    %2339 = vmatprep.subr.bf16.mxu0 0
    %2340 = vmatpush1.bf16.msra.mxu0 %v493
    %2341 = vmatprep.subr.bf16.mxu0 0
    %2342 = vmatpush1.bf16.msra.mxu0 %v496
    %2343 = vmatprep.subr.bf16.mxu0 0
    %2344 = vmatpush1.bf16.msra.mxu0 %v499
    %2345 = vmatprep.subr.bf16.mxu0 0
    %2346 = vmatpush1.bf16.msra.mxu0 %v502
    %2347 = vmatprep.subr.bf16.mxu0 0
    %2348 = vmatpush1.bf16.msra.mxu0 0
    %2349 = vmatprep.subr.bf16.mxu0 0
    %2350 = vmatpush1.bf16.msra.mxu0 0
    %2351 = vmatprep.subr.bf16.mxu0 0
    %2352 = vmatpush1.bf16.msra.mxu0 0
    %2353 = vmatprep.subr.bf16.mxu0 0
    %2354 = vmatpush1.bf16.msra.mxu0 0
    %2355 = vmatprep.subr.bf16.mxu0 0
    %2356 = vmatpush1.bf16.msra.mxu0 0
    %2357 = vmatprep.subr.bf16.mxu0 0
    %2358 = vmatpush1.bf16.msra.mxu0 0
    %2359 = vmatprep.subr.bf16.mxu0 0
    %2360 = vmatpush1.bf16.msra.mxu0 0
    %2361 = vmatprep.subr.bf16.mxu0 0
    %2362 = vmatpush1.bf16.msra.mxu0 0
    %2363 = vmatprep.mubr.bf16.mxu0 0
    %2364 = vmatmul.mubr.bf16.gmra.mrb[0].mxu0 %v2118
    %v2365 = vpop.f32.mrb[0].mxu0
    %v2366 = vadd.f32 %v539, %v2365
    %v2367 = vpop.f32.mrb[0].mxu0
    %v2368 = vpop.f32.mrb[0].mxu0
    %v2369 = vpop.f32.mrb[0].mxu0
    %2370 = vdwg.mxu0
    %v2371 = vadd.f32 %v2244, %v2325
    %v2372 = vxor.u32 %v2371, 2147483648
    %v2373 = vmul.f32 %v2372, 1.442695
    %v2374 = vpow.pop %v2373
    %v2375 = vadd.f32 %v2374, 1.0
    %v2376 = vrcp.pop %v2375
    %v2377 = vmul.f32 1.0, %v2376
    %v2378 = vadd.f32 %v2246, %v2327
    %v2379 = vxor.u32 %v2378, 2147483648
    %v2380 = vmul.f32 %v2379, 1.442695
    %v2381 = vpow.pop %v2380
    %v2382 = vadd.f32 %v2381, 1.0
    %v2383 = vrcp.pop %v2382
    %v2384 = vmul.f32 1.0, %v2383
    %v2385 = vmul.f32 %v2377, %v2366
    %v2386 = vadd.f32 %v2285, %v2385
    %v2387 = vtanh.pop %v2386
    %v2388 = vsub.f32 1.0, %v2384
    %v2389 = vmul.f32 %v2388, %v2387
    %v2390 = vmul.f32 %v2384, %v2117
    %v2391 = vadd.f32 %v2389, %v2390
    %v2392 = vpack.c.bf16 %v2391, %v2391
    %2393 = vmatprep.subr.bf16.mxu0 %v695
    %2394 = vmatpush1.bf16.msra.mxu0 %v694
    %2395 = vmatprep.subr.bf16.mxu0 %v697
    %2396 = vmatpush1.bf16.msra.mxu0 %v696
    %2397 = vmatprep.subr.bf16.mxu0 %v699
    %2398 = vmatpush1.bf16.msra.mxu0 %v698
    %2399 = vmatprep.subr.bf16.mxu0 %v701
    %2400 = vmatpush1.bf16.msra.mxu0 %v700
    %2401 = vmatprep.subr.bf16.mxu0 %v703
    %2402 = vmatpush1.bf16.msra.mxu0 %v702
    %2403 = vmatprep.subr.bf16.mxu0 %v705
    %2404 = vmatpush1.bf16.msra.mxu0 %v704
    %2405 = vmatprep.subr.bf16.mxu0 %v707
    %2406 = vmatpush1.bf16.msra.mxu0 %v706
    %2407 = vmatprep.subr.bf16.mxu0 %v709
    %2408 = vmatpush1.bf16.msra.mxu0 %v708
    %2409 = vmatprep.subr.bf16.mxu0 0
    %2410 = vmatpush1.bf16.msra.mxu0 0
    %2411 = vmatprep.subr.bf16.mxu0 0
    %2412 = vmatpush1.bf16.msra.mxu0 0
    %2413 = vmatprep.subr.bf16.mxu0 0
    %2414 = vmatpush1.bf16.msra.mxu0 0
    %2415 = vmatprep.subr.bf16.mxu0 0
    %2416 = vmatpush1.bf16.msra.mxu0 0
    %2417 = vmatprep.subr.bf16.mxu0 0
    %2418 = vmatpush1.bf16.msra.mxu0 0
    %2419 = vmatprep.subr.bf16.mxu0 0
    %2420 = vmatpush1.bf16.msra.mxu0 0
    %2421 = vmatprep.subr.bf16.mxu0 0
    %2422 = vmatpush1.bf16.msra.mxu0 0
    %2423 = vmatprep.subr.bf16.mxu0 0
    %2424 = vmatpush1.bf16.msra.mxu0 0
    %2425 = vmatprep.mubr.bf16.mxu0 0
    %2426 = vmatmul.mubr.bf16.gmra.mrb[0].mxu0 %v2392
    %v2427 = vpop.f32.mrb[0].mxu0
    %v2428 = vadd.f32 %v730, %v2427
    %v2429 = vpop.f32.mrb[0].mxu0
    %v2430 = vadd.f32 %v734, %v2429
    %v2431 = vpop.f32.mrb[0].mxu0
    %v2432 = vpop.f32.mrb[0].mxu0
    %2433 = vdwg.mxu0
    %v2434 = vsel %vm778, %v2428, -inf
    %v2435 = vsel %vm778, %v2430, -inf
    %v2436 = vmax.f32 %v2434, %v2435
    %2437 = vmax.xlane.f32.xlu0 %v2436
    %v2438 = vpop.xlane.xlu0 %2437
    %v2439 = vsub.f32 %v2428, %v2438
    %v2440 = vsub.f32 %v2430, %v2438
    %v2441 = vmul.f32 %v2439, 1.442695
    %v2442 = vpow.pop %v2441
    %v2443 = vmul.f32 %v2440, 1.442695
    %v2444 = vpow.pop %v2443
    %v2445 = vsel %vm778, %v2442, 0.0
    %v2446 = vsel %vm778, %v2444, 0.0
    %v2447 = vadd.f32 %v2445, %v2446
    %2448 = vadd.xlane.f32.xlu0 %v2447
    %v2449 = vpop.xlane.xlu0 %2448
    %v2450 = vlog2.pop %v2449
    %v2451 = vmul.f32 %v2450, 0.6931472
    %v2452 = vadd.f32 %v2451, %v2438
    %v2453 = vsub.f32 %v2428, %v2452
    %v2454 = vsub.f32 %v2430, %v2452
    %v2457 = vcombine.low %v2453, %v2454
    %v2459 = vunpack.c.l.s4 1966171168
    %v2460 = vunpack.c.0.s8 %v2459
    %v2461 = vlaneseq
    %v2462 = vshrl.u32 %v2461, 7
    %v2463 = vsub.s32 %v2460, %v2462
    %v2464 = vrot.slane %v2457, %v2463
    %v2466 = vunpack.c.l.s4 1966171168
    %v2467 = vunpack.c.0.s8 %v2466
    %v2468 = vlaneseq
    %v2469 = vshrl.u32 %v2468, 7
    %v2470 = vsub.s32 %v2467, %v2469
    %v2471 = vrot.slane %v2464, %v2470
    %s2473 = scalar_lea.vmem [#allocation10], 6
    %2474 = vst.msk [vmem:[%s2473] ss:$8 sm:$0x3] %vm821, %v2471
    %2475 = vst.msk [vmem:[%s2473] ss:$8 sm:$0x0] %vm821, %v2471
    %v2476 = vld [vmem:[#allocation2] sm:$0x8]
    %v2477 = vmax.bf16 %v2476, 0
    %v2479 = vunpack.c.l.b16 %v2477
    %v2480 = vpack.c.b16 %v2479, %v2479
    %v2482 = vshrl.u32 %v2480, 16
    %v2484 = vrot.slane %v2482, 3
    %2486 = vmatprep.subr.bf16.mxu0 %v254
    %2487 = vmatpush1.bf16.msra.mxu0 %v253
    %2488 = vmatprep.subr.bf16.mxu0 %v257
    %2489 = vmatpush1.bf16.msra.mxu0 %v256
    %2490 = vmatprep.subr.bf16.mxu0 %v260
    %2491 = vmatpush1.bf16.msra.mxu0 %v259
    %2492 = vmatprep.subr.bf16.mxu0 %v263
    %2493 = vmatpush1.bf16.msra.mxu0 %v262
    %2494 = vmatprep.subr.bf16.mxu0 %v266
    %2495 = vmatpush1.bf16.msra.mxu0 %v265
    %2496 = vmatprep.subr.bf16.mxu0 %v269
    %2497 = vmatpush1.bf16.msra.mxu0 %v268
    %2498 = vmatprep.subr.bf16.mxu0 %v272
    %2499 = vmatpush1.bf16.msra.mxu0 %v271
    %2500 = vmatprep.subr.bf16.mxu0 %v275
    %2501 = vmatpush1.bf16.msra.mxu0 %v274
    %2502 = vmatprep.subr.bf16.mxu0 0
    %2503 = vmatpush1.bf16.msra.mxu0 0
    %2504 = vmatprep.subr.bf16.mxu0 0
    %2505 = vmatpush1.bf16.msra.mxu0 0
    %2506 = vmatprep.subr.bf16.mxu0 0
    %2507 = vmatpush1.bf16.msra.mxu0 0
    %2508 = vmatprep.subr.bf16.mxu0 0
    %2509 = vmatpush1.bf16.msra.mxu0 0
    %2510 = vmatprep.subr.bf16.mxu0 0
    %2511 = vmatpush1.bf16.msra.mxu0 0
    %2512 = vmatprep.subr.bf16.mxu0 0
    %2513 = vmatpush1.bf16.msra.mxu0 0
    %2514 = vmatprep.subr.bf16.mxu0 0
    %2515 = vmatpush1.bf16.msra.mxu0 0
    %2516 = vmatprep.subr.bf16.mxu0 0
    %2517 = vmatpush1.bf16.msra.mxu0 0
    %2518 = vmatprep.mubr.bf16.mxu0 0
    %2519 = vmatmul.mubr.bf16.gmra.mrb[0].mxu0 %v2484
    %v2520 = vpop.f32.mrb[0].mxu0
    %v2521 = vadd.f32 %v305, %v2520
    %v2522 = vpop.f32.mrb[0].mxu0
    %v2523 = vadd.f32 %v309, %v2522
    %v2524 = vpop.f32.mrb[0].mxu0
    %v2525 = vpop.f32.mrb[0].mxu0
    %2526 = vdwg.mxu0
    %2527 = vmatprep.subr.bf16.mxu0 0
    %2528 = vmatpush1.bf16.msra.mxu0 %v255
    %2529 = vmatprep.subr.bf16.mxu0 0
    %2530 = vmatpush1.bf16.msra.mxu0 %v258
    %2531 = vmatprep.subr.bf16.mxu0 0
    %2532 = vmatpush1.bf16.msra.mxu0 %v261
    %2533 = vmatprep.subr.bf16.mxu0 0
    %2534 = vmatpush1.bf16.msra.mxu0 %v264
    %2535 = vmatprep.subr.bf16.mxu0 0
    %2536 = vmatpush1.bf16.msra.mxu0 %v267
    %2537 = vmatprep.subr.bf16.mxu0 0
    %2538 = vmatpush1.bf16.msra.mxu0 %v270
    %2539 = vmatprep.subr.bf16.mxu0 0
    %2540 = vmatpush1.bf16.msra.mxu0 %v273
    %2541 = vmatprep.subr.bf16.mxu0 0
    %2542 = vmatpush1.bf16.msra.mxu0 %v276
    %2543 = vmatprep.subr.bf16.mxu0 0
    %2544 = vmatpush1.bf16.msra.mxu0 0
    %2545 = vmatprep.subr.bf16.mxu0 0
    %2546 = vmatpush1.bf16.msra.mxu0 0
    %2547 = vmatprep.subr.bf16.mxu0 0
    %2548 = vmatpush1.bf16.msra.mxu0 0
    %2549 = vmatprep.subr.bf16.mxu0 0
    %2550 = vmatpush1.bf16.msra.mxu0 0
    %2551 = vmatprep.subr.bf16.mxu0 0
    %2552 = vmatpush1.bf16.msra.mxu0 0
    %2553 = vmatprep.subr.bf16.mxu0 0
    %2554 = vmatpush1.bf16.msra.mxu0 0
    %2555 = vmatprep.subr.bf16.mxu0 0
    %2556 = vmatpush1.bf16.msra.mxu0 0
    %2557 = vmatprep.subr.bf16.mxu0 0
    %2558 = vmatpush1.bf16.msra.mxu0 0
    %2559 = vmatprep.mubr.bf16.mxu0 0
    %2560 = vmatmul.mubr.bf16.gmra.mrb[0].mxu0 %v2484
    %v2561 = vpop.f32.mrb[0].mxu0
    %v2562 = vadd.f32 %v313, %v2561
    %v2563 = vpop.f32.mrb[0].mxu0
    %v2564 = vpop.f32.mrb[0].mxu0
    %v2565 = vpop.f32.mrb[0].mxu0
    %2566 = vdwg.mxu0
    %2567 = vmatprep.subr.bf16.mxu0 %v480
    %2568 = vmatpush1.bf16.msra.mxu0 %v479
    %2569 = vmatprep.subr.bf16.mxu0 %v483
    %2570 = vmatpush1.bf16.msra.mxu0 %v482
    %2571 = vmatprep.subr.bf16.mxu0 %v486
    %2572 = vmatpush1.bf16.msra.mxu0 %v485
    %2573 = vmatprep.subr.bf16.mxu0 %v489
    %2574 = vmatpush1.bf16.msra.mxu0 %v488
    %2575 = vmatprep.subr.bf16.mxu0 %v492
    %2576 = vmatpush1.bf16.msra.mxu0 %v491
    %2577 = vmatprep.subr.bf16.mxu0 %v495
    %2578 = vmatpush1.bf16.msra.mxu0 %v494
    %2579 = vmatprep.subr.bf16.mxu0 %v498
    %2580 = vmatpush1.bf16.msra.mxu0 %v497
    %2581 = vmatprep.subr.bf16.mxu0 %v501
    %2582 = vmatpush1.bf16.msra.mxu0 %v500
    %2583 = vmatprep.subr.bf16.mxu0 0
    %2584 = vmatpush1.bf16.msra.mxu0 0
    %2585 = vmatprep.subr.bf16.mxu0 0
    %2586 = vmatpush1.bf16.msra.mxu0 0
    %2587 = vmatprep.subr.bf16.mxu0 0
    %2588 = vmatpush1.bf16.msra.mxu0 0
    %2589 = vmatprep.subr.bf16.mxu0 0
    %2590 = vmatpush1.bf16.msra.mxu0 0
    %2591 = vmatprep.subr.bf16.mxu0 0
    %2592 = vmatpush1.bf16.msra.mxu0 0
    %2593 = vmatprep.subr.bf16.mxu0 0
    %2594 = vmatpush1.bf16.msra.mxu0 0
    %2595 = vmatprep.subr.bf16.mxu0 0
    %2596 = vmatpush1.bf16.msra.mxu0 0
    %2597 = vmatprep.subr.bf16.mxu0 0
    %2598 = vmatpush1.bf16.msra.mxu0 0
    %2599 = vmatprep.mubr.bf16.mxu0 0
    %2600 = vmatmul.mubr.bf16.gmra.mrb[0].mxu0 %v2392
    %v2601 = vpop.f32.mrb[0].mxu0
    %v2602 = vadd.f32 %v531, %v2601
    %v2603 = vpop.f32.mrb[0].mxu0
    %v2604 = vadd.f32 %v535, %v2603
    %v2605 = vpop.f32.mrb[0].mxu0
    %v2606 = vpop.f32.mrb[0].mxu0
    %2607 = vdwg.mxu0
    %2608 = vmatprep.subr.bf16.mxu0 0
    %2609 = vmatpush1.bf16.msra.mxu0 %v481
    %2610 = vmatprep.subr.bf16.mxu0 0
    %2611 = vmatpush1.bf16.msra.mxu0 %v484
    %2612 = vmatprep.subr.bf16.mxu0 0
    %2613 = vmatpush1.bf16.msra.mxu0 %v487
    %2614 = vmatprep.subr.bf16.mxu0 0
    %2615 = vmatpush1.bf16.msra.mxu0 %v490
    %2616 = vmatprep.subr.bf16.mxu0 0
    %2617 = vmatpush1.bf16.msra.mxu0 %v493
    %2618 = vmatprep.subr.bf16.mxu0 0
    %2619 = vmatpush1.bf16.msra.mxu0 %v496
    %2620 = vmatprep.subr.bf16.mxu0 0
    %2621 = vmatpush1.bf16.msra.mxu0 %v499
    %2622 = vmatprep.subr.bf16.mxu0 0
    %2623 = vmatpush1.bf16.msra.mxu0 %v502
    %2624 = vmatprep.subr.bf16.mxu0 0
    %2625 = vmatpush1.bf16.msra.mxu0 0
    %2626 = vmatprep.subr.bf16.mxu0 0
    %2627 = vmatpush1.bf16.msra.mxu0 0
    %2628 = vmatprep.subr.bf16.mxu0 0
    %2629 = vmatpush1.bf16.msra.mxu0 0
    %2630 = vmatprep.subr.bf16.mxu0 0
    %2631 = vmatpush1.bf16.msra.mxu0 0
    %2632 = vmatprep.subr.bf16.mxu0 0
    %2633 = vmatpush1.bf16.msra.mxu0 0
    %2634 = vmatprep.subr.bf16.mxu0 0
    %2635 = vmatpush1.bf16.msra.mxu0 0
    %2636 = vmatprep.subr.bf16.mxu0 0
    %2637 = vmatpush1.bf16.msra.mxu0 0
    %2638 = vmatprep.subr.bf16.mxu0 0
    %2639 = vmatpush1.bf16.msra.mxu0 0
    %2640 = vmatprep.mubr.bf16.mxu0 0
    %2641 = vmatmul.mubr.bf16.gmra.mrb[0].mxu0 %v2392
    %v2642 = vpop.f32.mrb[0].mxu0
    %v2643 = vadd.f32 %v539, %v2642
    %v2644 = vpop.f32.mrb[0].mxu0
    %v2645 = vpop.f32.mrb[0].mxu0
    %v2646 = vpop.f32.mrb[0].mxu0
    %2647 = vdwg.mxu0
    %v2648 = vadd.f32 %v2521, %v2602
    %v2649 = vxor.u32 %v2648, 2147483648
    %v2650 = vmul.f32 %v2649, 1.442695
    %v2651 = vpow.pop %v2650
    %v2652 = vadd.f32 %v2651, 1.0
    %v2653 = vrcp.pop %v2652
    %v2654 = vmul.f32 1.0, %v2653
    %v2655 = vadd.f32 %v2523, %v2604
    %v2656 = vxor.u32 %v2655, 2147483648
    %v2657 = vmul.f32 %v2656, 1.442695
    %v2658 = vpow.pop %v2657
    %v2659 = vadd.f32 %v2658, 1.0
    %v2660 = vrcp.pop %v2659
    %v2661 = vmul.f32 1.0, %v2660
    %v2662 = vmul.f32 %v2654, %v2643
    %v2663 = vadd.f32 %v2562, %v2662
    %v2664 = vtanh.pop %v2663
    %v2665 = vsub.f32 1.0, %v2661
    %v2666 = vmul.f32 %v2665, %v2664
    %v2667 = vmul.f32 %v2661, %v2391
    %v2668 = vadd.f32 %v2666, %v2667
    %v2669 = vpack.c.bf16 %v2668, %v2668
    %2670 = vmatprep.subr.bf16.mxu0 %v695
    %2671 = vmatpush1.bf16.msra.mxu0 %v694
    %2672 = vmatprep.subr.bf16.mxu0 %v697
    %2673 = vmatpush1.bf16.msra.mxu0 %v696
    %2674 = vmatprep.subr.bf16.mxu0 %v699
    %2675 = vmatpush1.bf16.msra.mxu0 %v698
    %2676 = vmatprep.subr.bf16.mxu0 %v701
    %2677 = vmatpush1.bf16.msra.mxu0 %v700
    %2678 = vmatprep.subr.bf16.mxu0 %v703
    %2679 = vmatpush1.bf16.msra.mxu0 %v702
    %2680 = vmatprep.subr.bf16.mxu0 %v705
    %2681 = vmatpush1.bf16.msra.mxu0 %v704
    %2682 = vmatprep.subr.bf16.mxu0 %v707
    %2683 = vmatpush1.bf16.msra.mxu0 %v706
    %2684 = vmatprep.subr.bf16.mxu0 %v709
    %2685 = vmatpush1.bf16.msra.mxu0 %v708
    %2686 = vmatprep.subr.bf16.mxu0 0
    %2687 = vmatpush1.bf16.msra.mxu0 0
    %2688 = vmatprep.subr.bf16.mxu0 0
    %2689 = vmatpush1.bf16.msra.mxu0 0
    %2690 = vmatprep.subr.bf16.mxu0 0
    %2691 = vmatpush1.bf16.msra.mxu0 0
    %2692 = vmatprep.subr.bf16.mxu0 0
    %2693 = vmatpush1.bf16.msra.mxu0 0
    %2694 = vmatprep.subr.bf16.mxu0 0
    %2695 = vmatpush1.bf16.msra.mxu0 0
    %2696 = vmatprep.subr.bf16.mxu0 0
    %2697 = vmatpush1.bf16.msra.mxu0 0
    %2698 = vmatprep.subr.bf16.mxu0 0
    %2699 = vmatpush1.bf16.msra.mxu0 0
    %2700 = vmatprep.subr.bf16.mxu0 0
    %2701 = vmatpush1.bf16.msra.mxu0 0
    %2702 = vmatprep.mubr.bf16.mxu0 0
    %2703 = vmatmul.mubr.bf16.gmra.mrb[0].mxu0 %v2669
    %v2704 = vpop.f32.mrb[0].mxu0
    %v2705 = vadd.f32 %v730, %v2704
    %v2706 = vpop.f32.mrb[0].mxu0
    %v2707 = vadd.f32 %v734, %v2706
    %v2708 = vpop.f32.mrb[0].mxu0
    %v2709 = vpop.f32.mrb[0].mxu0
    %2710 = vdwg.mxu0
    %v2711 = vsel %vm778, %v2705, -inf
    %v2712 = vsel %vm778, %v2707, -inf
    %v2713 = vmax.f32 %v2711, %v2712
    %2714 = vmax.xlane.f32.xlu0 %v2713
    %v2715 = vpop.xlane.xlu0 %2714
    %v2716 = vsub.f32 %v2705, %v2715
    %v2717 = vsub.f32 %v2707, %v2715
    %v2718 = vmul.f32 %v2716, 1.442695
    %v2719 = vpow.pop %v2718
    %v2720 = vmul.f32 %v2717, 1.442695
    %v2721 = vpow.pop %v2720
    %v2722 = vsel %vm778, %v2719, 0.0
    %v2723 = vsel %vm778, %v2721, 0.0
    %v2724 = vadd.f32 %v2722, %v2723
    %2725 = vadd.xlane.f32.xlu0 %v2724
    %v2726 = vpop.xlane.xlu0 %2725
    %v2727 = vlog2.pop %v2726
    %v2728 = vmul.f32 %v2727, 0.6931472
    %v2729 = vadd.f32 %v2728, %v2715
    %v2730 = vsub.f32 %v2705, %v2729
    %v2731 = vsub.f32 %v2707, %v2729
    %v2734 = vcombine.low %v2730, %v2731
    %v2736 = vunpack.c.l.s4 1966171168
    %v2737 = vunpack.c.0.s8 %v2736
    %v2738 = vlaneseq
    %v2739 = vshrl.u32 %v2738, 7
    %v2740 = vsub.s32 %v2737, %v2739
    %v2741 = vrot.slane %v2734, %v2740
    %v2743 = vunpack.c.l.s4 1966171168
    %v2744 = vunpack.c.0.s8 %v2743
    %v2745 = vlaneseq
    %v2746 = vshrl.u32 %v2745, 7
    %v2747 = vsub.s32 %v2744, %v2746
    %v2748 = vrot.slane %v2741, %v2747
    %s2750 = scalar_lea.vmem [#allocation10], 7
    %2751 = vst.msk [vmem:[%s2750] ss:$8 sm:$0x3] %vm821, %v2748
    %2752 = vst.msk [vmem:[%s2750] ss:$8 sm:$0x0] %vm821, %v2748
    %2753 = vst [vmem:[#allocation11] sm:$0x1] %v2668
    // Predicated region
    $region50: #{tpu_custom_call.1} parent=1 // pred_check
      _
    $region51: #{tpu_custom_call.1} parent=1 // pred_check_branch
      %2755 = sbr.rel (0) target = $region53
    $region52: #{tpu_custom_call.1} parent=1 // pred_region
      %s2757 = ssub.s32 256, 256
      %2758 = vsyncadd [#allocation4], %s2757
      %s2760 = sshll.u32 [#allocation10], 4
      %s2761 = int_to_ptr.vmem [resolvable:$true] %s2760
      %2763 = dma.vmem_to_hbm [thread:$0]  %s2761, 256, %s8, [#allocation4]
    $region53: #{tpu_custom_call.1} parent=1 // pred_fallthru
      _
    // Predicated region
    $region54: #{tpu_custom_call.1} parent=1 // pred_check
      _
    $region55: #{tpu_custom_call.1} parent=1 // pred_check_branch
      %2765 = sbr.rel (0) target = $region57
    $region56: #{tpu_custom_call.1} parent=1 // pred_region
      %s2767 = ssub.s32 16, 16
      %2768 = vsyncadd [#allocation12], %s2767
      %s2770 = sshll.u32 [#allocation11], 4
      %s2771 = int_to_ptr.vmem [resolvable:$true] %s2770
      %2773 = dma.vmem_to_hbm [thread:$0]  %s2771, 16, %s9, [#allocation12]
    $region57: #{tpu_custom_call.1} parent=1 // pred_fallthru
      _
    // Predicated region
    $region58: #{tpu_custom_call.1} parent=1 // pred_check
      _
    $region59: #{tpu_custom_call.1} parent=1 // pred_check_branch
      %2775 = sbr.rel (0) target = $region61
    $region60: #{tpu_custom_call.1} parent=1 // pred_region
      %2776 = dma.done [#allocation4], 256
    $region61: #{tpu_custom_call.1} parent=1 // pred_fallthru
      _
    // Predicated region
    $region62: #{tpu_custom_call.1} parent=1 // pred_check
      _
    $region63: #{tpu_custom_call.1} parent=1 // pred_check_branch
      %2778 = sbr.rel (0) target = $region65
    $region64: #{tpu_custom_call.1} parent=1 // pred_region
      %2779 = dma.done [#allocation12], 16
    $region65: #{tpu_custom_call.1} parent=1 // pred_fallthru
      _
    %2780 = vsyncpa [#allocation3], 1
    %2781 = vsyncpa [#allocation6], 1
    %2782 = vsyncpa [#allocation9], 1
    %2783 = vsyncpa [#allocation4], 1
    %2784 = vsyncpa [#allocation12], 1

</llo_original>
